<compile_context>
chip_gen: v7x
topology: tpu7x:2x2x1
jax: 0.10.0
libtpu: 0.0.40
codegen_flags: <defaults>
</compile_context>

<pallas_src>
import functools
import math

import jax
import jax.numpy as jnp
import numpy as np
from jax.experimental import pallas as pl
from jax.experimental.pallas import tpu as pltpu


# ----------------------------------------------------------------------------
# helpers
# ----------------------------------------------------------------------------
def _gelu(x):
    # tanh-approximate GELU.
    return 0.5 * x * (1.0 + jnp.tanh(0.7978845608028654 * (x + 0.044715 * x * x * x)))


def _round_up(n, m):
    return ((n + m - 1) // m) * m


def _make_tap_masks(H, W):
    """(9, 1, H*W) f32 validity masks for the 9 taps of a padding=1 3x3 conv."""
    hh, ww = np.meshgrid(np.arange(H), np.arange(W), indexing="ij")
    hh = hh.reshape(-1)
    ww = ww.reshape(-1)
    masks = np.zeros((9, 1, H * W), np.float32)
    for t in range(9):
        dh, dw = t // 3 - 1, t % 3 - 1
        valid = (hh + dh >= 0) & (hh + dh < H) & (ww + dw >= 0) & (ww + dw < W)
        masks[t, 0, :] = valid.astype(np.float32)
    return masks


def _choose_batch_tile(B, HW):
    """Batch elements per grid step: push the lane width toward >=512 but keep
    at least 2 grid steps (v7x has 2 TensorCores) when the batch allows it."""
    target = max(1, 512 // HW)
    cap = max(1, B // 2)
    limit = min(target, cap) if B >= 2 else 1
    bt = 1
    for d in range(1, B + 1):
        if B % d == 0 and d <= limit:
            bt = d
    return bt


# ----------------------------------------------------------------------------
# fused kernel: GAP + enc/prior MLPs + sampling + KLs + z_proj/mixer +
#               upsample-add + (fused-im2col conv3x3 + relu) x 2
#               (Bt batch images per grid step, batch tiled on the lane axis)
# ----------------------------------------------------------------------------
def _make_fused_kernel(W, L, Co, Cp):
    K = 9 * Cp

    def kernel(
        # per-step pipelined blocks
        part_ref,    # (C, Bt)   GAP of part_acts for the Bt images of this step
        eps_ref,     # (Z, Bt)   N(0,1) noise for the reparameterized sample
        x_ref,       # (C, L)    full_acts, lane-dense (L = Bt*H*W)
        # VMEM-resident constants (single-buffered, same every grid step)
        masks_ref,   # (9, 1, L) tap validity masks (tiled per image segment)
        pool_ref,    # (L, Bt)   segmented-GAP matrix (1/HW block diagonal)
        expand_ref,  # (Bt, L)   segment broadcast matrix (1.0 block diagonal)
        bco_ref,     # (Co, 8)   packed Co-sized biases
        bz_ref,      # (Z, 8)    packed Z-sized biases
        ew1_ref, wqm_ref, wqv_ref,                       # enc
        pw1_ref, wpm_ref, wpv_ref, wxpp_ref,             # prior
        zw_ref, mwx_ref, mwz_ref,                        # z_proj / mixer
        c1w_ref, c2w_ref,                                # fused conv weights (Co, 9*Cp) bf16
        # outputs
        x_out,       # (Co, L)
        stats_out,   # (4, Z, Bt)   [z; kl; KL(p||N); KL(q||N)]
        # scratch
        im2col_ref,  # (9*Cp, L) bf16
    ):
        f32 = jnp.float32
        bf16 = jnp.bfloat16

        # Padded im2col rows must stay zero (their weight columns are zero, but
        # stale VMEM could hold NaN/Inf and 0*NaN = NaN).
        if Cp != Co:
            im2col_ref[...] = jnp.zeros((K, L), bf16)

        x = x_ref[...]                                                   # (C, L) f32
        # segmented global average pool (one tiny MXU matmul, no reshapes)
        v_full = jnp.dot(x, pool_ref[...], preferred_element_type=f32)   # (C, Bt)
        v_part = part_ref[...]                                           # (C, Bt)

        def mm(w_ref, v):
            return jnp.dot(w_ref[...], v, preferred_element_type=f32)

        # packed biases (static lane slices of two small VMEM tiles)
        eb1 = bco_ref[:, 0:1]; pb1 = bco_ref[:, 1:2]; bxpp = bco_ref[:, 2:3]
        zb = bco_ref[:, 3:4]; mb = bco_ref[:, 4:5]
        c1b = bco_ref[:, 5:6]; c2b = bco_ref[:, 6:7]
        bqm = bz_ref[:, 0:1]; bqv = bz_ref[:, 1:2]
        bpm = bz_ref[:, 2:3]; bpv = bz_ref[:, 3:4]

        # enc (posterior): C -> Co -> [qm | qv]   (pre-split weights)
        he = _gelu(mm(ew1_ref, v_full) + eb1)
        qm = mm(wqm_ref, he) + bqm                                       # (Z, Bt)
        qv = mm(wqv_ref, he) + bqv

        # prior: C -> Co -> [pm | pv | xpp]
        hp = _gelu(mm(pw1_ref, v_part) + pb1)
        pm = mm(wpm_ref, hp) + bpm
        pv = mm(wpv_ref, hp) + bpv
        xpp = mm(wxpp_ref, hp) + bxpp                                    # (Co, Bt)

        # reparameterized sample + analytical KLs (logsigma parameterization)
        z = jnp.exp(qv) * eps_ref[...] + qm
        kl = (-0.5 + pv - qv
              + 0.5 * (jnp.exp(2.0 * qv) + (qm - pm) ** 2) * jnp.exp(-2.0 * pv))
        klp = -0.5 - pv + 0.5 * (jnp.exp(2.0 * pv) + pm ** 2)   # KL(p || N(0,1))
        klq = -0.5 - qv + 0.5 * (jnp.exp(2.0 * qv) + qm ** 2)   # KL(q || N(0,1))

        # z_proj + 'concat' mixer as split matmuls (no lane slicing)
        zp = mm(zw_ref, z) + zb                                          # (Co, Bt)
        mix = mm(mwx_ref, xpp) + mm(mwz_ref, zp) + mb                    # (Co, Bt)

        # F.interpolate(mix, scale_factor=W) + full_acts == broadcast each
        # (channel, image) scalar over that image's HW lanes (MXU expand).
        mix_full = jnp.dot(mix, expand_ref[...], preferred_element_type=f32)  # (Co, L)
        h0 = x + mix_full

        def conv3x3_relu(h, w9_ref, bias_col):
            # im2col: roll + mask + bf16 downcast, one store per tap into the
            # tile-aligned scratch; then ONE (Co, 9*Cp) x (9*Cp, L) MXU dot.
            for t in range(9):
                dh, dw = t // 3 - 1, t % 3 - 1
                d = dh * W + dw
                if d == 0:
                    hm = h                              # center tap: mask all-ones
                else:
                    hm = pltpu.roll(h, shift=(-d) % L, axis=1) * masks_ref[t]
                im2col_ref[t * Cp:t * Cp + Co, :] = hm.astype(bf16)
            acc = jnp.dot(w9_ref[...], im2col_ref[...], preferred_element_type=f32)
            return jnp.maximum(acc + bias_col, 0.0)

        h1 = conv3x3_relu(h0, c1w_ref, c1b)
        h2 = conv3x3_relu(h1, c2w_ref, c2b)

        x_out[...] = h2
        stats_out[...] = jnp.stack([z, kl, klp, klq], axis=0)    # single store

    return kernel


# ----------------------------------------------------------------------------
# Parameters (deterministic, synthetic) — PyTorch-like (out, in) layouts
# ----------------------------------------------------------------------------
def init_params(key, in_channels, out_channels, z_dim, n_blocks):
    C, Co, Z = in_channels, out_channels, z_dim
    ks = jax.random.split(key, 16)
    s = 0.2

    def nrm(k, shape, scale=s):
        return jax.random.normal(k, shape, jnp.float32) * scale

    return dict(
        # enc block: C -> Co -> 2Z
        ew1=nrm(ks[0], (Co, C)), eb1=nrm(ks[1], (Co,)),
        ew2=nrm(ks[2], (2 * Z, Co)), eb2=nrm(ks[3], (2 * Z,)),
        # prior block: C -> Co -> 2Z + Co
        pw1=nrm(ks[4], (Co, C)), pb1=nrm(ks[5], (Co,)),
        pw2=nrm(ks[6], (2 * Z + Co, Co)), pb2=nrm(ks[7], (2 * Z + Co,)),
        # z_proj: Z -> Co   (weight scaled by sqrt(1/n_blocks) as in __init__)
        zw=nrm(ks[8], (Co, Z), s * math.sqrt(1.0 / n_blocks)), zb=nrm(ks[9], (Co,)),
        # mixer: 2*Co -> Co  (columns [0:Co] act on xpp, [Co:2Co] on z_proj(z))
        mw=nrm(ks[10], (Co, 2 * Co)), mb=nrm(ks[11], (Co,)),
        # conv3x3 weights in PyTorch OIHW layout
        c1w=nrm(ks[12], (Co, Co, 3, 3)), c1b=nrm(ks[13], (Co,)),
        c2w=nrm(ks[14], (Co, Co, 3, 3)), c2b=nrm(ks[15], (Co,)),
    )


def _split_params(params, Z, Co, Cp):
    """Wrapper-side layout plumbing: split combined weights into per-output
    blocks, fuse/pad the 3x3 conv weights to (Co, 9*Cp) bf16, and pack the tiny
    bias columns into two small arrays (all free XLA ops)."""
    p = params
    wqm, wqv = p["ew2"][:Z], p["ew2"][Z:2 * Z]
    wpm, wpv, wxpp = p["pw2"][:Z], p["pw2"][Z:2 * Z], p["pw2"][2 * Z:]
    mwx, mwz = p["mw"][:, :Co], p["mw"][:, Co:]

    def to_fused(w):   # OIHW -> (O, 3, 3, I) -> pad I to Cp -> (O, 9*Cp) bf16
        O, I = w.shape[0], w.shape[1]
        wt = jnp.transpose(w, (0, 2, 3, 1))
        wt = jnp.pad(wt, ((0, 0), (0, 0), (0, 0), (0, Cp - I)))
        return wt.reshape(O, 9 * Cp).astype(jnp.bfloat16)

    zco = jnp.zeros_like(p["eb1"])
    bco = jnp.stack([p["eb1"], p["pb1"], p["pb2"][2 * Z:], p["zb"], p["mb"],
                     p["c1b"], p["c2b"], zco], axis=1)                       # (Co, 8)
    zz = jnp.zeros((Z,), jnp.float32)
    bz = jnp.stack([p["eb2"][:Z], p["eb2"][Z:2 * Z],
                    p["pb2"][:Z], p["pb2"][Z:2 * Z], zz, zz, zz, zz], axis=1)  # (Z, 8)

    mats = (p["ew1"], wqm, wqv, p["pw1"], wpm, wpv, wxpp,
            p["zw"], mwx, mwz, to_fused(p["c1w"]), to_fused(p["c2w"]))
    return bco, bz, mats


# ----------------------------------------------------------------------------
# Forward wrapper
# ----------------------------------------------------------------------------
@functools.partial(jax.jit, static_argnames=("z_dim",))
def bottleneck_plugged_forward(params, full_acts, part_acts, eps, z_dim):
    """Returns (z, x, kl, kl_pos3, kl_pos4); due to the swapped unpack in the
    PyTorch forward, position 3 holds KL(p||N(0,1)) and position 4 KL(q||N(0,1))."""
    B, C, H, W = full_acts.shape
    Z = int(z_dim)
    Co = C                      # residual add requires out_channels == in_channels
    HW = H * W
    Bt = _choose_batch_tile(B, HW)
    nb = B // Bt
    L = Bt * HW
    Cp = _round_up(Co, 16)      # bf16 sublane-tile aligned channel blocks for im2col

    # --- wrapper-side layout plumbing (free XLA ops / trace-time constants) ---
    full_flat = (full_acts.reshape(nb, Bt, C, HW)
                 .transpose(0, 2, 1, 3).reshape(nb, C, L))                  # lane = Bt*H*W
    part_vec = jnp.mean(part_acts, axis=(2, 3))                             # == avg_pool2d(., W)
    part_t = part_vec.reshape(nb, Bt, C).transpose(0, 2, 1)                 # (nb, C, Bt)
    eps_t = eps.reshape(nb, Bt, Z).transpose(0, 2, 1)                       # (nb, Z, Bt)

    masks_np = np.tile(_make_tap_masks(H, W), (1, 1, Bt))                   # (9, 1, L)
    pool_np = np.zeros((L, Bt), np.float32)
    expand_np = np.zeros((Bt, L), np.float32)
    for b in range(Bt):
        pool_np[b * HW:(b + 1) * HW, b] = 1.0 / HW
        expand_np[b, b * HW:(b + 1) * HW] = 1.0
    masks = jnp.asarray(masks_np)
    pool_mat = jnp.asarray(pool_np)
    expand_mat = jnp.asarray(expand_np)

    bco, bz, mats = _split_params(params, Z, Co, Cp)
    consts = (masks, pool_mat, expand_mat, bco, bz) + mats

    # VMEM budget: constants single-buffered, per-step blocks double-buffered,
    # plus the bf16 im2col scratch.  Explicit limit keeps v7x (64 MiB) happy.
    const_bytes = sum(int(np.prod(a.shape)) * jnp.dtype(a.dtype).itemsize for a in consts)
    step_bytes = 4 * (C * Bt + Z * Bt + C * L + Co * L + 4 * Z * Bt)
    scratch_bytes = 2 * 9 * Cp * L
    vmem_limit = int(min(64 << 20,
                         max(32 << 20,
                             const_bytes + 2 * step_bytes + scratch_bytes + (4 << 20))))

    vmem = lambda: pl.BlockSpec(memory_space=pltpu.MemorySpace.VMEM)

    x_flat, stats = pl.pallas_call(
        _make_fused_kernel(W, L, Co, Cp),
        out_shape=(
            jax.ShapeDtypeStruct((nb, Co, L), jnp.float32),
            jax.ShapeDtypeStruct((nb, 4, Z, Bt), jnp.float32),
        ),
        grid=(nb,),
        in_specs=[
            pl.BlockSpec((pl.Squeezed(), C, Bt), lambda b: (b, 0, 0)),     # part GAP
            pl.BlockSpec((pl.Squeezed(), Z, Bt), lambda b: (b, 0, 0)),     # eps
            pl.BlockSpec((pl.Squeezed(), C, L), lambda b: (b, 0, 0)),      # full_acts
        ] + [vmem() for _ in range(len(consts))],                          # constants
        out_specs=(
            pl.BlockSpec((pl.Squeezed(), Co, L), lambda b: (b, 0, 0)),
            pl.BlockSpec((pl.Squeezed(), 4, Z, Bt), lambda b: (b, 0, 0, 0)),
        ),
        scratch_shapes=[pltpu.VMEM((9 * Cp, L), jnp.bfloat16)],
        compiler_params=pltpu.CompilerParams(
            dimension_semantics=("parallel",),
            vmem_limit_bytes=vmem_limit,
        ),
    )(part_t, eps_t, full_flat, *consts)

    # undo wrapper-side layout plumbing
    x = (x_flat.reshape(nb, Co, Bt, HW).transpose(0, 2, 1, 3)
         .reshape(B, Co, H, W))
    s = stats.transpose(1, 0, 3, 2).reshape(4, B, Z)                       # (4, B, Z)
    to4d = lambda a: a.reshape(B, Z, 1, 1)
    return to4d(s[0]), x, to4d(s[1]), to4d(s[2]), to4d(s[3])


# ----------------------------------------------------------------------------
# Pure-JAX reference (same assumed Block / KL definitions)
# ----------------------------------------------------------------------------
def _reference_forward(params, full_acts, part_acts, eps, z_dim):
    Z = z_dim
    B, C, H, W = full_acts.shape
    full_vec = jnp.mean(full_acts, axis=(2, 3))
    part_vec = jnp.mean(part_acts, axis=(2, 3))

    def block(v, w1, b1, w2, b2):
        h = _gelu(v @ w1.T + b1)
        return h @ w2.T + b2

    enc = block(full_vec, params["ew1"], params["eb1"], params["ew2"], params["eb2"])
    qm, qv = enc[:, :Z], enc[:, Z:]
    pri = block(part_vec, params["pw1"], params["pb1"], params["pw2"], params["pb2"])
    pm, pv, xpp = pri[:, :Z], pri[:, Z:2 * Z], pri[:, 2 * Z:]
    z = jnp.exp(qv) * eps + qm
    kl = -0.5 + pv - qv + 0.5 * (jnp.exp(2 * qv) + (qm - pm) ** 2) * jnp.exp(-2 * pv)
    klp = -0.5 - pv + 0.5 * (jnp.exp(2 * pv) + pm ** 2)
    klq = -0.5 - qv + 0.5 * (jnp.exp(2 * qv) + qm ** 2)
    zp = z @ params["zw"].T + params["zb"]
    mix = jnp.concatenate([xpp, zp], axis=1) @ params["mw"].T + params["mb"]
    x = full_acts + mix[:, :, None, None]
    dn = jax.lax.conv_dimension_numbers(x.shape, params["c1w"].shape,
                                        ("NCHW", "OIHW", "NCHW"))
    x = jax.nn.relu(jax.lax.conv_general_dilated(
        x, params["c1w"], (1, 1), "SAME", dimension_numbers=dn)
        + params["c1b"][None, :, None, None])
    x = jax.nn.relu(jax.lax.conv_general_dilated(
        x, params["c2w"], (1, 1), "SAME", dimension_numbers=dn)
        + params["c2b"][None, :, None, None])
    to4d = lambda a: a.reshape(B, Z, 1, 1)
    return to4d(z), x, to4d(kl), to4d(klp), to4d(klq)


def _rel_l2(a, b):
    a = jnp.asarray(a, jnp.float32)
    b = jnp.asarray(b, jnp.float32)
    num = jnp.sqrt(jnp.sum((a - b) ** 2))
    den = jnp.sqrt(jnp.sum(b ** 2)) + 1e-12
    return float(num / den)


# ----------------------------------------------------------------------------
if __name__ == "__main__":
    B, C, W = 4, 4, 16          # batch, channels (= in = out), spatial
    Z, N_BLOCKS = 4, 2          # z_dim, n_blocks

    key = jax.random.PRNGKey(0)
    k_full, k_part, k_eps, k_par = jax.random.split(key, 4)

    full_acts = jax.random.normal(k_full, (B, C, W, W), jnp.float32)
    part_acts = jax.random.normal(k_part, (B, C, W, W), jnp.float32)
    # noise used by draw_gaussian_diag_samples (torch.randn) is passed explicitly
    eps = jax.random.normal(k_eps, (B, Z), jnp.float32)

    params = init_params(k_par, C, C, Z, N_BLOCKS)

    outs = bottleneck_plugged_forward(params, full_acts, part_acts, eps, z_dim=Z)
    jax.block_until_ready(outs)
    z, x, kl, kl_pos3, kl_pos4 = outs

    assert z.shape == (B, Z, 1, 1)
    assert x.shape == (B, C, W, W)
    assert kl.shape == (B, Z, 1, 1)
    assert kl_pos3.shape == (B, Z, 1, 1)
    assert kl_pos4.shape == (B, Z, 1, 1)

    # correctness check against a pure-JAX reference (tolerance covers the bf16
    # MXU conv operands; the vector/KL path stays f32)
    with jax.default_matmul_precision("highest"):
        refs = _reference_forward(params, full_acts, part_acts, eps, Z)
    for name, got, want in zip(("z", "x", "kl", "kl_p", "kl_q"), outs, refs):
        err = _rel_l2(got, want)
        assert err < 5e-2, f"{name}: rel-L2 error {err}"

    print("KERNEL_OK")
</pallas_src>

<mosaic_0001>
module attributes {stable_mosaic.version = 11 : i64} {
  func.func @kernel(%arg0: i32, %arg1: memref<1x4x2xf32, #tpu.memory_space<vmem>>, %arg2: memref<1x4x2xf32, #tpu.memory_space<vmem>>, %arg3: memref<1x4x512xf32, #tpu.memory_space<vmem>>, %arg4: memref<9x1x512xf32, #tpu.memory_space<vmem>>, %arg5: memref<512x2xf32, #tpu.memory_space<vmem>>, %arg6: memref<2x512xf32, #tpu.memory_space<vmem>>, %arg7: memref<4x8xf32, #tpu.memory_space<vmem>>, %arg8: memref<4x8xf32, #tpu.memory_space<vmem>>, %arg9: memref<4x4xf32, #tpu.memory_space<vmem>>, %arg10: memref<4x4xf32, #tpu.memory_space<vmem>>, %arg11: memref<4x4xf32, #tpu.memory_space<vmem>>, %arg12: memref<4x4xf32, #tpu.memory_space<vmem>>, %arg13: memref<4x4xf32, #tpu.memory_space<vmem>>, %arg14: memref<4x4xf32, #tpu.memory_space<vmem>>, %arg15: memref<4x4xf32, #tpu.memory_space<vmem>>, %arg16: memref<4x4xf32, #tpu.memory_space<vmem>>, %arg17: memref<4x4xf32, #tpu.memory_space<vmem>>, %arg18: memref<4x4xf32, #tpu.memory_space<vmem>>, %arg19: memref<4x144xbf16, #tpu.memory_space<vmem>>, %arg20: memref<4x144xbf16, #tpu.memory_space<vmem>>, %arg21: memref<1x4x512xf32, #tpu.memory_space<vmem>>, %arg22: memref<1x4x4x2xf32, #tpu.memory_space<vmem>>, %arg23: memref<144x512xbf16, #tpu.memory_space<vmem>>) attributes {dimension_semantics = [#tpu.dimension_semantics<parallel>], iteration_bounds = array<i64: 2>, scalar_prefetch = 0 : i64, scratch_operands = 1 : i64, tpu.core_type = #tpu.core_type<tc>, window_params = [{transform_indices = @transform_0, window_bounds = array<i64: 1, 4, 2>}, {transform_indices = @transform_1, window_bounds = array<i64: 1, 4, 2>}, {transform_indices = @transform_2, window_bounds = array<i64: 1, 4, 512>}, {pipeline_mode = #tpu.pipeline_mode<synchronous>, transform_indices = @transform_3, window_bounds = array<i64: 9, 1, 512>}, {pipeline_mode = #tpu.pipeline_mode<synchronous>, transform_indices = @transform_4, window_bounds = array<i64: 512, 2>}, {pipeline_mode = #tpu.pipeline_mode<synchronous>, transform_indices = @transform_5, window_bounds = array<i64: 2, 512>}, {pipeline_mode = #tpu.pipeline_mode<synchronous>, transform_indices = @transform_6, window_bounds = array<i64: 4, 8>}, {pipeline_mode = #tpu.pipeline_mode<synchronous>, transform_indices = @transform_7, window_bounds = array<i64: 4, 8>}, {pipeline_mode = #tpu.pipeline_mode<synchronous>, transform_indices = @transform_8, window_bounds = array<i64: 4, 4>}, {pipeline_mode = #tpu.pipeline_mode<synchronous>, transform_indices = @transform_9, window_bounds = array<i64: 4, 4>}, {pipeline_mode = #tpu.pipeline_mode<synchronous>, transform_indices = @transform_10, window_bounds = array<i64: 4, 4>}, {pipeline_mode = #tpu.pipeline_mode<synchronous>, transform_indices = @transform_11, window_bounds = array<i64: 4, 4>}, {pipeline_mode = #tpu.pipeline_mode<synchronous>, transform_indices = @transform_12, window_bounds = array<i64: 4, 4>}, {pipeline_mode = #tpu.pipeline_mode<synchronous>, transform_indices = @transform_13, window_bounds = array<i64: 4, 4>}, {pipeline_mode = #tpu.pipeline_mode<synchronous>, transform_indices = @transform_14, window_bounds = array<i64: 4, 4>}, {pipeline_mode = #tpu.pipeline_mode<synchronous>, transform_indices = @transform_15, window_bounds = array<i64: 4, 4>}, {pipeline_mode = #tpu.pipeline_mode<synchronous>, transform_indices = @transform_16, window_bounds = array<i64: 4, 4>}, {pipeline_mode = #tpu.pipeline_mode<synchronous>, transform_indices = @transform_17, window_bounds = array<i64: 4, 4>}, {pipeline_mode = #tpu.pipeline_mode<synchronous>, transform_indices = @transform_18, window_bounds = array<i64: 4, 144>}, {pipeline_mode = #tpu.pipeline_mode<synchronous>, transform_indices = @transform_19, window_bounds = array<i64: 4, 144>}, {transform_indices = @transform_20, window_bounds = array<i64: 1, 4, 512>}, {transform_indices = @transform_21, window_bounds = array<i64: 1, 4, 4, 2>}]} {
    %cst = arith.constant 0.000000e+00 : bf16
    %0 = vector.broadcast %cst : bf16 to vector<144x512xbf16>
    %c0 = arith.constant 0 : index
    %c0_0 = arith.constant 0 : index
    %1 = vector.load %arg23[%c0, %c0_0] : memref<144x512xbf16, #tpu.memory_space<vmem>>, vector<144x512xbf16>
    tpu.vector_store %arg23[%c0, %c0_0], %0 {strides = array<i32>} : memref<144x512xbf16, #tpu.memory_space<vmem>>, vector<144x512xbf16>,
    %c0_1 = arith.constant 0 : index
    %c0_2 = arith.constant 0 : index
    %c0_3 = arith.constant 0 : index
    %2 = vector.load %arg3[%c0_1, %c0_2, %c0_3] : memref<1x4x512xf32, #tpu.memory_space<vmem>>, vector<1x4x512xf32>
    %3 = vector.shape_cast %2 : vector<1x4x512xf32> to vector<4x512xf32>
    %c0_4 = arith.constant 0 : index
    %c0_5 = arith.constant 0 : index
    %4 = vector.load %arg5[%c0_4, %c0_5] : memref<512x2xf32, #tpu.memory_space<vmem>>, vector<512x2xf32>
    %cst_6 = arith.constant dense<0.000000e+00> : vector<4x2xf32>
    %5 = tpu.matmul %3, %4, %cst_6 {dimension_numbers = #tpu.dot_dimension_numbers<[1], [0], [0], [1], [0, 0, 1, 1], [], []>} : vector<4x512xf32>, vector<512x2xf32>, vector<4x2xf32> -> vector<4x2xf32>
    %c0_7 = arith.constant 0 : index
    %c0_8 = arith.constant 0 : index
    %c0_9 = arith.constant 0 : index
    %6 = vector.load %arg1[%c0_7, %c0_8, %c0_9] : memref<1x4x2xf32, #tpu.memory_space<vmem>>, vector<1x4x2xf32>
    %7 = vector.shape_cast %6 : vector<1x4x2xf32> to vector<4x2xf32>
    %c0_10 = arith.constant 0 : index
    %c0_11 = arith.constant 0 : index
    %8 = vector.load %arg7[%c0_10, %c0_11] : memref<4x8xf32, #tpu.memory_space<vmem>>, vector<4x1xf32>
    %c0_12 = arith.constant 0 : index
    %c1 = arith.constant 1 : index
    %9 = vector.load %arg7[%c0_12, %c1] : memref<4x8xf32, #tpu.memory_space<vmem>>, vector<4x1xf32>
    %c0_13 = arith.constant 0 : index
    %c2 = arith.constant 2 : index
    %10 = vector.load %arg7[%c0_13, %c2] : memref<4x8xf32, #tpu.memory_space<vmem>>, vector<4x1xf32>
    %c0_14 = arith.constant 0 : index
    %c3 = arith.constant 3 : index
    %11 = vector.load %arg7[%c0_14, %c3] : memref<4x8xf32, #tpu.memory_space<vmem>>, vector<4x1xf32>
    %c0_15 = arith.constant 0 : index
    %c4 = arith.constant 4 : index
    %12 = vector.load %arg7[%c0_15, %c4] : memref<4x8xf32, #tpu.memory_space<vmem>>, vector<4x1xf32>
    %c0_16 = arith.constant 0 : index
    %c5 = arith.constant 5 : index
    %13 = vector.load %arg7[%c0_16, %c5] : memref<4x8xf32, #tpu.memory_space<vmem>>, vector<4x1xf32>
    %c0_17 = arith.constant 0 : index
    %c6 = arith.constant 6 : index
    %14 = vector.load %arg7[%c0_17, %c6] : memref<4x8xf32, #tpu.memory_space<vmem>>, vector<4x1xf32>
    %c0_18 = arith.constant 0 : index
    %c0_19 = arith.constant 0 : index
    %15 = vector.load %arg8[%c0_18, %c0_19] : memref<4x8xf32, #tpu.memory_space<vmem>>, vector<4x1xf32>
    %c0_20 = arith.constant 0 : index
    %c1_21 = arith.constant 1 : index
    %16 = vector.load %arg8[%c0_20, %c1_21] : memref<4x8xf32, #tpu.memory_space<vmem>>, vector<4x1xf32>
    %c0_22 = arith.constant 0 : index
    %c2_23 = arith.constant 2 : index
    %17 = vector.load %arg8[%c0_22, %c2_23] : memref<4x8xf32, #tpu.memory_space<vmem>>, vector<4x1xf32>
    %c0_24 = arith.constant 0 : index
    %c3_25 = arith.constant 3 : index
    %18 = vector.load %arg8[%c0_24, %c3_25] : memref<4x8xf32, #tpu.memory_space<vmem>>, vector<4x1xf32>
    %c0_26 = arith.constant 0 : index
    %c0_27 = arith.constant 0 : index
    %19 = vector.load %arg9[%c0_26, %c0_27] : memref<4x4xf32, #tpu.memory_space<vmem>>, vector<4x4xf32>
    %cst_28 = arith.constant dense<0.000000e+00> : vector<4x2xf32>
    %20 = tpu.matmul %19, %5, %cst_28 {dimension_numbers = #tpu.dot_dimension_numbers<[1], [0], [0], [1], [0, 0, 1, 1], [], []>} : vector<4x4xf32>, vector<4x2xf32>, vector<4x2xf32> -> vector<4x2xf32>
    %21 = vector.broadcast %8 : vector<4x1xf32> to vector<4x2xf32>
    %22 = arith.addf %20, %21 : vector<4x2xf32>
    %cst_29 = arith.constant 5.000000e-01 : f32
    %23 = vector.broadcast %cst_29 : f32 to vector<4x2xf32>
    %24 = arith.mulf %23, %22 : vector<4x2xf32>
    %cst_30 = arith.constant 4.471500e-02 : f32
    %25 = vector.broadcast %cst_30 : f32 to vector<4x2xf32>
    %26 = arith.mulf %25, %22 : vector<4x2xf32>
    %27 = arith.mulf %26, %22 : vector<4x2xf32>
    %28 = arith.mulf %27, %22 : vector<4x2xf32>
    %29 = arith.addf %22, %28 : vector<4x2xf32>
    %cst_31 = arith.constant 0.797884583 : f32
    %30 = vector.broadcast %cst_31 : f32 to vector<4x2xf32>
    %31 = arith.mulf %30, %29 : vector<4x2xf32>
    %32 = math.tanh %31 : vector<4x2xf32>
    %cst_32 = arith.constant 1.000000e+00 : f32
    %33 = vector.broadcast %cst_32 : f32 to vector<4x2xf32>
    %34 = arith.addf %33, %32 : vector<4x2xf32>
    %35 = arith.mulf %24, %34 : vector<4x2xf32>
    %c0_33 = arith.constant 0 : index
    %c0_34 = arith.constant 0 : index
    %36 = vector.load %arg10[%c0_33, %c0_34] : memref<4x4xf32, #tpu.memory_space<vmem>>, vector<4x4xf32>
    %cst_35 = arith.constant dense<0.000000e+00> : vector<4x2xf32>
    %37 = tpu.matmul %36, %35, %cst_35 {dimension_numbers = #tpu.dot_dimension_numbers<[1], [0], [0], [1], [0, 0, 1, 1], [], []>} : vector<4x4xf32>, vector<4x2xf32>, vector<4x2xf32> -> vector<4x2xf32>
    %38 = vector.broadcast %15 : vector<4x1xf32> to vector<4x2xf32>
    %39 = arith.addf %37, %38 : vector<4x2xf32>
    %c0_36 = arith.constant 0 : index
    %c0_37 = arith.constant 0 : index
    %40 = vector.load %arg11[%c0_36, %c0_37] : memref<4x4xf32, #tpu.memory_space<vmem>>, vector<4x4xf32>
    %cst_38 = arith.constant dense<0.000000e+00> : vector<4x2xf32>
    %41 = tpu.matmul %40, %35, %cst_38 {dimension_numbers = #tpu.dot_dimension_numbers<[1], [0], [0], [1], [0, 0, 1, 1], [], []>} : vector<4x4xf32>, vector<4x2xf32>, vector<4x2xf32> -> vector<4x2xf32>
    %42 = vector.broadcast %16 : vector<4x1xf32> to vector<4x2xf32>
    %43 = arith.addf %41, %42 : vector<4x2xf32>
    %c0_39 = arith.constant 0 : index
    %c0_40 = arith.constant 0 : index
    %44 = vector.load %arg12[%c0_39, %c0_40] : memref<4x4xf32, #tpu.memory_space<vmem>>, vector<4x4xf32>
    %cst_41 = arith.constant dense<0.000000e+00> : vector<4x2xf32>
    %45 = tpu.matmul %44, %7, %cst_41 {dimension_numbers = #tpu.dot_dimension_numbers<[1], [0], [0], [1], [0, 0, 1, 1], [], []>} : vector<4x4xf32>, vector<4x2xf32>, vector<4x2xf32> -> vector<4x2xf32>
    %46 = vector.broadcast %9 : vector<4x1xf32> to vector<4x2xf32>
    %47 = arith.addf %45, %46 : vector<4x2xf32>
    %cst_42 = arith.constant 5.000000e-01 : f32
    %48 = vector.broadcast %cst_42 : f32 to vector<4x2xf32>
    %49 = arith.mulf %48, %47 : vector<4x2xf32>
    %cst_43 = arith.constant 4.471500e-02 : f32
    %50 = vector.broadcast %cst_43 : f32 to vector<4x2xf32>
    %51 = arith.mulf %50, %47 : vector<4x2xf32>
    %52 = arith.mulf %51, %47 : vector<4x2xf32>
    %53 = arith.mulf %52, %47 : vector<4x2xf32>
    %54 = arith.addf %47, %53 : vector<4x2xf32>
    %cst_44 = arith.constant 0.797884583 : f32
    %55 = vector.broadcast %cst_44 : f32 to vector<4x2xf32>
    %56 = arith.mulf %55, %54 : vector<4x2xf32>
    %57 = math.tanh %56 : vector<4x2xf32>
    %cst_45 = arith.constant 1.000000e+00 : f32
    %58 = vector.broadcast %cst_45 : f32 to vector<4x2xf32>
    %59 = arith.addf %58, %57 : vector<4x2xf32>
    %60 = arith.mulf %49, %59 : vector<4x2xf32>
    %c0_46 = arith.constant 0 : index
    %c0_47 = arith.constant 0 : index
    %61 = vector.load %arg13[%c0_46, %c0_47] : memref<4x4xf32, #tpu.memory_space<vmem>>, vector<4x4xf32>
    %cst_48 = arith.constant dense<0.000000e+00> : vector<4x2xf32>
    %62 = tpu.matmul %61, %60, %cst_48 {dimension_numbers = #tpu.dot_dimension_numbers<[1], [0], [0], [1], [0, 0, 1, 1], [], []>} : vector<4x4xf32>, vector<4x2xf32>, vector<4x2xf32> -> vector<4x2xf32>
    %63 = vector.broadcast %17 : vector<4x1xf32> to vector<4x2xf32>
    %64 = arith.addf %62, %63 : vector<4x2xf32>
    %c0_49 = arith.constant 0 : index
    %c0_50 = arith.constant 0 : index
    %65 = vector.load %arg14[%c0_49, %c0_50] : memref<4x4xf32, #tpu.memory_space<vmem>>, vector<4x4xf32>
    %cst_51 = arith.constant dense<0.000000e+00> : vector<4x2xf32>
    %66 = tpu.matmul %65, %60, %cst_51 {dimension_numbers = #tpu.dot_dimension_numbers<[1], [0], [0], [1], [0, 0, 1, 1], [], []>} : vector<4x4xf32>, vector<4x2xf32>, vector<4x2xf32> -> vector<4x2xf32>
    %67 = vector.broadcast %18 : vector<4x1xf32> to vector<4x2xf32>
    %68 = arith.addf %66, %67 : vector<4x2xf32>
    %c0_52 = arith.constant 0 : index
    %c0_53 = arith.constant 0 : index
    %69 = vector.load %arg15[%c0_52, %c0_53] : memref<4x4xf32, #tpu.memory_space<vmem>>, vector<4x4xf32>
    %cst_54 = arith.constant dense<0.000000e+00> : vector<4x2xf32>
    %70 = tpu.matmul %69, %60, %cst_54 {dimension_numbers = #tpu.dot_dimension_numbers<[1], [0], [0], [1], [0, 0, 1, 1], [], []>} : vector<4x4xf32>, vector<4x2xf32>, vector<4x2xf32> -> vector<4x2xf32>
    %71 = vector.broadcast %10 : vector<4x1xf32> to vector<4x2xf32>
    %72 = arith.addf %70, %71 : vector<4x2xf32>
    %73 = math.exp %43 : vector<4x2xf32>
    %c0_55 = arith.constant 0 : index
    %c0_56 = arith.constant 0 : index
    %c0_57 = arith.constant 0 : index
    %74 = vector.load %arg2[%c0_55, %c0_56, %c0_57] : memref<1x4x2xf32, #tpu.memory_space<vmem>>, vector<1x4x2xf32>
    %75 = vector.shape_cast %74 : vector<1x4x2xf32> to vector<4x2xf32>
    %76 = arith.mulf %73, %75 : vector<4x2xf32>
    %77 = arith.addf %76, %39 : vector<4x2xf32>
    %cst_58 = arith.constant -5.000000e-01 : f32
    %78 = vector.broadcast %cst_58 : f32 to vector<4x2xf32>
    %79 = arith.addf %78, %68 : vector<4x2xf32>
    %80 = arith.subf %79, %43 : vector<4x2xf32>
    %cst_59 = arith.constant 2.000000e+00 : f32
    %81 = vector.broadcast %cst_59 : f32 to vector<4x2xf32>
    %82 = arith.mulf %81, %43 : vector<4x2xf32>
    %83 = math.exp %82 : vector<4x2xf32>
    %84 = arith.subf %39, %64 : vector<4x2xf32>
    %85 = arith.mulf %84, %84 : vector<4x2xf32>
    %86 = arith.addf %83, %85 : vector<4x2xf32>
    %cst_60 = arith.constant 5.000000e-01 : f32
    %87 = vector.broadcast %cst_60 : f32 to vector<4x2xf32>
    %88 = arith.mulf %87, %86 : vector<4x2xf32>
    %cst_61 = arith.constant -2.000000e+00 : f32
    %89 = vector.broadcast %cst_61 : f32 to vector<4x2xf32>
    %90 = arith.mulf %89, %68 : vector<4x2xf32>
    %91 = math.exp %90 : vector<4x2xf32>
    %92 = arith.mulf %88, %91 : vector<4x2xf32>
    %93 = arith.addf %80, %92 : vector<4x2xf32>
    %cst_62 = arith.constant -5.000000e-01 : f32
    %94 = vector.broadcast %cst_62 : f32 to vector<4x2xf32>
    %95 = arith.subf %94, %68 : vector<4x2xf32>
    %cst_63 = arith.constant 2.000000e+00 : f32
    %96 = vector.broadcast %cst_63 : f32 to vector<4x2xf32>
    %97 = arith.mulf %96, %68 : vector<4x2xf32>
    %98 = math.exp %97 : vector<4x2xf32>
    %99 = arith.mulf %64, %64 : vector<4x2xf32>
    %100 = arith.addf %98, %99 : vector<4x2xf32>
    %cst_64 = arith.constant 5.000000e-01 : f32
    %101 = vector.broadcast %cst_64 : f32 to vector<4x2xf32>
    %102 = arith.mulf %101, %100 : vector<4x2xf32>
    %103 = arith.addf %95, %102 : vector<4x2xf32>
    %cst_65 = arith.constant -5.000000e-01 : f32
    %104 = vector.broadcast %cst_65 : f32 to vector<4x2xf32>
    %105 = arith.subf %104, %43 : vector<4x2xf32>
    %cst_66 = arith.constant 2.000000e+00 : f32
    %106 = vector.broadcast %cst_66 : f32 to vector<4x2xf32>
    %107 = arith.mulf %106, %43 : vector<4x2xf32>
    %108 = math.exp %107 : vector<4x2xf32>
    %109 = arith.mulf %39, %39 : vector<4x2xf32>
    %110 = arith.addf %108, %109 : vector<4x2xf32>
    %cst_67 = arith.constant 5.000000e-01 : f32
    %111 = vector.broadcast %cst_67 : f32 to vector<4x2xf32>
    %112 = arith.mulf %111, %110 : vector<4x2xf32>
    %113 = arith.addf %105, %112 : vector<4x2xf32>
    %c0_68 = arith.constant 0 : index
    %c0_69 = arith.constant 0 : index
    %114 = vector.load %arg16[%c0_68, %c0_69] : memref<4x4xf32, #tpu.memory_space<vmem>>, vector<4x4xf32>
    %cst_70 = arith.constant dense<0.000000e+00> : vector<4x2xf32>
    %115 = tpu.matmul %114, %77, %cst_70 {dimension_numbers = #tpu.dot_dimension_numbers<[1], [0], [0], [1], [0, 0, 1, 1], [], []>} : vector<4x4xf32>, vector<4x2xf32>, vector<4x2xf32> -> vector<4x2xf32>
    %116 = vector.broadcast %11 : vector<4x1xf32> to vector<4x2xf32>
    %117 = arith.addf %115, %116 : vector<4x2xf32>
    %c0_71 = arith.constant 0 : index
    %c0_72 = arith.constant 0 : index
    %118 = vector.load %arg17[%c0_71, %c0_72] : memref<4x4xf32, #tpu.memory_space<vmem>>, vector<4x4xf32>
    %cst_73 = arith.constant dense<0.000000e+00> : vector<4x2xf32>
    %119 = tpu.matmul %118, %72, %cst_73 {dimension_numbers = #tpu.dot_dimension_numbers<[1], [0], [0], [1], [0, 0, 1, 1], [], []>} : vector<4x4xf32>, vector<4x2xf32>, vector<4x2xf32> -> vector<4x2xf32>
    %c0_74 = arith.constant 0 : index
    %c0_75 = arith.constant 0 : index
    %120 = vector.load %arg18[%c0_74, %c0_75] : memref<4x4xf32, #tpu.memory_space<vmem>>, vector<4x4xf32>
    %cst_76 = arith.constant dense<0.000000e+00> : vector<4x2xf32>
    %121 = tpu.matmul %120, %117, %cst_76 {dimension_numbers = #tpu.dot_dimension_numbers<[1], [0], [0], [1], [0, 0, 1, 1], [], []>} : vector<4x4xf32>, vector<4x2xf32>, vector<4x2xf32> -> vector<4x2xf32>
    %122 = arith.addf %119, %121 : vector<4x2xf32>
    %123 = vector.broadcast %12 : vector<4x1xf32> to vector<4x2xf32>
    %124 = arith.addf %122, %123 : vector<4x2xf32>
    %c0_77 = arith.constant 0 : index
    %c0_78 = arith.constant 0 : index
    %125 = vector.load %arg6[%c0_77, %c0_78] : memref<2x512xf32, #tpu.memory_space<vmem>>, vector<2x512xf32>
    %cst_79 = arith.constant dense<0.000000e+00> : vector<4x512xf32>
    %126 = tpu.matmul %124, %125, %cst_79 {dimension_numbers = #tpu.dot_dimension_numbers<[1], [0], [0], [1], [0, 0, 1, 1], [], []>} : vector<4x2xf32>, vector<2x512xf32>, vector<4x512xf32> -> vector<4x512xf32>
    %127 = arith.addf %3, %126 : vector<4x512xf32>
    %c17_i32 = arith.constant 17 : i32
    %128 = tpu.dynamic_rotate %127 by %c17_i32 dim 1 : vector<4x512xf32>, i32 -> vector<4x512xf32>
    %c0_80 = arith.constant 0 : index
    %c0_81 = arith.constant 0 : index
    %c0_82 = arith.constant 0 : index
    %129 = vector.load %arg4[%c0_80, %c0_81, %c0_82] : memref<9x1x512xf32, #tpu.memory_space<vmem>>, vector<1x1x512xf32>
    %130 = vector.shape_cast %129 : vector<1x1x512xf32> to vector<1x512xf32>
    %131 = vector.broadcast %130 : vector<1x512xf32> to vector<4x512xf32>
    %132 = arith.mulf %128, %131 : vector<4x512xf32>
    %133 = arith.truncf %132 : vector<4x512xf32> to vector<4x512xbf16>
    %c0_83 = arith.constant 0 : index
    %c0_84 = arith.constant 0 : index
    %134 = vector.load %arg23[%c0_83, %c0_84] : memref<144x512xbf16, #tpu.memory_space<vmem>>, vector<4x512xbf16>
    tpu.vector_store %arg23[%c0_83, %c0_84], %133 {strides = array<i32>} : memref<144x512xbf16, #tpu.memory_space<vmem>>, vector<4x512xbf16>,
    %c16_i32 = arith.constant 16 : i32
    %135 = tpu.dynamic_rotate %127 by %c16_i32 dim 1 : vector<4x512xf32>, i32 -> vector<4x512xf32>
    %c1_85 = arith.constant 1 : index
    %c0_86 = arith.constant 0 : index
    %c0_87 = arith.constant 0 : index
    %136 = vector.load %arg4[%c1_85, %c0_86, %c0_87] : memref<9x1x512xf32, #tpu.memory_space<vmem>>, vector<1x1x512xf32>
    %137 = vector.shape_cast %136 : vector<1x1x512xf32> to vector<1x512xf32>
    %138 = vector.broadcast %137 : vector<1x512xf32> to vector<4x512xf32>
    %139 = arith.mulf %135, %138 : vector<4x512xf32>
    %140 = arith.truncf %139 : vector<4x512xf32> to vector<4x512xbf16>
    %c16 = arith.constant 16 : index
    %c0_88 = arith.constant 0 : index
    %141 = vector.load %arg23[%c16, %c0_88] : memref<144x512xbf16, #tpu.memory_space<vmem>>, vector<4x512xbf16>
    tpu.vector_store %arg23[%c16, %c0_88], %140 {strides = array<i32>} : memref<144x512xbf16, #tpu.memory_space<vmem>>, vector<4x512xbf16>,
    %c15_i32 = arith.constant 15 : i32
    %142 = tpu.dynamic_rotate %127 by %c15_i32 dim 1 : vector<4x512xf32>, i32 -> vector<4x512xf32>
    %c2_89 = arith.constant 2 : index
    %c0_90 = arith.constant 0 : index
    %c0_91 = arith.constant 0 : index
    %143 = vector.load %arg4[%c2_89, %c0_90, %c0_91] : memref<9x1x512xf32, #tpu.memory_space<vmem>>, vector<1x1x512xf32>
    %144 = vector.shape_cast %143 : vector<1x1x512xf32> to vector<1x512xf32>
    %145 = vector.broadcast %144 : vector<1x512xf32> to vector<4x512xf32>
    %146 = arith.mulf %142, %145 : vector<4x512xf32>
    %147 = arith.truncf %146 : vector<4x512xf32> to vector<4x512xbf16>
    %c32 = arith.constant 32 : index
    %c0_92 = arith.constant 0 : index
    %148 = vector.load %arg23[%c32, %c0_92] : memref<144x512xbf16, #tpu.memory_space<vmem>>, vector<4x512xbf16>
    tpu.vector_store %arg23[%c32, %c0_92], %147 {strides = array<i32>} : memref<144x512xbf16, #tpu.memory_space<vmem>>, vector<4x512xbf16>,
    %c1_i32 = arith.constant 1 : i32
    %149 = tpu.dynamic_rotate %127 by %c1_i32 dim 1 : vector<4x512xf32>, i32 -> vector<4x512xf32>
    %c3_93 = arith.constant 3 : index
    %c0_94 = arith.constant 0 : index
    %c0_95 = arith.constant 0 : index
    %150 = vector.load %arg4[%c3_93, %c0_94, %c0_95] : memref<9x1x512xf32, #tpu.memory_space<vmem>>, vector<1x1x512xf32>
    %151 = vector.shape_cast %150 : vector<1x1x512xf32> to vector<1x512xf32>
    %152 = vector.broadcast %151 : vector<1x512xf32> to vector<4x512xf32>
    %153 = arith.mulf %149, %152 : vector<4x512xf32>
    %154 = arith.truncf %153 : vector<4x512xf32> to vector<4x512xbf16>
    %c48 = arith.constant 48 : index
    %c0_96 = arith.constant 0 : index
    %155 = vector.load %arg23[%c48, %c0_96] : memref<144x512xbf16, #tpu.memory_space<vmem>>, vector<4x512xbf16>
    tpu.vector_store %arg23[%c48, %c0_96], %154 {strides = array<i32>} : memref<144x512xbf16, #tpu.memory_space<vmem>>, vector<4x512xbf16>,
    %156 = arith.truncf %127 : vector<4x512xf32> to vector<4x512xbf16>
    %c64 = arith.constant 64 : index
    %c0_97 = arith.constant 0 : index
    %157 = vector.load %arg23[%c64, %c0_97] : memref<144x512xbf16, #tpu.memory_space<vmem>>, vector<4x512xbf16>
    tpu.vector_store %arg23[%c64, %c0_97], %156 {strides = array<i32>} : memref<144x512xbf16, #tpu.memory_space<vmem>>, vector<4x512xbf16>,
    %c511_i32 = arith.constant 511 : i32
    %158 = tpu.dynamic_rotate %127 by %c511_i32 dim 1 : vector<4x512xf32>, i32 -> vector<4x512xf32>
    %c5_98 = arith.constant 5 : index
    %c0_99 = arith.constant 0 : index
    %c0_100 = arith.constant 0 : index
    %159 = vector.load %arg4[%c5_98, %c0_99, %c0_100] : memref<9x1x512xf32, #tpu.memory_space<vmem>>, vector<1x1x512xf32>
    %160 = vector.shape_cast %159 : vector<1x1x512xf32> to vector<1x512xf32>
    %161 = vector.broadcast %160 : vector<1x512xf32> to vector<4x512xf32>
    %162 = arith.mulf %158, %161 : vector<4x512xf32>
    %163 = arith.truncf %162 : vector<4x512xf32> to vector<4x512xbf16>
    %c80 = arith.constant 80 : index
    %c0_101 = arith.constant 0 : index
    %164 = vector.load %arg23[%c80, %c0_101] : memref<144x512xbf16, #tpu.memory_space<vmem>>, vector<4x512xbf16>
    tpu.vector_store %arg23[%c80, %c0_101], %163 {strides = array<i32>} : memref<144x512xbf16, #tpu.memory_space<vmem>>, vector<4x512xbf16>,
    %c497_i32 = arith.constant 497 : i32
    %165 = tpu.dynamic_rotate %127 by %c497_i32 dim 1 : vector<4x512xf32>, i32 -> vector<4x512xf32>
    %c6_102 = arith.constant 6 : index
    %c0_103 = arith.constant 0 : index
    %c0_104 = arith.constant 0 : index
    %166 = vector.load %arg4[%c6_102, %c0_103, %c0_104] : memref<9x1x512xf32, #tpu.memory_space<vmem>>, vector<1x1x512xf32>
    %167 = vector.shape_cast %166 : vector<1x1x512xf32> to vector<1x512xf32>
    %168 = vector.broadcast %167 : vector<1x512xf32> to vector<4x512xf32>
    %169 = arith.mulf %165, %168 : vector<4x512xf32>
    %170 = arith.truncf %169 : vector<4x512xf32> to vector<4x512xbf16>
    %c96 = arith.constant 96 : index
    %c0_105 = arith.constant 0 : index
    %171 = vector.load %arg23[%c96, %c0_105] : memref<144x512xbf16, #tpu.memory_space<vmem>>, vector<4x512xbf16>
    tpu.vector_store %arg23[%c96, %c0_105], %170 {strides = array<i32>} : memref<144x512xbf16, #tpu.memory_space<vmem>>, vector<4x512xbf16>,
    %c496_i32 = arith.constant 496 : i32
    %172 = tpu.dynamic_rotate %127 by %c496_i32 dim 1 : vector<4x512xf32>, i32 -> vector<4x512xf32>
    %c7 = arith.constant 7 : index
    %c0_106 = arith.constant 0 : index
    %c0_107 = arith.constant 0 : index
    %173 = vector.load %arg4[%c7, %c0_106, %c0_107] : memref<9x1x512xf32, #tpu.memory_space<vmem>>, vector<1x1x512xf32>
    %174 = vector.shape_cast %173 : vector<1x1x512xf32> to vector<1x512xf32>
    %175 = vector.broadcast %174 : vector<1x512xf32> to vector<4x512xf32>
    %176 = arith.mulf %172, %175 : vector<4x512xf32>
    %177 = arith.truncf %176 : vector<4x512xf32> to vector<4x512xbf16>
    %c112 = arith.constant 112 : index
    %c0_108 = arith.constant 0 : index
    %178 = vector.load %arg23[%c112, %c0_108] : memref<144x512xbf16, #tpu.memory_space<vmem>>, vector<4x512xbf16>
    tpu.vector_store %arg23[%c112, %c0_108], %177 {strides = array<i32>} : memref<144x512xbf16, #tpu.memory_space<vmem>>, vector<4x512xbf16>,
    %c495_i32 = arith.constant 495 : i32
    %179 = tpu.dynamic_rotate %127 by %c495_i32 dim 1 : vector<4x512xf32>, i32 -> vector<4x512xf32>
    %c8 = arith.constant 8 : index
    %c0_109 = arith.constant 0 : index
    %c0_110 = arith.constant 0 : index
    %180 = vector.load %arg4[%c8, %c0_109, %c0_110] : memref<9x1x512xf32, #tpu.memory_space<vmem>>, vector<1x1x512xf32>
    %181 = vector.shape_cast %180 : vector<1x1x512xf32> to vector<1x512xf32>
    %182 = vector.broadcast %181 : vector<1x512xf32> to vector<4x512xf32>
    %183 = arith.mulf %179, %182 : vector<4x512xf32>
    %184 = arith.truncf %183 : vector<4x512xf32> to vector<4x512xbf16>
    %c128 = arith.constant 128 : index
    %c0_111 = arith.constant 0 : index
    %185 = vector.load %arg23[%c128, %c0_111] : memref<144x512xbf16, #tpu.memory_space<vmem>>, vector<4x512xbf16>
    tpu.vector_store %arg23[%c128, %c0_111], %184 {strides = array<i32>} : memref<144x512xbf16, #tpu.memory_space<vmem>>, vector<4x512xbf16>,
    %c0_112 = arith.constant 0 : index
    %c0_113 = arith.constant 0 : index
    %186 = vector.load %arg19[%c0_112, %c0_113] : memref<4x144xbf16, #tpu.memory_space<vmem>>, vector<4x144xbf16>
    %c0_114 = arith.constant 0 : index
    %c0_115 = arith.constant 0 : index
    %187 = vector.load %arg23[%c0_114, %c0_115] : memref<144x512xbf16, #tpu.memory_space<vmem>>, vector<144x512xbf16>
    %cst_116 = arith.constant dense<0.000000e+00> : vector<4x512xf32>
    %188 = tpu.matmul %186, %187, %cst_116 {dimension_numbers = #tpu.dot_dimension_numbers<[1], [0], [0], [1], [0, 0, 1, 1], [], []>} : vector<4x144xbf16>, vector<144x512xbf16>, vector<4x512xf32> -> vector<4x512xf32>
    %189 = vector.broadcast %13 : vector<4x1xf32> to vector<4x512xf32>
    %190 = arith.addf %188, %189 : vector<4x512xf32>
    %cst_117 = arith.constant 0.000000e+00 : f32
    %191 = vector.broadcast %cst_117 : f32 to vector<4x512xf32>
    %192 = arith.maximumf %190, %191 : vector<4x512xf32>
    %c17_i32_118 = arith.constant 17 : i32
    %193 = tpu.dynamic_rotate %192 by %c17_i32_118 dim 1 : vector<4x512xf32>, i32 -> vector<4x512xf32>
    %c0_119 = arith.constant 0 : index
    %c0_120 = arith.constant 0 : index
    %c0_121 = arith.constant 0 : index
    %194 = vector.load %arg4[%c0_119, %c0_120, %c0_121] : memref<9x1x512xf32, #tpu.memory_space<vmem>>, vector<1x1x512xf32>
    %195 = vector.shape_cast %194 : vector<1x1x512xf32> to vector<1x512xf32>
    %196 = vector.broadcast %195 : vector<1x512xf32> to vector<4x512xf32>
    %197 = arith.mulf %193, %196 : vector<4x512xf32>
    %198 = arith.truncf %197 : vector<4x512xf32> to vector<4x512xbf16>
    %c0_122 = arith.constant 0 : index
    %c0_123 = arith.constant 0 : index
    %199 = vector.load %arg23[%c0_122, %c0_123] : memref<144x512xbf16, #tpu.memory_space<vmem>>, vector<4x512xbf16>
    tpu.vector_store %arg23[%c0_122, %c0_123], %198 {strides = array<i32>} : memref<144x512xbf16, #tpu.memory_space<vmem>>, vector<4x512xbf16>,
    %c16_i32_124 = arith.constant 16 : i32
    %200 = tpu.dynamic_rotate %192 by %c16_i32_124 dim 1 : vector<4x512xf32>, i32 -> vector<4x512xf32>
    %c1_125 = arith.constant 1 : index
    %c0_126 = arith.constant 0 : index
    %c0_127 = arith.constant 0 : index
    %201 = vector.load %arg4[%c1_125, %c0_126, %c0_127] : memref<9x1x512xf32, #tpu.memory_space<vmem>>, vector<1x1x512xf32>
    %202 = vector.shape_cast %201 : vector<1x1x512xf32> to vector<1x512xf32>
    %203 = vector.broadcast %202 : vector<1x512xf32> to vector<4x512xf32>
    %204 = arith.mulf %200, %203 : vector<4x512xf32>
    %205 = arith.truncf %204 : vector<4x512xf32> to vector<4x512xbf16>
    %c16_128 = arith.constant 16 : index
    %c0_129 = arith.constant 0 : index
    %206 = vector.load %arg23[%c16_128, %c0_129] : memref<144x512xbf16, #tpu.memory_space<vmem>>, vector<4x512xbf16>
    tpu.vector_store %arg23[%c16_128, %c0_129], %205 {strides = array<i32>} : memref<144x512xbf16, #tpu.memory_space<vmem>>, vector<4x512xbf16>,
    %c15_i32_130 = arith.constant 15 : i32
    %207 = tpu.dynamic_rotate %192 by %c15_i32_130 dim 1 : vector<4x512xf32>, i32 -> vector<4x512xf32>
    %c2_131 = arith.constant 2 : index
    %c0_132 = arith.constant 0 : index
    %c0_133 = arith.constant 0 : index
    %208 = vector.load %arg4[%c2_131, %c0_132, %c0_133] : memref<9x1x512xf32, #tpu.memory_space<vmem>>, vector<1x1x512xf32>
    %209 = vector.shape_cast %208 : vector<1x1x512xf32> to vector<1x512xf32>
    %210 = vector.broadcast %209 : vector<1x512xf32> to vector<4x512xf32>
    %211 = arith.mulf %207, %210 : vector<4x512xf32>
    %212 = arith.truncf %211 : vector<4x512xf32> to vector<4x512xbf16>
    %c32_134 = arith.constant 32 : index
    %c0_135 = arith.constant 0 : index
    %213 = vector.load %arg23[%c32_134, %c0_135] : memref<144x512xbf16, #tpu.memory_space<vmem>>, vector<4x512xbf16>
    tpu.vector_store %arg23[%c32_134, %c0_135], %212 {strides = array<i32>} : memref<144x512xbf16, #tpu.memory_space<vmem>>, vector<4x512xbf16>,
    %c1_i32_136 = arith.constant 1 : i32
    %214 = tpu.dynamic_rotate %192 by %c1_i32_136 dim 1 : vector<4x512xf32>, i32 -> vector<4x512xf32>
    %c3_137 = arith.constant 3 : index
    %c0_138 = arith.constant 0 : index
    %c0_139 = arith.constant 0 : index
    %215 = vector.load %arg4[%c3_137, %c0_138, %c0_139] : memref<9x1x512xf32, #tpu.memory_space<vmem>>, vector<1x1x512xf32>
    %216 = vector.shape_cast %215 : vector<1x1x512xf32> to vector<1x512xf32>
    %217 = vector.broadcast %216 : vector<1x512xf32> to vector<4x512xf32>
    %218 = arith.mulf %214, %217 : vector<4x512xf32>
    %219 = arith.truncf %218 : vector<4x512xf32> to vector<4x512xbf16>
    %c48_140 = arith.constant 48 : index
    %c0_141 = arith.constant 0 : index
    %220 = vector.load %arg23[%c48_140, %c0_141] : memref<144x512xbf16, #tpu.memory_space<vmem>>, vector<4x512xbf16>
    tpu.vector_store %arg23[%c48_140, %c0_141], %219 {strides = array<i32>} : memref<144x512xbf16, #tpu.memory_space<vmem>>, vector<4x512xbf16>,
    %221 = arith.truncf %192 : vector<4x512xf32> to vector<4x512xbf16>
    %c64_142 = arith.constant 64 : index
    %c0_143 = arith.constant 0 : index
    %222 = vector.load %arg23[%c64_142, %c0_143] : memref<144x512xbf16, #tpu.memory_space<vmem>>, vector<4x512xbf16>
    tpu.vector_store %arg23[%c64_142, %c0_143], %221 {strides = array<i32>} : memref<144x512xbf16, #tpu.memory_space<vmem>>, vector<4x512xbf16>,
    %c511_i32_144 = arith.constant 511 : i32
    %223 = tpu.dynamic_rotate %192 by %c511_i32_144 dim 1 : vector<4x512xf32>, i32 -> vector<4x512xf32>
    %c5_145 = arith.constant 5 : index
    %c0_146 = arith.constant 0 : index
    %c0_147 = arith.constant 0 : index
    %224 = vector.load %arg4[%c5_145, %c0_146, %c0_147] : memref<9x1x512xf32, #tpu.memory_space<vmem>>, vector<1x1x512xf32>
    %225 = vector.shape_cast %224 : vector<1x1x512xf32> to vector<1x512xf32>
    %226 = vector.broadcast %225 : vector<1x512xf32> to vector<4x512xf32>
    %227 = arith.mulf %223, %226 : vector<4x512xf32>
    %228 = arith.truncf %227 : vector<4x512xf32> to vector<4x512xbf16>
    %c80_148 = arith.constant 80 : index
    %c0_149 = arith.constant 0 : index
    %229 = vector.load %arg23[%c80_148, %c0_149] : memref<144x512xbf16, #tpu.memory_space<vmem>>, vector<4x512xbf16>
    tpu.vector_store %arg23[%c80_148, %c0_149], %228 {strides = array<i32>} : memref<144x512xbf16, #tpu.memory_space<vmem>>, vector<4x512xbf16>,
    %c497_i32_150 = arith.constant 497 : i32
    %230 = tpu.dynamic_rotate %192 by %c497_i32_150 dim 1 : vector<4x512xf32>, i32 -> vector<4x512xf32>
    %c6_151 = arith.constant 6 : index
    %c0_152 = arith.constant 0 : index
    %c0_153 = arith.constant 0 : index
    %231 = vector.load %arg4[%c6_151, %c0_152, %c0_153] : memref<9x1x512xf32, #tpu.memory_space<vmem>>, vector<1x1x512xf32>
    %232 = vector.shape_cast %231 : vector<1x1x512xf32> to vector<1x512xf32>
    %233 = vector.broadcast %232 : vector<1x512xf32> to vector<4x512xf32>
    %234 = arith.mulf %230, %233 : vector<4x512xf32>
    %235 = arith.truncf %234 : vector<4x512xf32> to vector<4x512xbf16>
    %c96_154 = arith.constant 96 : index
    %c0_155 = arith.constant 0 : index
    %236 = vector.load %arg23[%c96_154, %c0_155] : memref<144x512xbf16, #tpu.memory_space<vmem>>, vector<4x512xbf16>
    tpu.vector_store %arg23[%c96_154, %c0_155], %235 {strides = array<i32>} : memref<144x512xbf16, #tpu.memory_space<vmem>>, vector<4x512xbf16>,
    %c496_i32_156 = arith.constant 496 : i32
    %237 = tpu.dynamic_rotate %192 by %c496_i32_156 dim 1 : vector<4x512xf32>, i32 -> vector<4x512xf32>
    %c7_157 = arith.constant 7 : index
    %c0_158 = arith.constant 0 : index
    %c0_159 = arith.constant 0 : index
    %238 = vector.load %arg4[%c7_157, %c0_158, %c0_159] : memref<9x1x512xf32, #tpu.memory_space<vmem>>, vector<1x1x512xf32>
    %239 = vector.shape_cast %238 : vector<1x1x512xf32> to vector<1x512xf32>
    %240 = vector.broadcast %239 : vector<1x512xf32> to vector<4x512xf32>
    %241 = arith.mulf %237, %240 : vector<4x512xf32>
    %242 = arith.truncf %241 : vector<4x512xf32> to vector<4x512xbf16>
    %c112_160 = arith.constant 112 : index
    %c0_161 = arith.constant 0 : index
    %243 = vector.load %arg23[%c112_160, %c0_161] : memref<144x512xbf16, #tpu.memory_space<vmem>>, vector<4x512xbf16>
    tpu.vector_store %arg23[%c112_160, %c0_161], %242 {strides = array<i32>} : memref<144x512xbf16, #tpu.memory_space<vmem>>, vector<4x512xbf16>,
    %c495_i32_162 = arith.constant 495 : i32
    %244 = tpu.dynamic_rotate %192 by %c495_i32_162 dim 1 : vector<4x512xf32>, i32 -> vector<4x512xf32>
    %c8_163 = arith.constant 8 : index
    %c0_164 = arith.constant 0 : index
    %c0_165 = arith.constant 0 : index
    %245 = vector.load %arg4[%c8_163, %c0_164, %c0_165] : memref<9x1x512xf32, #tpu.memory_space<vmem>>, vector<1x1x512xf32>
    %246 = vector.shape_cast %245 : vector<1x1x512xf32> to vector<1x512xf32>
    %247 = vector.broadcast %246 : vector<1x512xf32> to vector<4x512xf32>
    %248 = arith.mulf %244, %247 : vector<4x512xf32>
    %249 = arith.truncf %248 : vector<4x512xf32> to vector<4x512xbf16>
    %c128_166 = arith.constant 128 : index
    %c0_167 = arith.constant 0 : index
    %250 = vector.load %arg23[%c128_166, %c0_167] : memref<144x512xbf16, #tpu.memory_space<vmem>>, vector<4x512xbf16>
    tpu.vector_store %arg23[%c128_166, %c0_167], %249 {strides = array<i32>} : memref<144x512xbf16, #tpu.memory_space<vmem>>, vector<4x512xbf16>,
    %c0_168 = arith.constant 0 : index
    %c0_169 = arith.constant 0 : index
    %251 = vector.load %arg20[%c0_168, %c0_169] : memref<4x144xbf16, #tpu.memory_space<vmem>>, vector<4x144xbf16>
    %c0_170 = arith.constant 0 : index
    %c0_171 = arith.constant 0 : index
    %252 = vector.load %arg23[%c0_170, %c0_171] : memref<144x512xbf16, #tpu.memory_space<vmem>>, vector<144x512xbf16>
    %cst_172 = arith.constant dense<0.000000e+00> : vector<4x512xf32>
    %253 = tpu.matmul %251, %252, %cst_172 {dimension_numbers = #tpu.dot_dimension_numbers<[1], [0], [0], [1], [0, 0, 1, 1], [], []>} : vector<4x144xbf16>, vector<144x512xbf16>, vector<4x512xf32> -> vector<4x512xf32>
    %254 = vector.broadcast %14 : vector<4x1xf32> to vector<4x512xf32>
    %255 = arith.addf %253, %254 : vector<4x512xf32>
    %cst_173 = arith.constant 0.000000e+00 : f32
    %256 = vector.broadcast %cst_173 : f32 to vector<4x512xf32>
    %257 = arith.maximumf %255, %256 : vector<4x512xf32>
    %c0_174 = arith.constant 0 : index
    %c0_175 = arith.constant 0 : index
    %c0_176 = arith.constant 0 : index
    %258 = vector.load %arg21[%c0_174, %c0_175, %c0_176] : memref<1x4x512xf32, #tpu.memory_space<vmem>>, vector<1x4x512xf32>
    %259 = vector.shape_cast %258 : vector<1x4x512xf32> to vector<4x512xf32>
    %260 = vector.shape_cast %257 : vector<4x512xf32> to vector<1x4x512xf32>
    tpu.vector_store %arg21[%c0_174, %c0_175, %c0_176], %260 {strides = array<i32>} : memref<1x4x512xf32, #tpu.memory_space<vmem>>, vector<1x4x512xf32>,
    %261 = vector.shape_cast %77 : vector<4x2xf32> to vector<1x4x2xf32>
    %262 = vector.shape_cast %93 : vector<4x2xf32> to vector<1x4x2xf32>
    %263 = vector.shape_cast %103 : vector<4x2xf32> to vector<1x4x2xf32>
    %264 = vector.shape_cast %113 : vector<4x2xf32> to vector<1x4x2xf32>
    %265 = tpu.concatenate %261, %262, %263, %264 in 0 : vector<1x4x2xf32>, vector<1x4x2xf32>, vector<1x4x2xf32>, vector<1x4x2xf32> -> vector<4x4x2xf32>
    %c0_177 = arith.constant 0 : index
    %c0_178 = arith.constant 0 : index
    %c0_179 = arith.constant 0 : index
    %c0_180 = arith.constant 0 : index
    %266 = vector.load %arg22[%c0_177, %c0_178, %c0_179, %c0_180] : memref<1x4x4x2xf32, #tpu.memory_space<vmem>>, vector<1x4x4x2xf32>
    %267 = vector.shape_cast %266 : vector<1x4x4x2xf32> to vector<4x4x2xf32>
    %268 = vector.shape_cast %265 : vector<4x4x2xf32> to vector<1x4x4x2xf32>
    tpu.vector_store %arg22[%c0_177, %c0_178, %c0_179, %c0_180], %268 {strides = array<i32>} : memref<1x4x4x2xf32, #tpu.memory_space<vmem>>, vector<1x4x4x2xf32>,
    return
  }
  func.func @transform_0(%arg0: i32) -> (i32, i32, i32) {
    %c0_i32 = arith.constant 0 : i32
    %c0_i32_0 = arith.constant 0 : i32
    %c0_i32_1 = arith.constant 0 : i32
    return %arg0, %c0_i32, %c0_i32_0 : i32, i32, i32
  }
  func.func @transform_1(%arg0: i32) -> (i32, i32, i32) {
    %c0_i32 = arith.constant 0 : i32
    %c0_i32_0 = arith.constant 0 : i32
    %c0_i32_1 = arith.constant 0 : i32
    return %arg0, %c0_i32, %c0_i32_0 : i32, i32, i32
  }
  func.func @transform_2(%arg0: i32) -> (i32, i32, i32) {
    %c0_i32 = arith.constant 0 : i32
    %c0_i32_0 = arith.constant 0 : i32
    %c0_i32_1 = arith.constant 0 : i32
    return %arg0, %c0_i32, %c0_i32_0 : i32, i32, i32
  }
  func.func @transform_3(%arg0: i32) -> (i32, i32, i32) {
    %c0_i32 = arith.constant 0 : i32
    %c0_i32_0 = arith.constant 0 : i32
    %c0_i32_1 = arith.constant 0 : i32
    %c0_i32_2 = arith.constant 0 : i32
    return %c0_i32, %c0_i32_0, %c0_i32_1 : i32, i32, i32
  }
  func.func @transform_4(%arg0: i32) -> (i32, i32) {
    %c0_i32 = arith.constant 0 : i32
    %c0_i32_0 = arith.constant 0 : i32
    %c0_i32_1 = arith.constant 0 : i32
    return %c0_i32, %c0_i32_0 : i32, i32
  }
  func.func @transform_5(%arg0: i32) -> (i32, i32) {
    %c0_i32 = arith.constant 0 : i32
    %c0_i32_0 = arith.constant 0 : i32
    %c0_i32_1 = arith.constant 0 : i32
    return %c0_i32, %c0_i32_0 : i32, i32
  }
  func.func @transform_6(%arg0: i32) -> (i32, i32) {
    %c0_i32 = arith.constant 0 : i32
    %c0_i32_0 = arith.constant 0 : i32
    %c0_i32_1 = arith.constant 0 : i32
    return %c0_i32, %c0_i32_0 : i32, i32
  }
  func.func @transform_7(%arg0: i32) -> (i32, i32) {
    %c0_i32 = arith.constant 0 : i32
    %c0_i32_0 = arith.constant 0 : i32
    %c0_i32_1 = arith.constant 0 : i32
    return %c0_i32, %c0_i32_0 : i32, i32
  }
  func.func @transform_8(%arg0: i32) -> (i32, i32) {
    %c0_i32 = arith.constant 0 : i32
    %c0_i32_0 = arith.constant 0 : i32
    %c0_i32_1 = arith.constant 0 : i32
    return %c0_i32, %c0_i32_0 : i32, i32
  }
  func.func @transform_9(%arg0: i32) -> (i32, i32) {
    %c0_i32 = arith.constant 0 : i32
    %c0_i32_0 = arith.constant 0 : i32
    %c0_i32_1 = arith.constant 0 : i32
    return %c0_i32, %c0_i32_0 : i32, i32
  }
  func.func @transform_10(%arg0: i32) -> (i32, i32) {
    %c0_i32 = arith.constant 0 : i32
    %c0_i32_0 = arith.constant 0 : i32
    %c0_i32_1 = arith.constant 0 : i32
    return %c0_i32, %c0_i32_0 : i32, i32
  }
  func.func @transform_11(%arg0: i32) -> (i32, i32) {
    %c0_i32 = arith.constant 0 : i32
    %c0_i32_0 = arith.constant 0 : i32
    %c0_i32_1 = arith.constant 0 : i32
    return %c0_i32, %c0_i32_0 : i32, i32
  }
  func.func @transform_12(%arg0: i32) -> (i32, i32) {
    %c0_i32 = arith.constant 0 : i32
    %c0_i32_0 = arith.constant 0 : i32
    %c0_i32_1 = arith.constant 0 : i32
    return %c0_i32, %c0_i32_0 : i32, i32
  }
  func.func @transform_13(%arg0: i32) -> (i32, i32) {
    %c0_i32 = arith.constant 0 : i32
    %c0_i32_0 = arith.constant 0 : i32
    %c0_i32_1 = arith.constant 0 : i32
    return %c0_i32, %c0_i32_0 : i32, i32
  }
  func.func @transform_14(%arg0: i32) -> (i32, i32) {
    %c0_i32 = arith.constant 0 : i32
    %c0_i32_0 = arith.constant 0 : i32
    %c0_i32_1 = arith.constant 0 : i32
    return %c0_i32, %c0_i32_0 : i32, i32
  }
  func.func @transform_15(%arg0: i32) -> (i32, i32) {
    %c0_i32 = arith.constant 0 : i32
    %c0_i32_0 = arith.constant 0 : i32
    %c0_i32_1 = arith.constant 0 : i32
    return %c0_i32, %c0_i32_0 : i32, i32
  }
  func.func @transform_16(%arg0: i32) -> (i32, i32) {
    %c0_i32 = arith.constant 0 : i32
    %c0_i32_0 = arith.constant 0 : i32
    %c0_i32_1 = arith.constant 0 : i32
    return %c0_i32, %c0_i32_0 : i32, i32
  }
  func.func @transform_17(%arg0: i32) -> (i32, i32) {
    %c0_i32 = arith.constant 0 : i32
    %c0_i32_0 = arith.constant 0 : i32
    %c0_i32_1 = arith.constant 0 : i32
    return %c0_i32, %c0_i32_0 : i32, i32
  }
  func.func @transform_18(%arg0: i32) -> (i32, i32) {
    %c0_i32 = arith.constant 0 : i32
    %c0_i32_0 = arith.constant 0 : i32
    %c0_i32_1 = arith.constant 0 : i32
    return %c0_i32, %c0_i32_0 : i32, i32
  }
  func.func @transform_19(%arg0: i32) -> (i32, i32) {
    %c0_i32 = arith.constant 0 : i32
    %c0_i32_0 = arith.constant 0 : i32
    %c0_i32_1 = arith.constant 0 : i32
    return %c0_i32, %c0_i32_0 : i32, i32
  }
  func.func @transform_20(%arg0: i32) -> (i32, i32, i32) {
    %c0_i32 = arith.constant 0 : i32
    %c0_i32_0 = arith.constant 0 : i32
    %c0_i32_1 = arith.constant 0 : i32
    return %arg0, %c0_i32, %c0_i32_0 : i32, i32, i32
  }
  func.func @transform_21(%arg0: i32) -> (i32, i32, i32, i32) {
    %c0_i32 = arith.constant 0 : i32
    %c0_i32_0 = arith.constant 0 : i32
    %c0_i32_1 = arith.constant 0 : i32
    %c0_i32_2 = arith.constant 0 : i32
    return %arg0, %c0_i32, %c0_i32_0, %c0_i32_1 : i32, i32, i32, i32
  }
}

</mosaic_0001>

<llo_original>
// kernel: bottleneck_plugged_forward.1
$region0: #{bottleneck_plugged_forward.1}
  #allocation0 [shape = 'u32[]', space=smem, size = 0x4, offset = 0x4, fixed_abs, tag = 'smem constant byte address 0x4 - core index']
  #allocation1 [shape = 'u32[144,128]{1,0:T(1,128)}', space=vmem, size = 0x12000, scoped, tag = 'internal scratch']
  #allocation2 [shape = 'bf16[144,512]{1,0:T(16,128)(2,1)}', space=vmem, size = 0x24000, scoped, tag = 'scratch operand']
  %s0 = inlined_call_operand.vmem [shape: f32[2,4,2], index: 0, kind: input, shape index: {}]
  %s1 = inlined_call_operand.vmem [shape: f32[2,4,2], index: 1, kind: input, shape index: {}]
  %s2 = inlined_call_operand.vmem [shape: f32[2,4,512], index: 2, kind: input, shape index: {}]
  %s3 = inlined_call_operand.vmem [shape: f32[9,1,512], index: 3, kind: input, shape index: {}]
  %s4 = inlined_call_operand.vmem [shape: f32[512,2], index: 4, kind: input, shape index: {}]
  %s5 = inlined_call_operand.vmem [shape: f32[2,512], index: 5, kind: input, shape index: {}]
  %s6 = inlined_call_operand.vmem [shape: f32[4,8], index: 6, kind: input, shape index: {}]
  %s7 = inlined_call_operand.vmem [shape: f32[4,8], index: 7, kind: input, shape index: {}]
  %s8 = inlined_call_operand.vmem [shape: f32[4,4], index: 8, kind: input, shape index: {}]
  %s9 = inlined_call_operand.vmem [shape: f32[4,4], index: 9, kind: input, shape index: {}]
  %s10 = inlined_call_operand.vmem [shape: f32[4,4], index: 10, kind: input, shape index: {}]
  %s11 = inlined_call_operand.vmem [shape: f32[4,4], index: 11, kind: input, shape index: {}]
  %s12 = inlined_call_operand.vmem [shape: f32[4,4], index: 12, kind: input, shape index: {}]
  %s13 = inlined_call_operand.vmem [shape: f32[4,4], index: 13, kind: input, shape index: {}]
  %s14 = inlined_call_operand.vmem [shape: f32[4,4], index: 14, kind: input, shape index: {}]
  %s15 = inlined_call_operand.vmem [shape: f32[4,4], index: 15, kind: input, shape index: {}]
  %s16 = inlined_call_operand.vmem [shape: f32[4,4], index: 16, kind: input, shape index: {}]
  %s17 = inlined_call_operand.vmem [shape: f32[4,4], index: 17, kind: input, shape index: {}]
  %s18 = inlined_call_operand.vmem [shape: bf16[4,144], index: 18, kind: input, shape index: {}]
  %s19 = inlined_call_operand.vmem [shape: bf16[4,144], index: 19, kind: input, shape index: {}]
  %s20 = inlined_call_operand.vmem [shape: f32[2,4,512], index: 20, kind: output, shape index: {0}]
  %s21 = inlined_call_operand.vmem [shape: f32[2,4,4,2], index: 21, kind: output, shape index: {1}]
  %22 = xla_tuple %s20, %s21
  %s23 = sld [smem:[#allocation0]]
  $region121: #{bottleneck_plugged_forward.1} parent=0
    _
  %s25 = ssub.s32 1, %s23
  %s26 = scalar_select 0, %s25, %s23
  loop: start=0, step=1, limit=4
  $region2: #{bottleneck_plugged_forward.1} parent=0 // loop_pre_header
    _
  $region3: #{bottleneck_plugged_forward.1} parent=0 // loop_header
    %s28 = sphi 0, %s32
    %p29 = scmp.ge.s32.totalorder %s28, 4
    %s38 = sphi 0, %s40
    %s41 = sphi 0, %s38
    %s42 = sphi 0, %s41
    %s58 = sphi 0, %s42
    %s64 = sphi 0, %s66
    %s67 = sphi 0, %s64
    %s68 = sphi 0, %s67
    %s84 = sphi 0, %s68
    %s90 = sphi 0, %s92
    %s93 = sphi 0, %s90
    %s94 = sphi 0, %s93
    %s110 = sphi 0, %s94
    %s114 = sphi 0, %s114
    %s116 = sphi 0, %s114
    %s117 = sphi 0, %s116
    %s131 = sphi 0, %s117
    %s135 = sphi 0, %s135
    %s137 = sphi 0, %s135
    %s138 = sphi 0, %s137
    %s152 = sphi 0, %s138
    %s156 = sphi 0, %s156
    %s158 = sphi 0, %s156
    %s159 = sphi 0, %s158
    %s173 = sphi 0, %s159
    %s177 = sphi 0, %s177
    %s179 = sphi 0, %s177
    %s180 = sphi 0, %s179
    %s194 = sphi 0, %s180
    %s198 = sphi 0, %s198
    %s200 = sphi 0, %s198
    %s201 = sphi 0, %s200
    %s215 = sphi 0, %s201
    %s219 = sphi 0, %s219
    %s221 = sphi 0, %s219
    %s222 = sphi 0, %s221
    %s236 = sphi 0, %s222
    %s240 = sphi 0, %s240
    %s242 = sphi 0, %s240
    %s243 = sphi 0, %s242
    %s257 = sphi 0, %s243
    %s261 = sphi 0, %s261
    %s263 = sphi 0, %s261
    %s264 = sphi 0, %s263
    %s278 = sphi 0, %s264
    %s282 = sphi 0, %s282
    %s284 = sphi 0, %s282
    %s285 = sphi 0, %s284
    %s299 = sphi 0, %s285
    %s303 = sphi 0, %s303
    %s305 = sphi 0, %s303
    %s306 = sphi 0, %s305
    %s320 = sphi 0, %s306
    %s324 = sphi 0, %s324
    %s326 = sphi 0, %s324
    %s327 = sphi 0, %s326
    %s341 = sphi 0, %s327
    %s345 = sphi 0, %s345
    %s347 = sphi 0, %s345
    %s348 = sphi 0, %s347
    %s362 = sphi 0, %s348
    %s366 = sphi 0, %s366
    %s368 = sphi 0, %s366
    %s369 = sphi 0, %s368
    %s383 = sphi 0, %s369
    %s387 = sphi 0, %s387
    %s389 = sphi 0, %s387
    %s390 = sphi 0, %s389
    %s404 = sphi 0, %s390
    %s408 = sphi 0, %s408
    %s410 = sphi 0, %s408
    %s411 = sphi 0, %s410
    %s425 = sphi 0, %s411
    %s429 = sphi 0, %s429
    %s431 = sphi 0, %s429
    %s432 = sphi 0, %s431
    %s446 = sphi 0, %s432
    %s450 = sphi 0, %s450
    %s452 = sphi 0, %s450
    %s453 = sphi 0, %s452
    %s467 = sphi 0, %s453
    %s473 = sphi 0, %s475
    %s476 = sphi 0, %s473
    %s477 = sphi 0, %s476
    %s493 = sphi 0, %s477
    %s499 = sphi 0, %s501
    %s502 = sphi 0, %s499
    %s503 = sphi 0, %s502
    %s519 = sphi 0, %s503
  $region4: #{bottleneck_plugged_forward.1} parent=0 // loop_header_branch
    %31 = sbr.rel (%p29) target = $region8
  $region5: #{bottleneck_plugged_forward.1} parent=0 // loop_body
    %s33 = ssub.s32 %s28, 1
    %s34 = ssub.s32 %s28, 2
    %s35 = sadd.s32 %s28, 1
    %s36 = ssub.s32 %s28, %s35
    %p37 = scmp.eq.s32.totalorder %s36, 0
    %s39 = sadd.s32 %s38, 1
    %s40 = scalar_select %p37, %s38, %s39
    %p43 = pneg %p37
    %p44 = scmp.eq.s32.totalorder %s28, 1
    %p45 = por %p43, %p44
    %p46 = scmp.ne.s32.totalorder %s38, %s41
    %p47 = scmp.eq.s32.totalorder %s28, 0
    %p48 = por %p46, %p47
    %p49 = scmp.ne.s32.totalorder %s38, %s41
    %p50 = scmp.eq.s32.totalorder %s33, 1
    %p51 = por %p49, %p50
    %p52 = scmp.ne.s32.totalorder %s41, %s42
    %p53 = scmp.eq.s32.totalorder %s33, 0
    %p54 = por %p52, %p53
    %p55 = scmp.ne.s32.totalorder %s41, %s42
    %p56 = scmp.eq.s32.totalorder %s34, 1
    %p57 = por %p55, %p56
    %p59 = scmp.ne.s32.totalorder %s42, %s58
    %p60 = scmp.eq.s32.totalorder %s34, 0
    %p61 = por %p59, %p60
    %s62 = ssub.s32 %s28, %s35
    %p63 = scmp.eq.s32.totalorder %s62, 0
    %s65 = sadd.s32 %s64, 1
    %s66 = scalar_select %p63, %s64, %s65
    %p69 = pneg %p63
    %p70 = scmp.eq.s32.totalorder %s28, 1
    %p71 = por %p69, %p70
    %p72 = scmp.ne.s32.totalorder %s64, %s67
    %p73 = scmp.eq.s32.totalorder %s28, 0
    %p74 = por %p72, %p73
    %p75 = scmp.ne.s32.totalorder %s64, %s67
    %p76 = scmp.eq.s32.totalorder %s33, 1
    %p77 = por %p75, %p76
    %p78 = scmp.ne.s32.totalorder %s67, %s68
    %p79 = scmp.eq.s32.totalorder %s33, 0
    %p80 = por %p78, %p79
    %p81 = scmp.ne.s32.totalorder %s67, %s68
    %p82 = scmp.eq.s32.totalorder %s34, 1
    %p83 = por %p81, %p82
    %p85 = scmp.ne.s32.totalorder %s68, %s84
    %p86 = scmp.eq.s32.totalorder %s34, 0
    %p87 = por %p85, %p86
    %s88 = ssub.s32 %s28, %s35
    %p89 = scmp.eq.s32.totalorder %s88, 0
    %s91 = sadd.s32 %s90, 1
    %s92 = scalar_select %p89, %s90, %s91
    %p95 = pneg %p89
    %p96 = scmp.eq.s32.totalorder %s28, 1
    %p97 = por %p95, %p96
    %p98 = scmp.ne.s32.totalorder %s90, %s93
    %p99 = scmp.eq.s32.totalorder %s28, 0
    %p100 = por %p98, %p99
    %p101 = scmp.ne.s32.totalorder %s90, %s93
    %p102 = scmp.eq.s32.totalorder %s33, 1
    %p103 = por %p101, %p102
    %p104 = scmp.ne.s32.totalorder %s93, %s94
    %p105 = scmp.eq.s32.totalorder %s33, 0
    %p106 = por %p104, %p105
    %p107 = scmp.ne.s32.totalorder %s93, %s94
    %p108 = scmp.eq.s32.totalorder %s34, 1
    %p109 = por %p107, %p108
    %p111 = scmp.ne.s32.totalorder %s94, %s110
    %p112 = scmp.eq.s32.totalorder %s34, 0
    %p113 = por %p111, %p112
    %s115 = sadd.s32 %s114, 1
    %p118 = scmp.eq.s32.totalorder %s28, 1
    %p119 = scmp.ne.s32.totalorder %s114, %s116
    %p120 = scmp.eq.s32.totalorder %s28, 0
    %p121 = por %p119, %p120
    %p122 = scmp.ne.s32.totalorder %s114, %s116
    %p123 = scmp.eq.s32.totalorder %s33, 1
    %p124 = por %p122, %p123
    %p125 = scmp.ne.s32.totalorder %s116, %s117
    %p126 = scmp.eq.s32.totalorder %s33, 0
    %p127 = por %p125, %p126
    %p128 = scmp.ne.s32.totalorder %s116, %s117
    %p129 = scmp.eq.s32.totalorder %s34, 1
    %p130 = por %p128, %p129
    %p132 = scmp.ne.s32.totalorder %s117, %s131
    %p133 = scmp.eq.s32.totalorder %s34, 0
    %p134 = por %p132, %p133
    %s136 = sadd.s32 %s135, 1
    %p139 = scmp.eq.s32.totalorder %s28, 1
    %p140 = scmp.ne.s32.totalorder %s135, %s137
    %p141 = scmp.eq.s32.totalorder %s28, 0
    %p142 = por %p140, %p141
    %p143 = scmp.ne.s32.totalorder %s135, %s137
    %p144 = scmp.eq.s32.totalorder %s33, 1
    %p145 = por %p143, %p144
    %p146 = scmp.ne.s32.totalorder %s137, %s138
    %p147 = scmp.eq.s32.totalorder %s33, 0
    %p148 = por %p146, %p147
    %p149 = scmp.ne.s32.totalorder %s137, %s138
    %p150 = scmp.eq.s32.totalorder %s34, 1
    %p151 = por %p149, %p150
    %p153 = scmp.ne.s32.totalorder %s138, %s152
    %p154 = scmp.eq.s32.totalorder %s34, 0
    %p155 = por %p153, %p154
    %s157 = sadd.s32 %s156, 1
    %p160 = scmp.eq.s32.totalorder %s28, 1
    %p161 = scmp.ne.s32.totalorder %s156, %s158
    %p162 = scmp.eq.s32.totalorder %s28, 0
    %p163 = por %p161, %p162
    %p164 = scmp.ne.s32.totalorder %s156, %s158
    %p165 = scmp.eq.s32.totalorder %s33, 1
    %p166 = por %p164, %p165
    %p167 = scmp.ne.s32.totalorder %s158, %s159
    %p168 = scmp.eq.s32.totalorder %s33, 0
    %p169 = por %p167, %p168
    %p170 = scmp.ne.s32.totalorder %s158, %s159
    %p171 = scmp.eq.s32.totalorder %s34, 1
    %p172 = por %p170, %p171
    %p174 = scmp.ne.s32.totalorder %s159, %s173
    %p175 = scmp.eq.s32.totalorder %s34, 0
    %p176 = por %p174, %p175
    %s178 = sadd.s32 %s177, 1
    %p181 = scmp.eq.s32.totalorder %s28, 1
    %p182 = scmp.ne.s32.totalorder %s177, %s179
    %p183 = scmp.eq.s32.totalorder %s28, 0
    %p184 = por %p182, %p183
    %p185 = scmp.ne.s32.totalorder %s177, %s179
    %p186 = scmp.eq.s32.totalorder %s33, 1
    %p187 = por %p185, %p186
    %p188 = scmp.ne.s32.totalorder %s179, %s180
    %p189 = scmp.eq.s32.totalorder %s33, 0
    %p190 = por %p188, %p189
    %p191 = scmp.ne.s32.totalorder %s179, %s180
    %p192 = scmp.eq.s32.totalorder %s34, 1
    %p193 = por %p191, %p192
    %p195 = scmp.ne.s32.totalorder %s180, %s194
    %p196 = scmp.eq.s32.totalorder %s34, 0
    %p197 = por %p195, %p196
    %s199 = sadd.s32 %s198, 1
    %p202 = scmp.eq.s32.totalorder %s28, 1
    %p203 = scmp.ne.s32.totalorder %s198, %s200
    %p204 = scmp.eq.s32.totalorder %s28, 0
    %p205 = por %p203, %p204
    %p206 = scmp.ne.s32.totalorder %s198, %s200
    %p207 = scmp.eq.s32.totalorder %s33, 1
    %p208 = por %p206, %p207
    %p209 = scmp.ne.s32.totalorder %s200, %s201
    %p210 = scmp.eq.s32.totalorder %s33, 0
    %p211 = por %p209, %p210
    %p212 = scmp.ne.s32.totalorder %s200, %s201
    %p213 = scmp.eq.s32.totalorder %s34, 1
    %p214 = por %p212, %p213
    %p216 = scmp.ne.s32.totalorder %s201, %s215
    %p217 = scmp.eq.s32.totalorder %s34, 0
    %p218 = por %p216, %p217
    %s220 = sadd.s32 %s219, 1
    %p223 = scmp.eq.s32.totalorder %s28, 1
    %p224 = scmp.ne.s32.totalorder %s219, %s221
    %p225 = scmp.eq.s32.totalorder %s28, 0
    %p226 = por %p224, %p225
    %p227 = scmp.ne.s32.totalorder %s219, %s221
    %p228 = scmp.eq.s32.totalorder %s33, 1
    %p229 = por %p227, %p228
    %p230 = scmp.ne.s32.totalorder %s221, %s222
    %p231 = scmp.eq.s32.totalorder %s33, 0
    %p232 = por %p230, %p231
    %p233 = scmp.ne.s32.totalorder %s221, %s222
    %p234 = scmp.eq.s32.totalorder %s34, 1
    %p235 = por %p233, %p234
    %p237 = scmp.ne.s32.totalorder %s222, %s236
    %p238 = scmp.eq.s32.totalorder %s34, 0
    %p239 = por %p237, %p238
    %s241 = sadd.s32 %s240, 1
    %p244 = scmp.eq.s32.totalorder %s28, 1
    %p245 = scmp.ne.s32.totalorder %s240, %s242
    %p246 = scmp.eq.s32.totalorder %s28, 0
    %p247 = por %p245, %p246
    %p248 = scmp.ne.s32.totalorder %s240, %s242
    %p249 = scmp.eq.s32.totalorder %s33, 1
    %p250 = por %p248, %p249
    %p251 = scmp.ne.s32.totalorder %s242, %s243
    %p252 = scmp.eq.s32.totalorder %s33, 0
    %p253 = por %p251, %p252
    %p254 = scmp.ne.s32.totalorder %s242, %s243
    %p255 = scmp.eq.s32.totalorder %s34, 1
    %p256 = por %p254, %p255
    %p258 = scmp.ne.s32.totalorder %s243, %s257
    %p259 = scmp.eq.s32.totalorder %s34, 0
    %p260 = por %p258, %p259
    %s262 = sadd.s32 %s261, 1
    %p265 = scmp.eq.s32.totalorder %s28, 1
    %p266 = scmp.ne.s32.totalorder %s261, %s263
    %p267 = scmp.eq.s32.totalorder %s28, 0
    %p268 = por %p266, %p267
    %p269 = scmp.ne.s32.totalorder %s261, %s263
    %p270 = scmp.eq.s32.totalorder %s33, 1
    %p271 = por %p269, %p270
    %p272 = scmp.ne.s32.totalorder %s263, %s264
    %p273 = scmp.eq.s32.totalorder %s33, 0
    %p274 = por %p272, %p273
    %p275 = scmp.ne.s32.totalorder %s263, %s264
    %p276 = scmp.eq.s32.totalorder %s34, 1
    %p277 = por %p275, %p276
    %p279 = scmp.ne.s32.totalorder %s264, %s278
    %p280 = scmp.eq.s32.totalorder %s34, 0
    %p281 = por %p279, %p280
    %s283 = sadd.s32 %s282, 1
    %p286 = scmp.eq.s32.totalorder %s28, 1
    %p287 = scmp.ne.s32.totalorder %s282, %s284
    %p288 = scmp.eq.s32.totalorder %s28, 0
    %p289 = por %p287, %p288
    %p290 = scmp.ne.s32.totalorder %s282, %s284
    %p291 = scmp.eq.s32.totalorder %s33, 1
    %p292 = por %p290, %p291
    %p293 = scmp.ne.s32.totalorder %s284, %s285
    %p294 = scmp.eq.s32.totalorder %s33, 0
    %p295 = por %p293, %p294
    %p296 = scmp.ne.s32.totalorder %s284, %s285
    %p297 = scmp.eq.s32.totalorder %s34, 1
    %p298 = por %p296, %p297
    %p300 = scmp.ne.s32.totalorder %s285, %s299
    %p301 = scmp.eq.s32.totalorder %s34, 0
    %p302 = por %p300, %p301
    %s304 = sadd.s32 %s303, 1
    %p307 = scmp.eq.s32.totalorder %s28, 1
    %p308 = scmp.ne.s32.totalorder %s303, %s305
    %p309 = scmp.eq.s32.totalorder %s28, 0
    %p310 = por %p308, %p309
    %p311 = scmp.ne.s32.totalorder %s303, %s305
    %p312 = scmp.eq.s32.totalorder %s33, 1
    %p313 = por %p311, %p312
    %p314 = scmp.ne.s32.totalorder %s305, %s306
    %p315 = scmp.eq.s32.totalorder %s33, 0
    %p316 = por %p314, %p315
    %p317 = scmp.ne.s32.totalorder %s305, %s306
    %p318 = scmp.eq.s32.totalorder %s34, 1
    %p319 = por %p317, %p318
    %p321 = scmp.ne.s32.totalorder %s306, %s320
    %p322 = scmp.eq.s32.totalorder %s34, 0
    %p323 = por %p321, %p322
    %s325 = sadd.s32 %s324, 1
    %p328 = scmp.eq.s32.totalorder %s28, 1
    %p329 = scmp.ne.s32.totalorder %s324, %s326
    %p330 = scmp.eq.s32.totalorder %s28, 0
    %p331 = por %p329, %p330
    %p332 = scmp.ne.s32.totalorder %s324, %s326
    %p333 = scmp.eq.s32.totalorder %s33, 1
    %p334 = por %p332, %p333
    %p335 = scmp.ne.s32.totalorder %s326, %s327
    %p336 = scmp.eq.s32.totalorder %s33, 0
    %p337 = por %p335, %p336
    %p338 = scmp.ne.s32.totalorder %s326, %s327
    %p339 = scmp.eq.s32.totalorder %s34, 1
    %p340 = por %p338, %p339
    %p342 = scmp.ne.s32.totalorder %s327, %s341
    %p343 = scmp.eq.s32.totalorder %s34, 0
    %p344 = por %p342, %p343
    %s346 = sadd.s32 %s345, 1
    %p349 = scmp.eq.s32.totalorder %s28, 1
    %p350 = scmp.ne.s32.totalorder %s345, %s347
    %p351 = scmp.eq.s32.totalorder %s28, 0
    %p352 = por %p350, %p351
    %p353 = scmp.ne.s32.totalorder %s345, %s347
    %p354 = scmp.eq.s32.totalorder %s33, 1
    %p355 = por %p353, %p354
    %p356 = scmp.ne.s32.totalorder %s347, %s348
    %p357 = scmp.eq.s32.totalorder %s33, 0
    %p358 = por %p356, %p357
    %p359 = scmp.ne.s32.totalorder %s347, %s348
    %p360 = scmp.eq.s32.totalorder %s34, 1
    %p361 = por %p359, %p360
    %p363 = scmp.ne.s32.totalorder %s348, %s362
    %p364 = scmp.eq.s32.totalorder %s34, 0
    %p365 = por %p363, %p364
    %s367 = sadd.s32 %s366, 1
    %p370 = scmp.eq.s32.totalorder %s28, 1
    %p371 = scmp.ne.s32.totalorder %s366, %s368
    %p372 = scmp.eq.s32.totalorder %s28, 0
    %p373 = por %p371, %p372
    %p374 = scmp.ne.s32.totalorder %s366, %s368
    %p375 = scmp.eq.s32.totalorder %s33, 1
    %p376 = por %p374, %p375
    %p377 = scmp.ne.s32.totalorder %s368, %s369
    %p378 = scmp.eq.s32.totalorder %s33, 0
    %p379 = por %p377, %p378
    %p380 = scmp.ne.s32.totalorder %s368, %s369
    %p381 = scmp.eq.s32.totalorder %s34, 1
    %p382 = por %p380, %p381
    %p384 = scmp.ne.s32.totalorder %s369, %s383
    %p385 = scmp.eq.s32.totalorder %s34, 0
    %p386 = por %p384, %p385
    %s388 = sadd.s32 %s387, 1
    %p391 = scmp.eq.s32.totalorder %s28, 1
    %p392 = scmp.ne.s32.totalorder %s387, %s389
    %p393 = scmp.eq.s32.totalorder %s28, 0
    %p394 = por %p392, %p393
    %p395 = scmp.ne.s32.totalorder %s387, %s389
    %p396 = scmp.eq.s32.totalorder %s33, 1
    %p397 = por %p395, %p396
    %p398 = scmp.ne.s32.totalorder %s389, %s390
    %p399 = scmp.eq.s32.totalorder %s33, 0
    %p400 = por %p398, %p399
    %p401 = scmp.ne.s32.totalorder %s389, %s390
    %p402 = scmp.eq.s32.totalorder %s34, 1
    %p403 = por %p401, %p402
    %p405 = scmp.ne.s32.totalorder %s390, %s404
    %p406 = scmp.eq.s32.totalorder %s34, 0
    %p407 = por %p405, %p406
    %s409 = sadd.s32 %s408, 1
    %p412 = scmp.eq.s32.totalorder %s28, 1
    %p413 = scmp.ne.s32.totalorder %s408, %s410
    %p414 = scmp.eq.s32.totalorder %s28, 0
    %p415 = por %p413, %p414
    %p416 = scmp.ne.s32.totalorder %s408, %s410
    %p417 = scmp.eq.s32.totalorder %s33, 1
    %p418 = por %p416, %p417
    %p419 = scmp.ne.s32.totalorder %s410, %s411
    %p420 = scmp.eq.s32.totalorder %s33, 0
    %p421 = por %p419, %p420
    %p422 = scmp.ne.s32.totalorder %s410, %s411
    %p423 = scmp.eq.s32.totalorder %s34, 1
    %p424 = por %p422, %p423
    %p426 = scmp.ne.s32.totalorder %s411, %s425
    %p427 = scmp.eq.s32.totalorder %s34, 0
    %p428 = por %p426, %p427
    %s430 = sadd.s32 %s429, 1
    %p433 = scmp.eq.s32.totalorder %s28, 1
    %p434 = scmp.ne.s32.totalorder %s429, %s431
    %p435 = scmp.eq.s32.totalorder %s28, 0
    %p436 = por %p434, %p435
    %p437 = scmp.ne.s32.totalorder %s429, %s431
    %p438 = scmp.eq.s32.totalorder %s33, 1
    %p439 = por %p437, %p438
    %p440 = scmp.ne.s32.totalorder %s431, %s432
    %p441 = scmp.eq.s32.totalorder %s33, 0
    %p442 = por %p440, %p441
    %p443 = scmp.ne.s32.totalorder %s431, %s432
    %p444 = scmp.eq.s32.totalorder %s34, 1
    %p445 = por %p443, %p444
    %p447 = scmp.ne.s32.totalorder %s432, %s446
    %p448 = scmp.eq.s32.totalorder %s34, 0
    %p449 = por %p447, %p448
    %s451 = sadd.s32 %s450, 1
    %p454 = scmp.eq.s32.totalorder %s28, 1
    %p455 = scmp.ne.s32.totalorder %s450, %s452
    %p456 = scmp.eq.s32.totalorder %s28, 0
    %p457 = por %p455, %p456
    %p458 = scmp.ne.s32.totalorder %s450, %s452
    %p459 = scmp.eq.s32.totalorder %s33, 1
    %p460 = por %p458, %p459
    %p461 = scmp.ne.s32.totalorder %s452, %s453
    %p462 = scmp.eq.s32.totalorder %s33, 0
    %p463 = por %p461, %p462
    %p464 = scmp.ne.s32.totalorder %s452, %s453
    %p465 = scmp.eq.s32.totalorder %s34, 1
    %p466 = por %p464, %p465
    %p468 = scmp.ne.s32.totalorder %s453, %s467
    %p469 = scmp.eq.s32.totalorder %s34, 0
    %p470 = por %p468, %p469
    %s471 = ssub.s32 %s28, %s35
    %p472 = scmp.eq.s32.totalorder %s471, 0
    %s474 = sadd.s32 %s473, 1
    %s475 = scalar_select %p472, %s473, %s474
    %p478 = pneg %p472
    %p479 = scmp.eq.s32.totalorder %s28, 1
    %p480 = por %p478, %p479
    %p481 = scmp.ne.s32.totalorder %s473, %s476
    %p482 = scmp.eq.s32.totalorder %s28, 0
    %p483 = por %p481, %p482
    %p484 = scmp.ne.s32.totalorder %s473, %s476
    %p485 = scmp.eq.s32.totalorder %s33, 1
    %p486 = por %p484, %p485
    %p487 = scmp.ne.s32.totalorder %s476, %s477
    %p488 = scmp.eq.s32.totalorder %s33, 0
    %p489 = por %p487, %p488
    %p490 = scmp.ne.s32.totalorder %s476, %s477
    %p491 = scmp.eq.s32.totalorder %s34, 1
    %p492 = por %p490, %p491
    %p494 = scmp.ne.s32.totalorder %s477, %s493
    %p495 = scmp.eq.s32.totalorder %s34, 0
    %p496 = por %p494, %p495
    %s497 = ssub.s32 %s28, %s35
    %p498 = scmp.eq.s32.totalorder %s497, 0
    %s500 = sadd.s32 %s499, 1
    %s501 = scalar_select %p498, %s499, %s500
    %p504 = pneg %p498
    %p505 = scmp.eq.s32.totalorder %s28, 1
    %p506 = por %p504, %p505
    %p507 = scmp.ne.s32.totalorder %s499, %s502
    %p508 = scmp.eq.s32.totalorder %s28, 0
    %p509 = por %p507, %p508
    %p510 = scmp.ne.s32.totalorder %s499, %s502
    %p511 = scmp.eq.s32.totalorder %s33, 1
    %p512 = por %p510, %p511
    %p513 = scmp.ne.s32.totalorder %s502, %s503
    %p514 = scmp.eq.s32.totalorder %s33, 0
    %p515 = por %p513, %p514
    %p516 = scmp.ne.s32.totalorder %s502, %s503
    %p517 = scmp.eq.s32.totalorder %s34, 1
    %p518 = por %p516, %p517
    %p520 = scmp.ne.s32.totalorder %s503, %s519
    %p521 = scmp.eq.s32.totalorder %s34, 0
    %p522 = por %p520, %p521
    %p523 = scmp.le.s32.totalorder 1, %s28
    %p524 = scmp.lt.s32.totalorder %s28, 3
    %p525 = pnand %p523, %p524
    %p526 = pneg %p525
    // Predicated region
    $region9: #{bottleneck_plugged_forward.1} parent=5 // pred_check
      _
    $region10: #{bottleneck_plugged_forward.1} parent=5 // pred_check_branch
      %528 = sbr.rel (%p525) target = $region12
    $region11: #{bottleneck_plugged_forward.1} parent=5 // pred_region
      %s529 = ssub.s32 %s28, 1
      // Predicated region
      $region13: #{bottleneck_plugged_forward.1} parent=11 // pred_check
        %p530 = pneg %p127
      $region14: #{bottleneck_plugged_forward.1} parent=11 // pred_check_branch
        %532 = sbr.rel (%p530) target = $region16
      $region15: #{bottleneck_plugged_forward.1} parent=11 // pred_region
        _
      $region16: #{bottleneck_plugged_forward.1} parent=11 // pred_fallthru
        _
      // Predicated region
      $region17: #{bottleneck_plugged_forward.1} parent=11 // pred_check
        %p533 = pneg %p148
      $region18: #{bottleneck_plugged_forward.1} parent=11 // pred_check_branch
        %535 = sbr.rel (%p533) target = $region20
      $region19: #{bottleneck_plugged_forward.1} parent=11 // pred_region
        _
      $region20: #{bottleneck_plugged_forward.1} parent=11 // pred_fallthru
        _
      // Predicated region
      $region21: #{bottleneck_plugged_forward.1} parent=11 // pred_check
        %p536 = pneg %p169
      $region22: #{bottleneck_plugged_forward.1} parent=11 // pred_check_branch
        %538 = sbr.rel (%p536) target = $region24
      $region23: #{bottleneck_plugged_forward.1} parent=11 // pred_region
        _
      $region24: #{bottleneck_plugged_forward.1} parent=11 // pred_fallthru
        _
      // Predicated region
      $region25: #{bottleneck_plugged_forward.1} parent=11 // pred_check
        %p539 = pneg %p190
      $region26: #{bottleneck_plugged_forward.1} parent=11 // pred_check_branch
        %541 = sbr.rel (%p539) target = $region28
      $region27: #{bottleneck_plugged_forward.1} parent=11 // pred_region
        _
      $region28: #{bottleneck_plugged_forward.1} parent=11 // pred_fallthru
        _
      // Predicated region
      $region29: #{bottleneck_plugged_forward.1} parent=11 // pred_check
        %p542 = pneg %p211
      $region30: #{bottleneck_plugged_forward.1} parent=11 // pred_check_branch
        %544 = sbr.rel (%p542) target = $region32
      $region31: #{bottleneck_plugged_forward.1} parent=11 // pred_region
        _
      $region32: #{bottleneck_plugged_forward.1} parent=11 // pred_fallthru
        _
      // Predicated region
      $region33: #{bottleneck_plugged_forward.1} parent=11 // pred_check
        %p545 = pneg %p232
      $region34: #{bottleneck_plugged_forward.1} parent=11 // pred_check_branch
        %547 = sbr.rel (%p545) target = $region36
      $region35: #{bottleneck_plugged_forward.1} parent=11 // pred_region
        _
      $region36: #{bottleneck_plugged_forward.1} parent=11 // pred_fallthru
        _
      // Predicated region
      $region37: #{bottleneck_plugged_forward.1} parent=11 // pred_check
        %p548 = pneg %p253
      $region38: #{bottleneck_plugged_forward.1} parent=11 // pred_check_branch
        %550 = sbr.rel (%p548) target = $region40
      $region39: #{bottleneck_plugged_forward.1} parent=11 // pred_region
        _
      $region40: #{bottleneck_plugged_forward.1} parent=11 // pred_fallthru
        _
      // Predicated region
      $region41: #{bottleneck_plugged_forward.1} parent=11 // pred_check
        %p551 = pneg %p274
      $region42: #{bottleneck_plugged_forward.1} parent=11 // pred_check_branch
        %553 = sbr.rel (%p551) target = $region44
      $region43: #{bottleneck_plugged_forward.1} parent=11 // pred_region
        _
      $region44: #{bottleneck_plugged_forward.1} parent=11 // pred_fallthru
        _
      // Predicated region
      $region45: #{bottleneck_plugged_forward.1} parent=11 // pred_check
        %p554 = pneg %p295
      $region46: #{bottleneck_plugged_forward.1} parent=11 // pred_check_branch
        %556 = sbr.rel (%p554) target = $region48
      $region47: #{bottleneck_plugged_forward.1} parent=11 // pred_region
        _
      $region48: #{bottleneck_plugged_forward.1} parent=11 // pred_fallthru
        _
      // Predicated region
      $region49: #{bottleneck_plugged_forward.1} parent=11 // pred_check
        %p557 = pneg %p316
      $region50: #{bottleneck_plugged_forward.1} parent=11 // pred_check_branch
        %559 = sbr.rel (%p557) target = $region52
      $region51: #{bottleneck_plugged_forward.1} parent=11 // pred_region
        _
      $region52: #{bottleneck_plugged_forward.1} parent=11 // pred_fallthru
        _
      // Predicated region
      $region53: #{bottleneck_plugged_forward.1} parent=11 // pred_check
        %p560 = pneg %p337
      $region54: #{bottleneck_plugged_forward.1} parent=11 // pred_check_branch
        %562 = sbr.rel (%p560) target = $region56
      $region55: #{bottleneck_plugged_forward.1} parent=11 // pred_region
        _
      $region56: #{bottleneck_plugged_forward.1} parent=11 // pred_fallthru
        _
      // Predicated region
      $region57: #{bottleneck_plugged_forward.1} parent=11 // pred_check
        %p563 = pneg %p358
      $region58: #{bottleneck_plugged_forward.1} parent=11 // pred_check_branch
        %565 = sbr.rel (%p563) target = $region60
      $region59: #{bottleneck_plugged_forward.1} parent=11 // pred_region
        _
      $region60: #{bottleneck_plugged_forward.1} parent=11 // pred_fallthru
        _
      // Predicated region
      $region61: #{bottleneck_plugged_forward.1} parent=11 // pred_check
        %p566 = pneg %p379
      $region62: #{bottleneck_plugged_forward.1} parent=11 // pred_check_branch
        %568 = sbr.rel (%p566) target = $region64
      $region63: #{bottleneck_plugged_forward.1} parent=11 // pred_region
        _
      $region64: #{bottleneck_plugged_forward.1} parent=11 // pred_fallthru
        _
      // Predicated region
      $region65: #{bottleneck_plugged_forward.1} parent=11 // pred_check
        %p569 = pneg %p400
      $region66: #{bottleneck_plugged_forward.1} parent=11 // pred_check_branch
        %571 = sbr.rel (%p569) target = $region68
      $region67: #{bottleneck_plugged_forward.1} parent=11 // pred_region
        _
      $region68: #{bottleneck_plugged_forward.1} parent=11 // pred_fallthru
        _
      // Predicated region
      $region69: #{bottleneck_plugged_forward.1} parent=11 // pred_check
        %p572 = pneg %p421
      $region70: #{bottleneck_plugged_forward.1} parent=11 // pred_check_branch
        %574 = sbr.rel (%p572) target = $region72
      $region71: #{bottleneck_plugged_forward.1} parent=11 // pred_region
        _
      $region72: #{bottleneck_plugged_forward.1} parent=11 // pred_fallthru
        _
      // Predicated region
      $region73: #{bottleneck_plugged_forward.1} parent=11 // pred_check
        %p575 = pneg %p442
      $region74: #{bottleneck_plugged_forward.1} parent=11 // pred_check_branch
        %577 = sbr.rel (%p575) target = $region76
      $region75: #{bottleneck_plugged_forward.1} parent=11 // pred_region
        _
      $region76: #{bottleneck_plugged_forward.1} parent=11 // pred_fallthru
        _
      // Predicated region
      $region77: #{bottleneck_plugged_forward.1} parent=11 // pred_check
        %p578 = pneg %p463
      $region78: #{bottleneck_plugged_forward.1} parent=11 // pred_check_branch
        %580 = sbr.rel (%p578) target = $region80
      $region79: #{bottleneck_plugged_forward.1} parent=11 // pred_region
        _
      $region80: #{bottleneck_plugged_forward.1} parent=11 // pred_fallthru
        _
    $region12: #{bottleneck_plugged_forward.1} parent=5 // pred_fallthru
      _
    %p581 = scmp.lt.s32.totalorder %s28, 2
    // Predicated region
    $region81: #{bottleneck_plugged_forward.1} parent=5 // pred_check
      %p582 = pneg %p581
    $region82: #{bottleneck_plugged_forward.1} parent=5 // pred_check_branch
      %584 = sbr.rel (%p582) target = $region84
    $region83: #{bottleneck_plugged_forward.1} parent=5 // pred_region
      // Predicated region
      $region85: #{bottleneck_plugged_forward.1} parent=83 // pred_check
        %p585 = pneg %p48
      $region86: #{bottleneck_plugged_forward.1} parent=83 // pred_check_branch
        %587 = sbr.rel (%p585) target = $region88
      $region87: #{bottleneck_plugged_forward.1} parent=83 // pred_region
        %p588 = scmp.lt.s32.totalorder %s28, 1
        %s589 = scalar_select %p588, %s28, 1
        %s590 = smul.addr %s589, 4
        %s591 = scalar_lea.vmem %s0, %s590
      $region88: #{bottleneck_plugged_forward.1} parent=83 // pred_fallthru
        _
      // Predicated region
      $region89: #{bottleneck_plugged_forward.1} parent=83 // pred_check
        %p592 = pneg %p74
      $region90: #{bottleneck_plugged_forward.1} parent=83 // pred_check_branch
        %594 = sbr.rel (%p592) target = $region92
      $region91: #{bottleneck_plugged_forward.1} parent=83 // pred_region
        %p595 = scmp.lt.s32.totalorder %s28, 1
        %s596 = scalar_select %p595, %s28, 1
        %s597 = smul.addr %s596, 4
        %s598 = scalar_lea.vmem %s1, %s597
      $region92: #{bottleneck_plugged_forward.1} parent=83 // pred_fallthru
        _
      // Predicated region
      $region93: #{bottleneck_plugged_forward.1} parent=83 // pred_check
        %p599 = pneg %p100
      $region94: #{bottleneck_plugged_forward.1} parent=83 // pred_check_branch
        %601 = sbr.rel (%p599) target = $region96
      $region95: #{bottleneck_plugged_forward.1} parent=83 // pred_region
        %p602 = scmp.lt.s32.totalorder %s28, 1
        %s603 = scalar_select %p602, %s28, 1
        %s604 = smul.addr %s603, 4
        %s605 = smul.addr %s604, 4
        %s606 = scalar_lea.vmem %s2, %s605
      $region96: #{bottleneck_plugged_forward.1} parent=83 // pred_fallthru
        _
    $region84: #{bottleneck_plugged_forward.1} parent=5 // pred_fallthru
      _
    %p607 = scmp.le.s32.totalorder 1, %s28
    %p608 = scmp.lt.s32.totalorder %s28, 3
    %p609 = pnand %p607, %p608
    %p610 = pneg %p609
    // Predicated region
    $region97: #{bottleneck_plugged_forward.1} parent=5 // pred_check
      _
    $region98: #{bottleneck_plugged_forward.1} parent=5 // pred_check_branch
      %612 = sbr.rel (%p609) target = $region100
    $region99: #{bottleneck_plugged_forward.1} parent=5 // pred_region
      %s613 = ssub.s32 %s28, 1
      %p614 = scmp.lt.s32.totalorder %s33, 1
      %s615 = scalar_select %p614, %s33, 1
      %s616 = smul.addr %s615, 4
      %s617 = scalar_lea.vmem %s0, %s616
      %p618 = pneg %p54
      %p619 = pneg %p51
      %p620 = scmp.lt.s32.totalorder %s33, 1
      %s621 = scalar_select %p620, %s33, 1
      %s622 = smul.addr %s621, 4
      %s623 = scalar_lea.vmem %s1, %s622
      %p624 = pneg %p80
      %p625 = pneg %p77
      %p626 = scmp.lt.s32.totalorder %s33, 1
      %s627 = scalar_select %p626, %s33, 1
      %s628 = smul.addr %s627, 4
      %s629 = smul.addr %s628, 4
      %s630 = scalar_lea.vmem %s2, %s629
      %p631 = pneg %p106
      %p632 = pneg %p103
      %p633 = pneg %p127
      %p634 = pneg %p124
      %p635 = pneg %p148
      %p636 = pneg %p145
      %p637 = pneg %p169
      %p638 = pneg %p166
      %p639 = pneg %p190
      %p640 = pneg %p187
      %p641 = pneg %p211
      %p642 = pneg %p208
      %p643 = pneg %p232
      %p644 = pneg %p229
      %p645 = pneg %p253
      %p646 = pneg %p250
      %p647 = pneg %p274
      %p648 = pneg %p271
      %p649 = pneg %p295
      %p650 = pneg %p292
      %p651 = pneg %p316
      %p652 = pneg %p313
      %p653 = pneg %p337
      %p654 = pneg %p334
      %p655 = pneg %p358
      %p656 = pneg %p355
      %p657 = pneg %p379
      %p658 = pneg %p376
      %p659 = pneg %p400
      %p660 = pneg %p397
      %p661 = pneg %p421
      %p662 = pneg %p418
      %p663 = pneg %p442
      %p664 = pneg %p439
      %p665 = pneg %p463
      %p666 = pneg %p460
      %p667 = pneg %p489
      %p668 = pneg %p486
      %p669 = scmp.lt.s32.totalorder %s33, 1
      %s670 = scalar_select %p669, %s33, 1
      %s671 = smul.addr %s670, 4
      %s672 = smul.addr %s671, 4
      %s673 = scalar_lea.vmem %s20, %s672
      %p674 = pneg %p515
      %p675 = pneg %p512
      %p676 = scmp.lt.s32.totalorder %s33, 1
      %s677 = scalar_select %p676, %s33, 1
      %s678 = smul.addr %s677, 4
      %s679 = smul.addr %s678, 4
      %s680 = scalar_lea.vmem %s21, %s679
      %p681 = scmp.lt.s32.totalorder %s33, 1
      %s682 = scalar_select %p681, %s33, 1
      %s683 = smul.addr %s682, 4
      %s684 = scalar_lea.vmem %s0, %s683
      %p685 = scmp.lt.s32.totalorder %s33, 1
      %s686 = scalar_select %p685, %s33, 1
      %s687 = smul.addr %s686, 4
      %s688 = scalar_lea.vmem %s1, %s687
      %p689 = scmp.lt.s32.totalorder %s33, 1
      %s690 = scalar_select %p689, %s33, 1
      %s691 = smul.addr %s690, 4
      %s692 = smul.addr %s691, 4
      %s693 = scalar_lea.vmem %s2, %s692
      %p694 = scmp.lt.s32.totalorder %s33, 1
      %s695 = scalar_select %p694, %s33, 1
      %s696 = smul.addr %s695, 4
      %s697 = smul.addr %s696, 4
      %s698 = scalar_lea.vmem %s20, %s697
      %p699 = scmp.lt.s32.totalorder %s33, 1
      %s700 = scalar_select %p699, %s33, 1
      %s701 = smul.addr %s700, 4
      %s702 = smul.addr %s701, 4
      %s703 = scalar_lea.vmem %s21, %s702
      %705 = vst [vmem:[#allocation2] sm:$0xff] 0
      %706 = vst [vmem:[#allocation2 + $0x8] sm:$0xff] 0
      %707 = vst [vmem:[#allocation2 + $0x10] sm:$0xff] 0
      %708 = vst [vmem:[#allocation2 + $0x18] sm:$0xff] 0
      %709 = vst [vmem:[#allocation2 + $0x20] sm:$0xff] 0
      %710 = vst [vmem:[#allocation2 + $0x28] sm:$0xff] 0
      %711 = vst [vmem:[#allocation2 + $0x30] sm:$0xff] 0
      %712 = vst [vmem:[#allocation2 + $0x38] sm:$0xff] 0
      %713 = vst [vmem:[#allocation2 + $0x40] sm:$0xff] 0
      %714 = vst [vmem:[#allocation2 + $0x48] sm:$0xff] 0
      %715 = vst [vmem:[#allocation2 + $0x50] sm:$0xff] 0
      %716 = vst [vmem:[#allocation2 + $0x58] sm:$0xff] 0
      %717 = vst [vmem:[#allocation2 + $0x60] sm:$0xff] 0
      %718 = vst [vmem:[#allocation2 + $0x68] sm:$0xff] 0
      %719 = vst [vmem:[#allocation2 + $0x70] sm:$0xff] 0
      %720 = vst [vmem:[#allocation2 + $0x78] sm:$0xff] 0
      %721 = vst [vmem:[#allocation2 + $0x80] sm:$0xff] 0
      %722 = vst [vmem:[#allocation2 + $0x88] sm:$0xff] 0
      %723 = vst [vmem:[#allocation2 + $0x90] sm:$0xff] 0
      %724 = vst [vmem:[#allocation2 + $0x98] sm:$0xff] 0
      %725 = vst [vmem:[#allocation2 + $0xa0] sm:$0xff] 0
      %726 = vst [vmem:[#allocation2 + $0xa8] sm:$0xff] 0
      %727 = vst [vmem:[#allocation2 + $0xb0] sm:$0xff] 0
      %728 = vst [vmem:[#allocation2 + $0xb8] sm:$0xff] 0
      %729 = vst [vmem:[#allocation2 + $0xc0] sm:$0xff] 0
      %730 = vst [vmem:[#allocation2 + $0xc8] sm:$0xff] 0
      %731 = vst [vmem:[#allocation2 + $0xd0] sm:$0xff] 0
      %732 = vst [vmem:[#allocation2 + $0xd8] sm:$0xff] 0
      %733 = vst [vmem:[#allocation2 + $0xe0] sm:$0xff] 0
      %734 = vst [vmem:[#allocation2 + $0xe8] sm:$0xff] 0
      %735 = vst [vmem:[#allocation2 + $0xf0] sm:$0xff] 0
      %736 = vst [vmem:[#allocation2 + $0xf8] sm:$0xff] 0
      %737 = vst [vmem:[#allocation2 + $0x100] sm:$0xff] 0
      %738 = vst [vmem:[#allocation2 + $0x108] sm:$0xff] 0
      %739 = vst [vmem:[#allocation2 + $0x110] sm:$0xff] 0
      %740 = vst [vmem:[#allocation2 + $0x118] sm:$0xff] 0
      %v741 = vld [vmem:[%s693] sm:$0xff]
      %v742 = vld [vmem:[%s693 + $0x8] sm:$0xff]
      %v743 = vld [vmem:[%s4] sm:$0xff]
      %v744 = vld [vmem:[%s4 + $0x8] sm:$0xff]
      %v745 = vld [vmem:[%s4 + $0x10] sm:$0xff]
      %v746 = vld [vmem:[%s4 + $0x18] sm:$0xff]
      %v747 = vld [vmem:[%s4 + $0x20] sm:$0xff]
      %v748 = vld [vmem:[%s4 + $0x28] sm:$0xff]
      %v749 = vld [vmem:[%s4 + $0x30] sm:$0xff]
      %v750 = vld [vmem:[%s4 + $0x38] sm:$0xff]
      %v751 = vld [vmem:[%s4 + $0x40] sm:$0xff]
      %v752 = vld [vmem:[%s4 + $0x48] sm:$0xff]
      %v753 = vld [vmem:[%s4 + $0x50] sm:$0xff]
      %v754 = vld [vmem:[%s4 + $0x58] sm:$0xff]
      %v755 = vld [vmem:[%s4 + $0x60] sm:$0xff]
      %v756 = vld [vmem:[%s4 + $0x68] sm:$0xff]
      %v757 = vld [vmem:[%s4 + $0x70] sm:$0xff]
      %v758 = vld [vmem:[%s4 + $0x78] sm:$0xff]
      %v759 = vld [vmem:[%s4 + $0x80] sm:$0xff]
      %v760 = vld [vmem:[%s4 + $0x88] sm:$0xff]
      %v761 = vld [vmem:[%s4 + $0x90] sm:$0xff]
      %v762 = vld [vmem:[%s4 + $0x98] sm:$0xff]
      %v763 = vld [vmem:[%s4 + $0xa0] sm:$0xff]
      %v764 = vld [vmem:[%s4 + $0xa8] sm:$0xff]
      %v765 = vld [vmem:[%s4 + $0xb0] sm:$0xff]
      %v766 = vld [vmem:[%s4 + $0xb8] sm:$0xff]
      %v767 = vld [vmem:[%s4 + $0xc0] sm:$0xff]
      %v768 = vld [vmem:[%s4 + $0xc8] sm:$0xff]
      %v769 = vld [vmem:[%s4 + $0xd0] sm:$0xff]
      %v770 = vld [vmem:[%s4 + $0xd8] sm:$0xff]
      %v771 = vld [vmem:[%s4 + $0xe0] sm:$0xff]
      %v772 = vld [vmem:[%s4 + $0xe8] sm:$0xff]
      %v773 = vld [vmem:[%s4 + $0xf0] sm:$0xff]
      %v774 = vld [vmem:[%s4 + $0xf8] sm:$0xff]
      %v775 = vld [vmem:[%s4 + $0x100] sm:$0xff]
      %v776 = vld [vmem:[%s4 + $0x108] sm:$0xff]
      %v777 = vld [vmem:[%s4 + $0x110] sm:$0xff]
      %v778 = vld [vmem:[%s4 + $0x118] sm:$0xff]
      %v779 = vld [vmem:[%s4 + $0x120] sm:$0xff]
      %v780 = vld [vmem:[%s4 + $0x128] sm:$0xff]
      %v781 = vld [vmem:[%s4 + $0x130] sm:$0xff]
      %v782 = vld [vmem:[%s4 + $0x138] sm:$0xff]
      %v783 = vld [vmem:[%s4 + $0x140] sm:$0xff]
      %v784 = vld [vmem:[%s4 + $0x148] sm:$0xff]
      %v785 = vld [vmem:[%s4 + $0x150] sm:$0xff]
      %v786 = vld [vmem:[%s4 + $0x158] sm:$0xff]
      %v787 = vld [vmem:[%s4 + $0x160] sm:$0xff]
      %v788 = vld [vmem:[%s4 + $0x168] sm:$0xff]
      %v789 = vld [vmem:[%s4 + $0x170] sm:$0xff]
      %v790 = vld [vmem:[%s4 + $0x178] sm:$0xff]
      %v791 = vld [vmem:[%s4 + $0x180] sm:$0xff]
      %v792 = vld [vmem:[%s4 + $0x188] sm:$0xff]
      %v793 = vld [vmem:[%s4 + $0x190] sm:$0xff]
      %v794 = vld [vmem:[%s4 + $0x198] sm:$0xff]
      %v795 = vld [vmem:[%s4 + $0x1a0] sm:$0xff]
      %v796 = vld [vmem:[%s4 + $0x1a8] sm:$0xff]
      %v797 = vld [vmem:[%s4 + $0x1b0] sm:$0xff]
      %v798 = vld [vmem:[%s4 + $0x1b8] sm:$0xff]
      %v799 = vld [vmem:[%s4 + $0x1c0] sm:$0xff]
      %v800 = vld [vmem:[%s4 + $0x1c8] sm:$0xff]
      %v801 = vld [vmem:[%s4 + $0x1d0] sm:$0xff]
      %v802 = vld [vmem:[%s4 + $0x1d8] sm:$0xff]
      %v803 = vld [vmem:[%s4 + $0x1e0] sm:$0xff]
      %v804 = vld [vmem:[%s4 + $0x1e8] sm:$0xff]
      %v805 = vld [vmem:[%s4 + $0x1f0] sm:$0xff]
      %v806 = vld [vmem:[%s4 + $0x1f8] sm:$0xff]
      %v809 = vcombine.high %v741, %v741
      %v810 = vcombine.high %v742, %v742
      %813 = vmatprep.subr.mxu0 0.0
      %814 = vmatpush1.msra.mxu0 %v743
      %815 = vmatprep.subr.mxu0 0.0
      %816 = vmatpush1.msra.mxu0 %v744
      %817 = vmatprep.subr.mxu0 0.0
      %818 = vmatpush1.msra.mxu0 %v745
      %819 = vmatprep.subr.mxu0 0.0
      %820 = vmatpush1.msra.mxu0 %v746
      %821 = vmatprep.subr.mxu0 0.0
      %822 = vmatpush1.msra.mxu0 %v747
      %823 = vmatprep.subr.mxu0 0.0
      %824 = vmatpush1.msra.mxu0 %v748
      %825 = vmatprep.subr.mxu0 0.0
      %826 = vmatpush1.msra.mxu0 %v749
      %827 = vmatprep.subr.mxu0 0.0
      %828 = vmatpush1.msra.mxu0 %v750
      %829 = vmatprep.subr.mxu0 0.0
      %830 = vmatpush1.msra.mxu0 %v751
      %831 = vmatprep.subr.mxu0 0.0
      %832 = vmatpush1.msra.mxu0 %v752
      %833 = vmatprep.subr.mxu0 0.0
      %834 = vmatpush1.msra.mxu0 %v753
      %835 = vmatprep.subr.mxu0 0.0
      %836 = vmatpush1.msra.mxu0 %v754
      %837 = vmatprep.subr.mxu0 0.0
      %838 = vmatpush1.msra.mxu0 %v755
      %839 = vmatprep.subr.mxu0 0.0
      %840 = vmatpush1.msra.mxu0 %v756
      %841 = vmatprep.subr.mxu0 0.0
      %842 = vmatpush1.msra.mxu0 %v757
      %843 = vmatprep.subr.mxu0 0.0
      %844 = vmatpush1.msra.mxu0 %v758
      %845 = vmatprep.subr.mxu0 0.0
      %846 = vmatpush1.msra.mxu0 %v759
      %847 = vmatprep.subr.mxu0 0.0
      %848 = vmatpush1.msra.mxu0 %v760
      %849 = vmatprep.subr.mxu0 0.0
      %850 = vmatpush1.msra.mxu0 %v761
      %851 = vmatprep.subr.mxu0 0.0
      %852 = vmatpush1.msra.mxu0 %v762
      %853 = vmatprep.subr.mxu0 0.0
      %854 = vmatpush1.msra.mxu0 %v763
      %855 = vmatprep.subr.mxu0 0.0
      %856 = vmatpush1.msra.mxu0 %v764
      %857 = vmatprep.subr.mxu0 0.0
      %858 = vmatpush1.msra.mxu0 %v765
      %859 = vmatprep.subr.mxu0 0.0
      %860 = vmatpush1.msra.mxu0 %v766
      %861 = vmatprep.subr.mxu0 0.0
      %862 = vmatpush1.msra.mxu0 %v767
      %863 = vmatprep.subr.mxu0 0.0
      %864 = vmatpush1.msra.mxu0 %v768
      %865 = vmatprep.subr.mxu0 0.0
      %866 = vmatpush1.msra.mxu0 %v769
      %867 = vmatprep.subr.mxu0 0.0
      %868 = vmatpush1.msra.mxu0 %v770
      %869 = vmatprep.subr.mxu0 0.0
      %870 = vmatpush1.msra.mxu0 %v771
      %871 = vmatprep.subr.mxu0 0.0
      %872 = vmatpush1.msra.mxu0 %v772
      %873 = vmatprep.subr.mxu0 0.0
      %874 = vmatpush1.msra.mxu0 %v773
      %875 = vmatprep.subr.mxu0 0.0
      %876 = vmatpush1.msra.mxu0 %v774
      %877 = vmatprep.mubr.f32.mxu0 %v809
      %878 = vmatmul.mubr.f32.gmra.mrb[0].mxu0 %v741
      %v879 = vpop.f32.mrb[0].mxu0
      %v880 = vadd.f32 0.0, %v879
      %v881 = vpop.f32.mrb[0].mxu0
      %882 = vdwg.mxu0
      %883 = vmatprep.subr.mxu0 0.0
      %884 = vmatpush1.msra.mxu0 %v775
      %885 = vmatprep.subr.mxu0 0.0
      %886 = vmatpush1.msra.mxu0 %v776
      %887 = vmatprep.subr.mxu0 0.0
      %888 = vmatpush1.msra.mxu0 %v777
      %889 = vmatprep.subr.mxu0 0.0
      %890 = vmatpush1.msra.mxu0 %v778
      %891 = vmatprep.subr.mxu0 0.0
      %892 = vmatpush1.msra.mxu0 %v779
      %893 = vmatprep.subr.mxu0 0.0
      %894 = vmatpush1.msra.mxu0 %v780
      %895 = vmatprep.subr.mxu0 0.0
      %896 = vmatpush1.msra.mxu0 %v781
      %897 = vmatprep.subr.mxu0 0.0
      %898 = vmatpush1.msra.mxu0 %v782
      %899 = vmatprep.subr.mxu0 0.0
      %900 = vmatpush1.msra.mxu0 %v783
      %901 = vmatprep.subr.mxu0 0.0
      %902 = vmatpush1.msra.mxu0 %v784
      %903 = vmatprep.subr.mxu0 0.0
      %904 = vmatpush1.msra.mxu0 %v785
      %905 = vmatprep.subr.mxu0 0.0
      %906 = vmatpush1.msra.mxu0 %v786
      %907 = vmatprep.subr.mxu0 0.0
      %908 = vmatpush1.msra.mxu0 %v787
      %909 = vmatprep.subr.mxu0 0.0
      %910 = vmatpush1.msra.mxu0 %v788
      %911 = vmatprep.subr.mxu0 0.0
      %912 = vmatpush1.msra.mxu0 %v789
      %913 = vmatprep.subr.mxu0 0.0
      %914 = vmatpush1.msra.mxu0 %v790
      %915 = vmatprep.subr.mxu0 0.0
      %916 = vmatpush1.msra.mxu0 %v791
      %917 = vmatprep.subr.mxu0 0.0
      %918 = vmatpush1.msra.mxu0 %v792
      %919 = vmatprep.subr.mxu0 0.0
      %920 = vmatpush1.msra.mxu0 %v793
      %921 = vmatprep.subr.mxu0 0.0
      %922 = vmatpush1.msra.mxu0 %v794
      %923 = vmatprep.subr.mxu0 0.0
      %924 = vmatpush1.msra.mxu0 %v795
      %925 = vmatprep.subr.mxu0 0.0
      %926 = vmatpush1.msra.mxu0 %v796
      %927 = vmatprep.subr.mxu0 0.0
      %928 = vmatpush1.msra.mxu0 %v797
      %929 = vmatprep.subr.mxu0 0.0
      %930 = vmatpush1.msra.mxu0 %v798
      %931 = vmatprep.subr.mxu0 0.0
      %932 = vmatpush1.msra.mxu0 %v799
      %933 = vmatprep.subr.mxu0 0.0
      %934 = vmatpush1.msra.mxu0 %v800
      %935 = vmatprep.subr.mxu0 0.0
      %936 = vmatpush1.msra.mxu0 %v801
      %937 = vmatprep.subr.mxu0 0.0
      %938 = vmatpush1.msra.mxu0 %v802
      %939 = vmatprep.subr.mxu0 0.0
      %940 = vmatpush1.msra.mxu0 %v803
      %941 = vmatprep.subr.mxu0 0.0
      %942 = vmatpush1.msra.mxu0 %v804
      %943 = vmatprep.subr.mxu0 0.0
      %944 = vmatpush1.msra.mxu0 %v805
      %945 = vmatprep.subr.mxu0 0.0
      %946 = vmatpush1.msra.mxu0 %v806
      %947 = vmatprep.mubr.f32.mxu0 %v810
      %948 = vmatmul.mubr.f32.gmra.mrb[0].mxu0 %v742
      %v949 = vpop.f32.mrb[0].mxu0
      %v950 = vadd.f32 %v880, %v949
      %v951 = vpop.f32.mrb[0].mxu0
      %952 = vdwg.mxu0
      %v953 = vld [vmem:[%s684] sm:$0xf]
      %v954 = vld [vmem:[%s6] sm:$0xf]
      %v955 = vld [vmem:[%s7] sm:$0xf]
      %v956 = vld [vmem:[%s8] sm:$0xf]
      %958 = vset.pattern.permute.xlu0 0
      %959 = vperm.xlu0 %958, %v954
      %v960 = vpop.permute.xlu0 %959
      %vm962 = vcmask 31744
      %v964 = vsel %vm962, %v956, 0
      %vm966 = vcmask 1043456
      %v968 = vsel %vm966, %v950, 0
      %970 = vmatprep.subr.mxu0 0.0
      %971 = vmatpush1.msra.mxu0 %v968
      %972 = vmatprep.subr.mxu0 0.0
      %973 = vmatpush1.msra.mxu0 0.0
      %974 = vmatprep.subr.mxu0 0.0
      %975 = vmatpush1.msra.mxu0 0.0
      %976 = vmatprep.subr.mxu0 0.0
      %977 = vmatpush1.msra.mxu0 0.0
      %978 = vmatprep.subr.mxu0 0.0
      %979 = vmatpush1.msra.mxu0 0.0
      %980 = vmatprep.subr.mxu0 0.0
      %981 = vmatpush1.msra.mxu0 0.0
      %982 = vmatprep.subr.mxu0 0.0
      %983 = vmatpush1.msra.mxu0 0.0
      %984 = vmatprep.subr.mxu0 0.0
      %985 = vmatpush1.msra.mxu0 0.0
      %986 = vmatprep.subr.mxu0 0.0
      %987 = vmatpush1.msra.mxu0 0.0
      %988 = vmatprep.subr.mxu0 0.0
      %989 = vmatpush1.msra.mxu0 0.0
      %990 = vmatprep.subr.mxu0 0.0
      %991 = vmatpush1.msra.mxu0 0.0
      %992 = vmatprep.subr.mxu0 0.0
      %993 = vmatpush1.msra.mxu0 0.0
      %994 = vmatprep.subr.mxu0 0.0
      %995 = vmatpush1.msra.mxu0 0.0
      %996 = vmatprep.subr.mxu0 0.0
      %997 = vmatpush1.msra.mxu0 0.0
      %998 = vmatprep.subr.mxu0 0.0
      %999 = vmatpush1.msra.mxu0 0.0
      %1000 = vmatprep.subr.mxu0 0.0
      %1001 = vmatpush1.msra.mxu0 0.0
      %1002 = vmatprep.subr.mxu0 0.0
      %1003 = vmatpush1.msra.mxu0 0.0
      %1004 = vmatprep.subr.mxu0 0.0
      %1005 = vmatpush1.msra.mxu0 0.0
      %1006 = vmatprep.subr.mxu0 0.0
      %1007 = vmatpush1.msra.mxu0 0.0
      %1008 = vmatprep.subr.mxu0 0.0
      %1009 = vmatpush1.msra.mxu0 0.0
      %1010 = vmatprep.subr.mxu0 0.0
      %1011 = vmatpush1.msra.mxu0 0.0
      %1012 = vmatprep.subr.mxu0 0.0
      %1013 = vmatpush1.msra.mxu0 0.0
      %1014 = vmatprep.subr.mxu0 0.0
      %1015 = vmatpush1.msra.mxu0 0.0
      %1016 = vmatprep.subr.mxu0 0.0
      %1017 = vmatpush1.msra.mxu0 0.0
      %1018 = vmatprep.subr.mxu0 0.0
      %1019 = vmatpush1.msra.mxu0 0.0
      %1020 = vmatprep.subr.mxu0 0.0
      %1021 = vmatpush1.msra.mxu0 0.0
      %1022 = vmatprep.subr.mxu0 0.0
      %1023 = vmatpush1.msra.mxu0 0.0
      %1024 = vmatprep.subr.mxu0 0.0
      %1025 = vmatpush1.msra.mxu0 0.0
      %1026 = vmatprep.subr.mxu0 0.0
      %1027 = vmatpush1.msra.mxu0 0.0
      %1028 = vmatprep.subr.mxu0 0.0
      %1029 = vmatpush1.msra.mxu0 0.0
      %1030 = vmatprep.subr.mxu0 0.0
      %1031 = vmatpush1.msra.mxu0 0.0
      %1032 = vmatprep.subr.mxu0 0.0
      %1033 = vmatpush1.msra.mxu0 0.0
      %1034 = vmatprep.mubr.f32.mxu0 0.0
      %1035 = vmatmul.mubr.f32.gmra.mrb[0].mxu0 %v964
      %v1036 = vpop.f32.mrb[0].mxu0
      %v1037 = vadd.f32 %v960, %v1036
      %v1038 = vpop.f32.mrb[0].mxu0
      %1039 = vdwg.mxu0
      %v1040 = vmul.f32 %v1037, 0.5
      %v1041 = vmul.f32 %v1037, 0.044715
      %v1042 = vmul.f32 %v1041, %v1037
      %v1043 = vmul.f32 %v1042, %v1037
      %v1044 = vadd.f32 %v1037, %v1043
      %v1045 = vmul.f32 %v1044, 0.7978846
      %v1046 = vtanh.pop %v1045
      %v1047 = vadd.f32 %v1046, 1.0
      %v1048 = vmul.f32 %v1040, %v1047
      %v1049 = vld [vmem:[%s9] sm:$0xf]
      %1051 = vset.pattern.permute.xlu0 0
      %1052 = vperm.xlu0 %1051, %v955
      %v1053 = vpop.permute.xlu0 %1052
      %v1056 = vsel %vm962, %v1049, 0
      %v1059 = vsel %vm966, %v1048, 0
      %1061 = vmatprep.subr.mxu0 0.0
      %1062 = vmatpush1.msra.mxu0 %v1059
      %1063 = vmatprep.subr.mxu0 0.0
      %1064 = vmatpush1.msra.mxu0 0.0
      %1065 = vmatprep.subr.mxu0 0.0
      %1066 = vmatpush1.msra.mxu0 0.0
      %1067 = vmatprep.subr.mxu0 0.0
      %1068 = vmatpush1.msra.mxu0 0.0
      %1069 = vmatprep.subr.mxu0 0.0
      %1070 = vmatpush1.msra.mxu0 0.0
      %1071 = vmatprep.subr.mxu0 0.0
      %1072 = vmatpush1.msra.mxu0 0.0
      %1073 = vmatprep.subr.mxu0 0.0
      %1074 = vmatpush1.msra.mxu0 0.0
      %1075 = vmatprep.subr.mxu0 0.0
      %1076 = vmatpush1.msra.mxu0 0.0
      %1077 = vmatprep.subr.mxu0 0.0
      %1078 = vmatpush1.msra.mxu0 0.0
      %1079 = vmatprep.subr.mxu0 0.0
      %1080 = vmatpush1.msra.mxu0 0.0
      %1081 = vmatprep.subr.mxu0 0.0
      %1082 = vmatpush1.msra.mxu0 0.0
      %1083 = vmatprep.subr.mxu0 0.0
      %1084 = vmatpush1.msra.mxu0 0.0
      %1085 = vmatprep.subr.mxu0 0.0
      %1086 = vmatpush1.msra.mxu0 0.0
      %1087 = vmatprep.subr.mxu0 0.0
      %1088 = vmatpush1.msra.mxu0 0.0
      %1089 = vmatprep.subr.mxu0 0.0
      %1090 = vmatpush1.msra.mxu0 0.0
      %1091 = vmatprep.subr.mxu0 0.0
      %1092 = vmatpush1.msra.mxu0 0.0
      %1093 = vmatprep.subr.mxu0 0.0
      %1094 = vmatpush1.msra.mxu0 0.0
      %1095 = vmatprep.subr.mxu0 0.0
      %1096 = vmatpush1.msra.mxu0 0.0
      %1097 = vmatprep.subr.mxu0 0.0
      %1098 = vmatpush1.msra.mxu0 0.0
      %1099 = vmatprep.subr.mxu0 0.0
      %1100 = vmatpush1.msra.mxu0 0.0
      %1101 = vmatprep.subr.mxu0 0.0
      %1102 = vmatpush1.msra.mxu0 0.0
      %1103 = vmatprep.subr.mxu0 0.0
      %1104 = vmatpush1.msra.mxu0 0.0
      %1105 = vmatprep.subr.mxu0 0.0
      %1106 = vmatpush1.msra.mxu0 0.0
      %1107 = vmatprep.subr.mxu0 0.0
      %1108 = vmatpush1.msra.mxu0 0.0
      %1109 = vmatprep.subr.mxu0 0.0
      %1110 = vmatpush1.msra.mxu0 0.0
      %1111 = vmatprep.subr.mxu0 0.0
      %1112 = vmatpush1.msra.mxu0 0.0
      %1113 = vmatprep.subr.mxu0 0.0
      %1114 = vmatpush1.msra.mxu0 0.0
      %1115 = vmatprep.subr.mxu0 0.0
      %1116 = vmatpush1.msra.mxu0 0.0
      %1117 = vmatprep.subr.mxu0 0.0
      %1118 = vmatpush1.msra.mxu0 0.0
      %1119 = vmatprep.subr.mxu0 0.0
      %1120 = vmatpush1.msra.mxu0 0.0
      %1121 = vmatprep.subr.mxu0 0.0
      %1122 = vmatpush1.msra.mxu0 0.0
      %1123 = vmatprep.subr.mxu0 0.0
      %1124 = vmatpush1.msra.mxu0 0.0
      %1125 = vmatprep.mubr.f32.mxu0 0.0
      %1126 = vmatmul.mubr.f32.gmra.mrb[0].mxu0 %v1056
      %v1127 = vpop.f32.mrb[0].mxu0
      %v1128 = vadd.f32 %v1053, %v1127
      %v1129 = vpop.f32.mrb[0].mxu0
      %1130 = vdwg.mxu0
      %v1131 = vld [vmem:[%s10] sm:$0xf]
      %1132 = vset.pattern.permute.xlu0 1
      %1133 = vperm.xlu0 %1132, %v955
      %v1134 = vpop.permute.xlu0 %1133
      %v1137 = vsel %vm962, %v1131, 0
      %1139 = vmatprep.subr.mxu0 0.0
      %1140 = vmatpush1.msra.mxu0 %v1059
      %1141 = vmatprep.subr.mxu0 0.0
      %1142 = vmatpush1.msra.mxu0 0.0
      %1143 = vmatprep.subr.mxu0 0.0
      %1144 = vmatpush1.msra.mxu0 0.0
      %1145 = vmatprep.subr.mxu0 0.0
      %1146 = vmatpush1.msra.mxu0 0.0
      %1147 = vmatprep.subr.mxu0 0.0
      %1148 = vmatpush1.msra.mxu0 0.0
      %1149 = vmatprep.subr.mxu0 0.0
      %1150 = vmatpush1.msra.mxu0 0.0
      %1151 = vmatprep.subr.mxu0 0.0
      %1152 = vmatpush1.msra.mxu0 0.0
      %1153 = vmatprep.subr.mxu0 0.0
      %1154 = vmatpush1.msra.mxu0 0.0
      %1155 = vmatprep.subr.mxu0 0.0
      %1156 = vmatpush1.msra.mxu0 0.0
      %1157 = vmatprep.subr.mxu0 0.0
      %1158 = vmatpush1.msra.mxu0 0.0
      %1159 = vmatprep.subr.mxu0 0.0
      %1160 = vmatpush1.msra.mxu0 0.0
      %1161 = vmatprep.subr.mxu0 0.0
      %1162 = vmatpush1.msra.mxu0 0.0
      %1163 = vmatprep.subr.mxu0 0.0
      %1164 = vmatpush1.msra.mxu0 0.0
      %1165 = vmatprep.subr.mxu0 0.0
      %1166 = vmatpush1.msra.mxu0 0.0
      %1167 = vmatprep.subr.mxu0 0.0
      %1168 = vmatpush1.msra.mxu0 0.0
      %1169 = vmatprep.subr.mxu0 0.0
      %1170 = vmatpush1.msra.mxu0 0.0
      %1171 = vmatprep.subr.mxu0 0.0
      %1172 = vmatpush1.msra.mxu0 0.0
      %1173 = vmatprep.subr.mxu0 0.0
      %1174 = vmatpush1.msra.mxu0 0.0
      %1175 = vmatprep.subr.mxu0 0.0
      %1176 = vmatpush1.msra.mxu0 0.0
      %1177 = vmatprep.subr.mxu0 0.0
      %1178 = vmatpush1.msra.mxu0 0.0
      %1179 = vmatprep.subr.mxu0 0.0
      %1180 = vmatpush1.msra.mxu0 0.0
      %1181 = vmatprep.subr.mxu0 0.0
      %1182 = vmatpush1.msra.mxu0 0.0
      %1183 = vmatprep.subr.mxu0 0.0
      %1184 = vmatpush1.msra.mxu0 0.0
      %1185 = vmatprep.subr.mxu0 0.0
      %1186 = vmatpush1.msra.mxu0 0.0
      %1187 = vmatprep.subr.mxu0 0.0
      %1188 = vmatpush1.msra.mxu0 0.0
      %1189 = vmatprep.subr.mxu0 0.0
      %1190 = vmatpush1.msra.mxu0 0.0
      %1191 = vmatprep.subr.mxu0 0.0
      %1192 = vmatpush1.msra.mxu0 0.0
      %1193 = vmatprep.subr.mxu0 0.0
      %1194 = vmatpush1.msra.mxu0 0.0
      %1195 = vmatprep.subr.mxu0 0.0
      %1196 = vmatpush1.msra.mxu0 0.0
      %1197 = vmatprep.subr.mxu0 0.0
      %1198 = vmatpush1.msra.mxu0 0.0
      %1199 = vmatprep.subr.mxu0 0.0
      %1200 = vmatpush1.msra.mxu0 0.0
      %1201 = vmatprep.subr.mxu0 0.0
      %1202 = vmatpush1.msra.mxu0 0.0
      %1203 = vmatprep.mubr.f32.mxu0 0.0
      %1204 = vmatmul.mubr.f32.gmra.mrb[0].mxu0 %v1137
      %v1205 = vpop.f32.mrb[0].mxu0
      %v1206 = vadd.f32 %v1134, %v1205
      %v1207 = vpop.f32.mrb[0].mxu0
      %1208 = vdwg.mxu0
      %v1209 = vld [vmem:[%s11] sm:$0xf]
      %1210 = vset.pattern.permute.xlu0 1
      %1211 = vperm.xlu0 %1210, %v954
      %v1212 = vpop.permute.xlu0 %1211
      %v1215 = vsel %vm962, %v1209, 0
      %v1218 = vsel %vm966, %v953, 0
      %1220 = vmatprep.subr.mxu0 0.0
      %1221 = vmatpush1.msra.mxu0 %v1218
      %1222 = vmatprep.subr.mxu0 0.0
      %1223 = vmatpush1.msra.mxu0 0.0
      %1224 = vmatprep.subr.mxu0 0.0
      %1225 = vmatpush1.msra.mxu0 0.0
      %1226 = vmatprep.subr.mxu0 0.0
      %1227 = vmatpush1.msra.mxu0 0.0
      %1228 = vmatprep.subr.mxu0 0.0
      %1229 = vmatpush1.msra.mxu0 0.0
      %1230 = vmatprep.subr.mxu0 0.0
      %1231 = vmatpush1.msra.mxu0 0.0
      %1232 = vmatprep.subr.mxu0 0.0
      %1233 = vmatpush1.msra.mxu0 0.0
      %1234 = vmatprep.subr.mxu0 0.0
      %1235 = vmatpush1.msra.mxu0 0.0
      %1236 = vmatprep.subr.mxu0 0.0
      %1237 = vmatpush1.msra.mxu0 0.0
      %1238 = vmatprep.subr.mxu0 0.0
      %1239 = vmatpush1.msra.mxu0 0.0
      %1240 = vmatprep.subr.mxu0 0.0
      %1241 = vmatpush1.msra.mxu0 0.0
      %1242 = vmatprep.subr.mxu0 0.0
      %1243 = vmatpush1.msra.mxu0 0.0
      %1244 = vmatprep.subr.mxu0 0.0
      %1245 = vmatpush1.msra.mxu0 0.0
      %1246 = vmatprep.subr.mxu0 0.0
      %1247 = vmatpush1.msra.mxu0 0.0
      %1248 = vmatprep.subr.mxu0 0.0
      %1249 = vmatpush1.msra.mxu0 0.0
      %1250 = vmatprep.subr.mxu0 0.0
      %1251 = vmatpush1.msra.mxu0 0.0
      %1252 = vmatprep.subr.mxu0 0.0
      %1253 = vmatpush1.msra.mxu0 0.0
      %1254 = vmatprep.subr.mxu0 0.0
      %1255 = vmatpush1.msra.mxu0 0.0
      %1256 = vmatprep.subr.mxu0 0.0
      %1257 = vmatpush1.msra.mxu0 0.0
      %1258 = vmatprep.subr.mxu0 0.0
      %1259 = vmatpush1.msra.mxu0 0.0
      %1260 = vmatprep.subr.mxu0 0.0
      %1261 = vmatpush1.msra.mxu0 0.0
      %1262 = vmatprep.subr.mxu0 0.0
      %1263 = vmatpush1.msra.mxu0 0.0
      %1264 = vmatprep.subr.mxu0 0.0
      %1265 = vmatpush1.msra.mxu0 0.0
      %1266 = vmatprep.subr.mxu0 0.0
      %1267 = vmatpush1.msra.mxu0 0.0
      %1268 = vmatprep.subr.mxu0 0.0
      %1269 = vmatpush1.msra.mxu0 0.0
      %1270 = vmatprep.subr.mxu0 0.0
      %1271 = vmatpush1.msra.mxu0 0.0
      %1272 = vmatprep.subr.mxu0 0.0
      %1273 = vmatpush1.msra.mxu0 0.0
      %1274 = vmatprep.subr.mxu0 0.0
      %1275 = vmatpush1.msra.mxu0 0.0
      %1276 = vmatprep.subr.mxu0 0.0
      %1277 = vmatpush1.msra.mxu0 0.0
      %1278 = vmatprep.subr.mxu0 0.0
      %1279 = vmatpush1.msra.mxu0 0.0
      %1280 = vmatprep.subr.mxu0 0.0
      %1281 = vmatpush1.msra.mxu0 0.0
      %1282 = vmatprep.subr.mxu0 0.0
      %1283 = vmatpush1.msra.mxu0 0.0
      %1284 = vmatprep.mubr.f32.mxu0 0.0
      %1285 = vmatmul.mubr.f32.gmra.mrb[0].mxu0 %v1215
      %v1286 = vpop.f32.mrb[0].mxu0
      %v1287 = vadd.f32 %v1212, %v1286
      %v1288 = vpop.f32.mrb[0].mxu0
      %1289 = vdwg.mxu0
      %v1290 = vmul.f32 %v1287, 0.5
      %v1291 = vmul.f32 %v1287, 0.044715
      %v1292 = vmul.f32 %v1291, %v1287
      %v1293 = vmul.f32 %v1292, %v1287
      %v1294 = vadd.f32 %v1287, %v1293
      %v1295 = vmul.f32 %v1294, 0.7978846
      %v1296 = vtanh.pop %v1295
      %v1297 = vadd.f32 %v1296, 1.0
      %v1298 = vmul.f32 %v1290, %v1297
      %v1299 = vld [vmem:[%s12] sm:$0xf]
      %1300 = vset.pattern.permute.xlu0 2
      %1301 = vperm.xlu0 %1300, %v955
      %v1302 = vpop.permute.xlu0 %1301
      %v1305 = vsel %vm962, %v1299, 0
      %v1308 = vsel %vm966, %v1298, 0
      %1310 = vmatprep.subr.mxu0 0.0
      %1311 = vmatpush1.msra.mxu0 %v1308
      %1312 = vmatprep.subr.mxu0 0.0
      %1313 = vmatpush1.msra.mxu0 0.0
      %1314 = vmatprep.subr.mxu0 0.0
      %1315 = vmatpush1.msra.mxu0 0.0
      %1316 = vmatprep.subr.mxu0 0.0
      %1317 = vmatpush1.msra.mxu0 0.0
      %1318 = vmatprep.subr.mxu0 0.0
      %1319 = vmatpush1.msra.mxu0 0.0
      %1320 = vmatprep.subr.mxu0 0.0
      %1321 = vmatpush1.msra.mxu0 0.0
      %1322 = vmatprep.subr.mxu0 0.0
      %1323 = vmatpush1.msra.mxu0 0.0
      %1324 = vmatprep.subr.mxu0 0.0
      %1325 = vmatpush1.msra.mxu0 0.0
      %1326 = vmatprep.subr.mxu0 0.0
      %1327 = vmatpush1.msra.mxu0 0.0
      %1328 = vmatprep.subr.mxu0 0.0
      %1329 = vmatpush1.msra.mxu0 0.0
      %1330 = vmatprep.subr.mxu0 0.0
      %1331 = vmatpush1.msra.mxu0 0.0
      %1332 = vmatprep.subr.mxu0 0.0
      %1333 = vmatpush1.msra.mxu0 0.0
      %1334 = vmatprep.subr.mxu0 0.0
      %1335 = vmatpush1.msra.mxu0 0.0
      %1336 = vmatprep.subr.mxu0 0.0
      %1337 = vmatpush1.msra.mxu0 0.0
      %1338 = vmatprep.subr.mxu0 0.0
      %1339 = vmatpush1.msra.mxu0 0.0
      %1340 = vmatprep.subr.mxu0 0.0
      %1341 = vmatpush1.msra.mxu0 0.0
      %1342 = vmatprep.subr.mxu0 0.0
      %1343 = vmatpush1.msra.mxu0 0.0
      %1344 = vmatprep.subr.mxu0 0.0
      %1345 = vmatpush1.msra.mxu0 0.0
      %1346 = vmatprep.subr.mxu0 0.0
      %1347 = vmatpush1.msra.mxu0 0.0
      %1348 = vmatprep.subr.mxu0 0.0
      %1349 = vmatpush1.msra.mxu0 0.0
      %1350 = vmatprep.subr.mxu0 0.0
      %1351 = vmatpush1.msra.mxu0 0.0
      %1352 = vmatprep.subr.mxu0 0.0
      %1353 = vmatpush1.msra.mxu0 0.0
      %1354 = vmatprep.subr.mxu0 0.0
      %1355 = vmatpush1.msra.mxu0 0.0
      %1356 = vmatprep.subr.mxu0 0.0
      %1357 = vmatpush1.msra.mxu0 0.0
      %1358 = vmatprep.subr.mxu0 0.0
      %1359 = vmatpush1.msra.mxu0 0.0
      %1360 = vmatprep.subr.mxu0 0.0
      %1361 = vmatpush1.msra.mxu0 0.0
      %1362 = vmatprep.subr.mxu0 0.0
      %1363 = vmatpush1.msra.mxu0 0.0
      %1364 = vmatprep.subr.mxu0 0.0
      %1365 = vmatpush1.msra.mxu0 0.0
      %1366 = vmatprep.subr.mxu0 0.0
      %1367 = vmatpush1.msra.mxu0 0.0
      %1368 = vmatprep.subr.mxu0 0.0
      %1369 = vmatpush1.msra.mxu0 0.0
      %1370 = vmatprep.subr.mxu0 0.0
      %1371 = vmatpush1.msra.mxu0 0.0
      %1372 = vmatprep.subr.mxu0 0.0
      %1373 = vmatpush1.msra.mxu0 0.0
      %1374 = vmatprep.mubr.f32.mxu0 0.0
      %1375 = vmatmul.mubr.f32.gmra.mrb[0].mxu0 %v1305
      %v1376 = vpop.f32.mrb[0].mxu0
      %v1377 = vadd.f32 %v1302, %v1376
      %v1378 = vpop.f32.mrb[0].mxu0
      %1379 = vdwg.mxu0
      %v1380 = vld [vmem:[%s13] sm:$0xf]
      %1381 = vset.pattern.permute.xlu0 3
      %1382 = vperm.xlu0 %1381, %v955
      %v1383 = vpop.permute.xlu0 %1382
      %v1386 = vsel %vm962, %v1380, 0
      %1388 = vmatprep.subr.mxu0 0.0
      %1389 = vmatpush1.msra.mxu0 %v1308
      %1390 = vmatprep.subr.mxu0 0.0
      %1391 = vmatpush1.msra.mxu0 0.0
      %1392 = vmatprep.subr.mxu0 0.0
      %1393 = vmatpush1.msra.mxu0 0.0
      %1394 = vmatprep.subr.mxu0 0.0
      %1395 = vmatpush1.msra.mxu0 0.0
      %1396 = vmatprep.subr.mxu0 0.0
      %1397 = vmatpush1.msra.mxu0 0.0
      %1398 = vmatprep.subr.mxu0 0.0
      %1399 = vmatpush1.msra.mxu0 0.0
      %1400 = vmatprep.subr.mxu0 0.0
      %1401 = vmatpush1.msra.mxu0 0.0
      %1402 = vmatprep.subr.mxu0 0.0
      %1403 = vmatpush1.msra.mxu0 0.0
      %1404 = vmatprep.subr.mxu0 0.0
      %1405 = vmatpush1.msra.mxu0 0.0
      %1406 = vmatprep.subr.mxu0 0.0
      %1407 = vmatpush1.msra.mxu0 0.0
      %1408 = vmatprep.subr.mxu0 0.0
      %1409 = vmatpush1.msra.mxu0 0.0
      %1410 = vmatprep.subr.mxu0 0.0
      %1411 = vmatpush1.msra.mxu0 0.0
      %1412 = vmatprep.subr.mxu0 0.0
      %1413 = vmatpush1.msra.mxu0 0.0
      %1414 = vmatprep.subr.mxu0 0.0
      %1415 = vmatpush1.msra.mxu0 0.0
      %1416 = vmatprep.subr.mxu0 0.0
      %1417 = vmatpush1.msra.mxu0 0.0
      %1418 = vmatprep.subr.mxu0 0.0
      %1419 = vmatpush1.msra.mxu0 0.0
      %1420 = vmatprep.subr.mxu0 0.0
      %1421 = vmatpush1.msra.mxu0 0.0
      %1422 = vmatprep.subr.mxu0 0.0
      %1423 = vmatpush1.msra.mxu0 0.0
      %1424 = vmatprep.subr.mxu0 0.0
      %1425 = vmatpush1.msra.mxu0 0.0
      %1426 = vmatprep.subr.mxu0 0.0
      %1427 = vmatpush1.msra.mxu0 0.0
      %1428 = vmatprep.subr.mxu0 0.0
      %1429 = vmatpush1.msra.mxu0 0.0
      %1430 = vmatprep.subr.mxu0 0.0
      %1431 = vmatpush1.msra.mxu0 0.0
      %1432 = vmatprep.subr.mxu0 0.0
      %1433 = vmatpush1.msra.mxu0 0.0
      %1434 = vmatprep.subr.mxu0 0.0
      %1435 = vmatpush1.msra.mxu0 0.0
      %1436 = vmatprep.subr.mxu0 0.0
      %1437 = vmatpush1.msra.mxu0 0.0
      %1438 = vmatprep.subr.mxu0 0.0
      %1439 = vmatpush1.msra.mxu0 0.0
      %1440 = vmatprep.subr.mxu0 0.0
      %1441 = vmatpush1.msra.mxu0 0.0
      %1442 = vmatprep.subr.mxu0 0.0
      %1443 = vmatpush1.msra.mxu0 0.0
      %1444 = vmatprep.subr.mxu0 0.0
      %1445 = vmatpush1.msra.mxu0 0.0
      %1446 = vmatprep.subr.mxu0 0.0
      %1447 = vmatpush1.msra.mxu0 0.0
      %1448 = vmatprep.subr.mxu0 0.0
      %1449 = vmatpush1.msra.mxu0 0.0
      %1450 = vmatprep.subr.mxu0 0.0
      %1451 = vmatpush1.msra.mxu0 0.0
      %1452 = vmatprep.mubr.f32.mxu0 0.0
      %1453 = vmatmul.mubr.f32.gmra.mrb[0].mxu0 %v1386
      %v1454 = vpop.f32.mrb[0].mxu0
      %v1455 = vadd.f32 %v1383, %v1454
      %v1456 = vpop.f32.mrb[0].mxu0
      %1457 = vdwg.mxu0
      %v1458 = vld [vmem:[%s14] sm:$0xf]
      %1459 = vset.pattern.permute.xlu0 2
      %1460 = vperm.xlu0 %1459, %v954
      %v1461 = vpop.permute.xlu0 %1460
      %v1464 = vsel %vm962, %v1458, 0
      %1466 = vmatprep.subr.mxu0 0.0
      %1467 = vmatpush1.msra.mxu0 %v1308
      %1468 = vmatprep.subr.mxu0 0.0
      %1469 = vmatpush1.msra.mxu0 0.0
      %1470 = vmatprep.subr.mxu0 0.0
      %1471 = vmatpush1.msra.mxu0 0.0
      %1472 = vmatprep.subr.mxu0 0.0
      %1473 = vmatpush1.msra.mxu0 0.0
      %1474 = vmatprep.subr.mxu0 0.0
      %1475 = vmatpush1.msra.mxu0 0.0
      %1476 = vmatprep.subr.mxu0 0.0
      %1477 = vmatpush1.msra.mxu0 0.0
      %1478 = vmatprep.subr.mxu0 0.0
      %1479 = vmatpush1.msra.mxu0 0.0
      %1480 = vmatprep.subr.mxu0 0.0
      %1481 = vmatpush1.msra.mxu0 0.0
      %1482 = vmatprep.subr.mxu0 0.0
      %1483 = vmatpush1.msra.mxu0 0.0
      %1484 = vmatprep.subr.mxu0 0.0
      %1485 = vmatpush1.msra.mxu0 0.0
      %1486 = vmatprep.subr.mxu0 0.0
      %1487 = vmatpush1.msra.mxu0 0.0
      %1488 = vmatprep.subr.mxu0 0.0
      %1489 = vmatpush1.msra.mxu0 0.0
      %1490 = vmatprep.subr.mxu0 0.0
      %1491 = vmatpush1.msra.mxu0 0.0
      %1492 = vmatprep.subr.mxu0 0.0
      %1493 = vmatpush1.msra.mxu0 0.0
      %1494 = vmatprep.subr.mxu0 0.0
      %1495 = vmatpush1.msra.mxu0 0.0
      %1496 = vmatprep.subr.mxu0 0.0
      %1497 = vmatpush1.msra.mxu0 0.0
      %1498 = vmatprep.subr.mxu0 0.0
      %1499 = vmatpush1.msra.mxu0 0.0
      %1500 = vmatprep.subr.mxu0 0.0
      %1501 = vmatpush1.msra.mxu0 0.0
      %1502 = vmatprep.subr.mxu0 0.0
      %1503 = vmatpush1.msra.mxu0 0.0
      %1504 = vmatprep.subr.mxu0 0.0
      %1505 = vmatpush1.msra.mxu0 0.0
      %1506 = vmatprep.subr.mxu0 0.0
      %1507 = vmatpush1.msra.mxu0 0.0
      %1508 = vmatprep.subr.mxu0 0.0
      %1509 = vmatpush1.msra.mxu0 0.0
      %1510 = vmatprep.subr.mxu0 0.0
      %1511 = vmatpush1.msra.mxu0 0.0
      %1512 = vmatprep.subr.mxu0 0.0
      %1513 = vmatpush1.msra.mxu0 0.0
      %1514 = vmatprep.subr.mxu0 0.0
      %1515 = vmatpush1.msra.mxu0 0.0
      %1516 = vmatprep.subr.mxu0 0.0
      %1517 = vmatpush1.msra.mxu0 0.0
      %1518 = vmatprep.subr.mxu0 0.0
      %1519 = vmatpush1.msra.mxu0 0.0
      %1520 = vmatprep.subr.mxu0 0.0
      %1521 = vmatpush1.msra.mxu0 0.0
      %1522 = vmatprep.subr.mxu0 0.0
      %1523 = vmatpush1.msra.mxu0 0.0
      %1524 = vmatprep.subr.mxu0 0.0
      %1525 = vmatpush1.msra.mxu0 0.0
      %1526 = vmatprep.subr.mxu0 0.0
      %1527 = vmatpush1.msra.mxu0 0.0
      %1528 = vmatprep.subr.mxu0 0.0
      %1529 = vmatpush1.msra.mxu0 0.0
      %1530 = vmatprep.mubr.f32.mxu0 0.0
      %1531 = vmatmul.mubr.f32.gmra.mrb[0].mxu0 %v1464
      %v1532 = vpop.f32.mrb[0].mxu0
      %v1533 = vadd.f32 %v1461, %v1532
      %v1534 = vpop.f32.mrb[0].mxu0
      %1535 = vdwg.mxu0
      %v1536 = vmul.f32 %v1206, 1.442695
      %v1537 = vpow.pop %v1536
      %v1538 = vld [vmem:[%s688] sm:$0xf]
      %v1539 = vmul.f32 %v1537, %v1538
      %v1540 = vadd.f32 %v1539, %v1128
      %v1541 = vadd.f32 %v1455, -0.5
      %v1542 = vsub.f32 %v1541, %v1206
      %v1543 = vmul.f32 %v1206, 2.0
      %v1544 = vmul.f32 %v1543, 1.442695
      %v1545 = vpow.pop %v1544
      %v1546 = vsub.f32 %v1128, %v1377
      %v1547 = vmul.f32 %v1546, %v1546
      %v1548 = vadd.f32 %v1545, %v1547
      %v1549 = vmul.f32 %v1548, 0.5
      %v1550 = vmul.f32 %v1455, -2.0
      %v1551 = vmul.f32 %v1550, 1.442695
      %v1552 = vpow.pop %v1551
      %v1553 = vmul.f32 %v1549, %v1552
      %v1554 = vadd.f32 %v1542, %v1553
      %v1555 = vsub.f32 -0.5, %v1455
      %v1556 = vmul.f32 %v1455, 2.0
      %v1557 = vmul.f32 %v1556, 1.442695
      %v1558 = vpow.pop %v1557
      %v1559 = vmul.f32 %v1377, %v1377
      %v1560 = vadd.f32 %v1558, %v1559
      %v1561 = vmul.f32 %v1560, 0.5
      %v1562 = vadd.f32 %v1555, %v1561
      %v1563 = vsub.f32 -0.5, %v1206
      %v1564 = vmul.f32 %v1128, %v1128
      %v1565 = vadd.f32 %v1545, %v1564
      %v1566 = vmul.f32 %v1565, 0.5
      %v1567 = vadd.f32 %v1563, %v1566
      %v1568 = vld [vmem:[%s15] sm:$0xf]
      %1569 = vset.pattern.permute.xlu0 3
      %1570 = vperm.xlu0 %1569, %v954
      %v1571 = vpop.permute.xlu0 %1570
      %v1574 = vsel %vm962, %v1568, 0
      %v1577 = vsel %vm966, %v1540, 0
      %1579 = vmatprep.subr.mxu0 0.0
      %1580 = vmatpush1.msra.mxu0 %v1577
      %1581 = vmatprep.subr.mxu0 0.0
      %1582 = vmatpush1.msra.mxu0 0.0
      %1583 = vmatprep.subr.mxu0 0.0
      %1584 = vmatpush1.msra.mxu0 0.0
      %1585 = vmatprep.subr.mxu0 0.0
      %1586 = vmatpush1.msra.mxu0 0.0
      %1587 = vmatprep.subr.mxu0 0.0
      %1588 = vmatpush1.msra.mxu0 0.0
      %1589 = vmatprep.subr.mxu0 0.0
      %1590 = vmatpush1.msra.mxu0 0.0
      %1591 = vmatprep.subr.mxu0 0.0
      %1592 = vmatpush1.msra.mxu0 0.0
      %1593 = vmatprep.subr.mxu0 0.0
      %1594 = vmatpush1.msra.mxu0 0.0
      %1595 = vmatprep.subr.mxu0 0.0
      %1596 = vmatpush1.msra.mxu0 0.0
      %1597 = vmatprep.subr.mxu0 0.0
      %1598 = vmatpush1.msra.mxu0 0.0
      %1599 = vmatprep.subr.mxu0 0.0
      %1600 = vmatpush1.msra.mxu0 0.0
      %1601 = vmatprep.subr.mxu0 0.0
      %1602 = vmatpush1.msra.mxu0 0.0
      %1603 = vmatprep.subr.mxu0 0.0
      %1604 = vmatpush1.msra.mxu0 0.0
      %1605 = vmatprep.subr.mxu0 0.0
      %1606 = vmatpush1.msra.mxu0 0.0
      %1607 = vmatprep.subr.mxu0 0.0
      %1608 = vmatpush1.msra.mxu0 0.0
      %1609 = vmatprep.subr.mxu0 0.0
      %1610 = vmatpush1.msra.mxu0 0.0
      %1611 = vmatprep.subr.mxu0 0.0
      %1612 = vmatpush1.msra.mxu0 0.0
      %1613 = vmatprep.subr.mxu0 0.0
      %1614 = vmatpush1.msra.mxu0 0.0
      %1615 = vmatprep.subr.mxu0 0.0
      %1616 = vmatpush1.msra.mxu0 0.0
      %1617 = vmatprep.subr.mxu0 0.0
      %1618 = vmatpush1.msra.mxu0 0.0
      %1619 = vmatprep.subr.mxu0 0.0
      %1620 = vmatpush1.msra.mxu0 0.0
      %1621 = vmatprep.subr.mxu0 0.0
      %1622 = vmatpush1.msra.mxu0 0.0
      %1623 = vmatprep.subr.mxu0 0.0
      %1624 = vmatpush1.msra.mxu0 0.0
      %1625 = vmatprep.subr.mxu0 0.0
      %1626 = vmatpush1.msra.mxu0 0.0
      %1627 = vmatprep.subr.mxu0 0.0
      %1628 = vmatpush1.msra.mxu0 0.0
      %1629 = vmatprep.subr.mxu0 0.0
      %1630 = vmatpush1.msra.mxu0 0.0
      %1631 = vmatprep.subr.mxu0 0.0
      %1632 = vmatpush1.msra.mxu0 0.0
      %1633 = vmatprep.subr.mxu0 0.0
      %1634 = vmatpush1.msra.mxu0 0.0
      %1635 = vmatprep.subr.mxu0 0.0
      %1636 = vmatpush1.msra.mxu0 0.0
      %1637 = vmatprep.subr.mxu0 0.0
      %1638 = vmatpush1.msra.mxu0 0.0
      %1639 = vmatprep.subr.mxu0 0.0
      %1640 = vmatpush1.msra.mxu0 0.0
      %1641 = vmatprep.subr.mxu0 0.0
      %1642 = vmatpush1.msra.mxu0 0.0
      %1643 = vmatprep.mubr.f32.mxu0 0.0
      %1644 = vmatmul.mubr.f32.gmra.mrb[0].mxu0 %v1574
      %v1645 = vpop.f32.mrb[0].mxu0
      %v1646 = vadd.f32 %v1571, %v1645
      %v1647 = vpop.f32.mrb[0].mxu0
      %1648 = vdwg.mxu0
      %v1649 = vld [vmem:[%s16] sm:$0xf]
      %v1650 = vld [vmem:[%s17] sm:$0xf]
      %v1652 = vsel %vm962, %v1650, 0
      %v1655 = vsel %vm966, %v1646, 0
      %1657 = vmatprep.subr.mxu0 0.0
      %1658 = vmatpush1.msra.mxu0 %v1655
      %1659 = vmatprep.subr.mxu0 0.0
      %1660 = vmatpush1.msra.mxu0 0.0
      %1661 = vmatprep.subr.mxu0 0.0
      %1662 = vmatpush1.msra.mxu0 0.0
      %1663 = vmatprep.subr.mxu0 0.0
      %1664 = vmatpush1.msra.mxu0 0.0
      %1665 = vmatprep.subr.mxu0 0.0
      %1666 = vmatpush1.msra.mxu0 0.0
      %1667 = vmatprep.subr.mxu0 0.0
      %1668 = vmatpush1.msra.mxu0 0.0
      %1669 = vmatprep.subr.mxu0 0.0
      %1670 = vmatpush1.msra.mxu0 0.0
      %1671 = vmatprep.subr.mxu0 0.0
      %1672 = vmatpush1.msra.mxu0 0.0
      %1673 = vmatprep.subr.mxu0 0.0
      %1674 = vmatpush1.msra.mxu0 0.0
      %1675 = vmatprep.subr.mxu0 0.0
      %1676 = vmatpush1.msra.mxu0 0.0
      %1677 = vmatprep.subr.mxu0 0.0
      %1678 = vmatpush1.msra.mxu0 0.0
      %1679 = vmatprep.subr.mxu0 0.0
      %1680 = vmatpush1.msra.mxu0 0.0
      %1681 = vmatprep.subr.mxu0 0.0
      %1682 = vmatpush1.msra.mxu0 0.0
      %1683 = vmatprep.subr.mxu0 0.0
      %1684 = vmatpush1.msra.mxu0 0.0
      %1685 = vmatprep.subr.mxu0 0.0
      %1686 = vmatpush1.msra.mxu0 0.0
      %1687 = vmatprep.subr.mxu0 0.0
      %1688 = vmatpush1.msra.mxu0 0.0
      %1689 = vmatprep.subr.mxu0 0.0
      %1690 = vmatpush1.msra.mxu0 0.0
      %1691 = vmatprep.subr.mxu0 0.0
      %1692 = vmatpush1.msra.mxu0 0.0
      %1693 = vmatprep.subr.mxu0 0.0
      %1694 = vmatpush1.msra.mxu0 0.0
      %1695 = vmatprep.subr.mxu0 0.0
      %1696 = vmatpush1.msra.mxu0 0.0
      %1697 = vmatprep.subr.mxu0 0.0
      %1698 = vmatpush1.msra.mxu0 0.0
      %1699 = vmatprep.subr.mxu0 0.0
      %1700 = vmatpush1.msra.mxu0 0.0
      %1701 = vmatprep.subr.mxu0 0.0
      %1702 = vmatpush1.msra.mxu0 0.0
      %1703 = vmatprep.subr.mxu0 0.0
      %1704 = vmatpush1.msra.mxu0 0.0
      %1705 = vmatprep.subr.mxu0 0.0
      %1706 = vmatpush1.msra.mxu0 0.0
      %1707 = vmatprep.subr.mxu0 0.0
      %1708 = vmatpush1.msra.mxu0 0.0
      %1709 = vmatprep.subr.mxu0 0.0
      %1710 = vmatpush1.msra.mxu0 0.0
      %1711 = vmatprep.subr.mxu0 0.0
      %1712 = vmatpush1.msra.mxu0 0.0
      %1713 = vmatprep.subr.mxu0 0.0
      %1714 = vmatpush1.msra.mxu0 0.0
      %1715 = vmatprep.subr.mxu0 0.0
      %1716 = vmatpush1.msra.mxu0 0.0
      %1717 = vmatprep.subr.mxu0 0.0
      %1718 = vmatpush1.msra.mxu0 0.0
      %1719 = vmatprep.subr.mxu0 0.0
      %1720 = vmatpush1.msra.mxu0 0.0
      %1721 = vmatprep.mubr.f32.mxu0 0.0
      %1722 = vmatmul.mubr.f32.gmra.mrb[0].mxu0 %v1652
      %v1723 = vpop.f32.mrb[0].mxu0
      %v1724 = vadd.f32 0.0, %v1723
      %v1725 = vpop.f32.mrb[0].mxu0
      %1726 = vdwg.mxu0
      %v1728 = vsel %vm962, %v1649, 0
      %v1731 = vsel %vm966, %v1533, 0
      %1733 = vmatprep.subr.mxu0 0.0
      %1734 = vmatpush1.msra.mxu0 %v1731
      %1735 = vmatprep.subr.mxu0 0.0
      %1736 = vmatpush1.msra.mxu0 0.0
      %1737 = vmatprep.subr.mxu0 0.0
      %1738 = vmatpush1.msra.mxu0 0.0
      %1739 = vmatprep.subr.mxu0 0.0
      %1740 = vmatpush1.msra.mxu0 0.0
      %1741 = vmatprep.subr.mxu0 0.0
      %1742 = vmatpush1.msra.mxu0 0.0
      %1743 = vmatprep.subr.mxu0 0.0
      %1744 = vmatpush1.msra.mxu0 0.0
      %1745 = vmatprep.subr.mxu0 0.0
      %1746 = vmatpush1.msra.mxu0 0.0
      %1747 = vmatprep.subr.mxu0 0.0
      %1748 = vmatpush1.msra.mxu0 0.0
      %1749 = vmatprep.subr.mxu0 0.0
      %1750 = vmatpush1.msra.mxu0 0.0
      %1751 = vmatprep.subr.mxu0 0.0
      %1752 = vmatpush1.msra.mxu0 0.0
      %1753 = vmatprep.subr.mxu0 0.0
      %1754 = vmatpush1.msra.mxu0 0.0
      %1755 = vmatprep.subr.mxu0 0.0
      %1756 = vmatpush1.msra.mxu0 0.0
      %1757 = vmatprep.subr.mxu0 0.0
      %1758 = vmatpush1.msra.mxu0 0.0
      %1759 = vmatprep.subr.mxu0 0.0
      %1760 = vmatpush1.msra.mxu0 0.0
      %1761 = vmatprep.subr.mxu0 0.0
      %1762 = vmatpush1.msra.mxu0 0.0
      %1763 = vmatprep.subr.mxu0 0.0
      %1764 = vmatpush1.msra.mxu0 0.0
      %1765 = vmatprep.subr.mxu0 0.0
      %1766 = vmatpush1.msra.mxu0 0.0
      %1767 = vmatprep.subr.mxu0 0.0
      %1768 = vmatpush1.msra.mxu0 0.0
      %1769 = vmatprep.subr.mxu0 0.0
      %1770 = vmatpush1.msra.mxu0 0.0
      %1771 = vmatprep.subr.mxu0 0.0
      %1772 = vmatpush1.msra.mxu0 0.0
      %1773 = vmatprep.subr.mxu0 0.0
      %1774 = vmatpush1.msra.mxu0 0.0
      %1775 = vmatprep.subr.mxu0 0.0
      %1776 = vmatpush1.msra.mxu0 0.0
      %1777 = vmatprep.subr.mxu0 0.0
      %1778 = vmatpush1.msra.mxu0 0.0
      %1779 = vmatprep.subr.mxu0 0.0
      %1780 = vmatpush1.msra.mxu0 0.0
      %1781 = vmatprep.subr.mxu0 0.0
      %1782 = vmatpush1.msra.mxu0 0.0
      %1783 = vmatprep.subr.mxu0 0.0
      %1784 = vmatpush1.msra.mxu0 0.0
      %1785 = vmatprep.subr.mxu0 0.0
      %1786 = vmatpush1.msra.mxu0 0.0
      %1787 = vmatprep.subr.mxu0 0.0
      %1788 = vmatpush1.msra.mxu0 0.0
      %1789 = vmatprep.subr.mxu0 0.0
      %1790 = vmatpush1.msra.mxu0 0.0
      %1791 = vmatprep.subr.mxu0 0.0
      %1792 = vmatpush1.msra.mxu0 0.0
      %1793 = vmatprep.subr.mxu0 0.0
      %1794 = vmatpush1.msra.mxu0 0.0
      %1795 = vmatprep.subr.mxu0 0.0
      %1796 = vmatpush1.msra.mxu0 0.0
      %1797 = vmatprep.mubr.f32.mxu0 0.0
      %1798 = vmatmul.mubr.f32.gmra.mrb[0].mxu0 %v1728
      %v1799 = vpop.f32.mrb[0].mxu0
      %v1800 = vadd.f32 %v1724, %v1799
      %v1801 = vpop.f32.mrb[0].mxu0
      %1802 = vdwg.mxu0
      %1803 = vset.pattern.permute.xlu0 4
      %1804 = vperm.xlu0 %1803, %v954
      %v1805 = vpop.permute.xlu0 %1804
      %v1807 = vadd.f32 %v1800, %v1805
      %v1808 = vld [vmem:[%s5] sm:$0xff]
      %v1810 = vcombine.high %v1808, %v1808
      %v1812 = vunpack.c.l.s4 1983009808
      %v1813 = vunpack.c.0.s8 %v1812
      %v1814 = vlaneseq
      %v1815 = vshrl.u32 %v1814, 7
      %v1816 = vsub.s32 %v1813, %v1815
      %v1817 = vrot.slane %v1808, %v1816
      %v1819 = vunpack.c.l.s4 1983009808
      %v1820 = vunpack.c.0.s8 %v1819
      %v1821 = vlaneseq
      %v1822 = vshrl.u32 %v1821, 7
      %v1823 = vsub.s32 %v1820, %v1822
      %v1824 = vrot.slane %v1810, %v1823
      %v1825 = vcombine.high %v1817, %v1817
      %v1826 = vcombine.high %v1824, %v1824
      %vm1827 = vcmask 15360
      %v1829 = vsel %vm1827, %v1807, 0
      %vm1831 = vcmask 1041408
      %v1832 = vsel %vm1831, %v1817, 0
      %v1834 = vsel %vm1831, %v1825, 0
      %v1836 = vsel %vm1831, %v1824, 0
      %v1838 = vsel %vm1831, %v1826, 0
      %1840 = vmatprep.subr.mxu0 %v1834
      %1841 = vmatpush1.msra.mxu0 %v1832
      %1842 = vmatprep.subr.mxu0 0.0
      %1843 = vmatpush1.msra.mxu0 0.0
      %1844 = vmatprep.subr.mxu0 0.0
      %1845 = vmatpush1.msra.mxu0 0.0
      %1846 = vmatprep.subr.mxu0 0.0
      %1847 = vmatpush1.msra.mxu0 0.0
      %1848 = vmatprep.subr.mxu0 0.0
      %1849 = vmatpush1.msra.mxu0 0.0
      %1850 = vmatprep.subr.mxu0 0.0
      %1851 = vmatpush1.msra.mxu0 0.0
      %1852 = vmatprep.subr.mxu0 0.0
      %1853 = vmatpush1.msra.mxu0 0.0
      %1854 = vmatprep.subr.mxu0 0.0
      %1855 = vmatpush1.msra.mxu0 0.0
      %1856 = vmatprep.subr.mxu0 0.0
      %1857 = vmatpush1.msra.mxu0 0.0
      %1858 = vmatprep.subr.mxu0 0.0
      %1859 = vmatpush1.msra.mxu0 0.0
      %1860 = vmatprep.subr.mxu0 0.0
      %1861 = vmatpush1.msra.mxu0 0.0
      %1862 = vmatprep.subr.mxu0 0.0
      %1863 = vmatpush1.msra.mxu0 0.0
      %1864 = vmatprep.subr.mxu0 0.0
      %1865 = vmatpush1.msra.mxu0 0.0
      %1866 = vmatprep.subr.mxu0 0.0
      %1867 = vmatpush1.msra.mxu0 0.0
      %1868 = vmatprep.subr.mxu0 0.0
      %1869 = vmatpush1.msra.mxu0 0.0
      %1870 = vmatprep.subr.mxu0 0.0
      %1871 = vmatpush1.msra.mxu0 0.0
      %1872 = vmatprep.subr.mxu0 0.0
      %1873 = vmatpush1.msra.mxu0 0.0
      %1874 = vmatprep.subr.mxu0 0.0
      %1875 = vmatpush1.msra.mxu0 0.0
      %1876 = vmatprep.subr.mxu0 0.0
      %1877 = vmatpush1.msra.mxu0 0.0
      %1878 = vmatprep.subr.mxu0 0.0
      %1879 = vmatpush1.msra.mxu0 0.0
      %1880 = vmatprep.subr.mxu0 0.0
      %1881 = vmatpush1.msra.mxu0 0.0
      %1882 = vmatprep.subr.mxu0 0.0
      %1883 = vmatpush1.msra.mxu0 0.0
      %1884 = vmatprep.subr.mxu0 0.0
      %1885 = vmatpush1.msra.mxu0 0.0
      %1886 = vmatprep.subr.mxu0 0.0
      %1887 = vmatpush1.msra.mxu0 0.0
      %1888 = vmatprep.subr.mxu0 0.0
      %1889 = vmatpush1.msra.mxu0 0.0
      %1890 = vmatprep.subr.mxu0 0.0
      %1891 = vmatpush1.msra.mxu0 0.0
      %1892 = vmatprep.subr.mxu0 0.0
      %1893 = vmatpush1.msra.mxu0 0.0
      %1894 = vmatprep.subr.mxu0 0.0
      %1895 = vmatpush1.msra.mxu0 0.0
      %1896 = vmatprep.subr.mxu0 0.0
      %1897 = vmatpush1.msra.mxu0 0.0
      %1898 = vmatprep.subr.mxu0 0.0
      %1899 = vmatpush1.msra.mxu0 0.0
      %1900 = vmatprep.subr.mxu0 0.0
      %1901 = vmatpush1.msra.mxu0 0.0
      %1902 = vmatprep.subr.mxu0 0.0
      %1903 = vmatpush1.msra.mxu0 0.0
      %1904 = vmatprep.mubr.f32.mxu0 0.0
      %1905 = vmatmul.mubr.f32.gmra.mrb[0].mxu0 %v1829
      %v1906 = vpop.f32.mrb[0].mxu0
      %v1907 = vadd.f32 0.0, %v1906
      %v1908 = vpop.f32.mrb[0].mxu0
      %v1909 = vadd.f32 0.0, %v1908
      %1910 = vdwg.mxu0
      %1911 = vmatprep.subr.mxu0 %v1838
      %1912 = vmatpush1.msra.mxu0 %v1836
      %1913 = vmatprep.subr.mxu0 0.0
      %1914 = vmatpush1.msra.mxu0 0.0
      %1915 = vmatprep.subr.mxu0 0.0
      %1916 = vmatpush1.msra.mxu0 0.0
      %1917 = vmatprep.subr.mxu0 0.0
      %1918 = vmatpush1.msra.mxu0 0.0
      %1919 = vmatprep.subr.mxu0 0.0
      %1920 = vmatpush1.msra.mxu0 0.0
      %1921 = vmatprep.subr.mxu0 0.0
      %1922 = vmatpush1.msra.mxu0 0.0
      %1923 = vmatprep.subr.mxu0 0.0
      %1924 = vmatpush1.msra.mxu0 0.0
      %1925 = vmatprep.subr.mxu0 0.0
      %1926 = vmatpush1.msra.mxu0 0.0
      %1927 = vmatprep.subr.mxu0 0.0
      %1928 = vmatpush1.msra.mxu0 0.0
      %1929 = vmatprep.subr.mxu0 0.0
      %1930 = vmatpush1.msra.mxu0 0.0
      %1931 = vmatprep.subr.mxu0 0.0
      %1932 = vmatpush1.msra.mxu0 0.0
      %1933 = vmatprep.subr.mxu0 0.0
      %1934 = vmatpush1.msra.mxu0 0.0
      %1935 = vmatprep.subr.mxu0 0.0
      %1936 = vmatpush1.msra.mxu0 0.0
      %1937 = vmatprep.subr.mxu0 0.0
      %1938 = vmatpush1.msra.mxu0 0.0
      %1939 = vmatprep.subr.mxu0 0.0
      %1940 = vmatpush1.msra.mxu0 0.0
      %1941 = vmatprep.subr.mxu0 0.0
      %1942 = vmatpush1.msra.mxu0 0.0
      %1943 = vmatprep.subr.mxu0 0.0
      %1944 = vmatpush1.msra.mxu0 0.0
      %1945 = vmatprep.subr.mxu0 0.0
      %1946 = vmatpush1.msra.mxu0 0.0
      %1947 = vmatprep.subr.mxu0 0.0
      %1948 = vmatpush1.msra.mxu0 0.0
      %1949 = vmatprep.subr.mxu0 0.0
      %1950 = vmatpush1.msra.mxu0 0.0
      %1951 = vmatprep.subr.mxu0 0.0
      %1952 = vmatpush1.msra.mxu0 0.0
      %1953 = vmatprep.subr.mxu0 0.0
      %1954 = vmatpush1.msra.mxu0 0.0
      %1955 = vmatprep.subr.mxu0 0.0
      %1956 = vmatpush1.msra.mxu0 0.0
      %1957 = vmatprep.subr.mxu0 0.0
      %1958 = vmatpush1.msra.mxu0 0.0
      %1959 = vmatprep.subr.mxu0 0.0
      %1960 = vmatpush1.msra.mxu0 0.0
      %1961 = vmatprep.subr.mxu0 0.0
      %1962 = vmatpush1.msra.mxu0 0.0
      %1963 = vmatprep.subr.mxu0 0.0
      %1964 = vmatpush1.msra.mxu0 0.0
      %1965 = vmatprep.subr.mxu0 0.0
      %1966 = vmatpush1.msra.mxu0 0.0
      %1967 = vmatprep.subr.mxu0 0.0
      %1968 = vmatpush1.msra.mxu0 0.0
      %1969 = vmatprep.subr.mxu0 0.0
      %1970 = vmatpush1.msra.mxu0 0.0
      %1971 = vmatprep.subr.mxu0 0.0
      %1972 = vmatpush1.msra.mxu0 0.0
      %1973 = vmatprep.subr.mxu0 0.0
      %1974 = vmatpush1.msra.mxu0 0.0
      %1975 = vmatprep.mubr.f32.mxu0 0.0
      %1976 = vmatmul.mubr.f32.gmra.mrb[0].mxu0 %v1829
      %v1977 = vpop.f32.mrb[0].mxu0
      %v1978 = vadd.f32 0.0, %v1977
      %v1979 = vpop.f32.mrb[0].mxu0
      %v1980 = vadd.f32 0.0, %v1979
      %1981 = vdwg.mxu0
      %v1986 = vcombine.low %v1907, %v1909
      %v1987 = vcombine.low %v1978, %v1980
      %v1990 = vadd.f32 %v741, %v1986
      %v1991 = vadd.f32 %v742, %v1987
      %v1994 = vcombine.high %v1990, %v1990
      %v1995 = vcombine.high %v1991, %v1991
      %1998 = vrot.lane.b32.xlu0 %v1990, 17
      %v1999 = vpop.permute.xlu0 %1998
      %2000 = vrot.lane.b32.xlu0 %v1994, 17
      %v2001 = vpop.permute.xlu0 %2000
      %2002 = vrot.lane.b32.xlu0 %v1991, 17
      %v2003 = vpop.permute.xlu0 %2002
      %2004 = vrot.lane.b32.xlu0 %v1995, 17
      %v2005 = vpop.permute.xlu0 %2004
      %v2006 = vlaneseq
      %v2007 = vand.u32 %v2006, 127
      %vm2008 = vcmp.lt.s32.totalorder %v2007, 17
      %v2009 = vsel %vm2008, %v2003, %v2005
      %v2010 = vsel %vm2008, %v2001, %v2003
      %v2011 = vsel %vm2008, %v1999, %v2001
      %v2012 = vsel %vm2008, %v2005, %v1999
      %v2013 = vld [vmem:[%s3] sm:$0xf]
      %v2015 = vlaneseq
      %v2016 = vshrl.u32 %v2015, 7
      %v2017 = vsub.s32 0, %v2016
      %v2018 = vrot.slane %v2013, %v2017
      %v2019 = vlaneseq
      %v2020 = vshrl.u32 %v2019, 7
      %v2021 = vsub.s32 1, %v2020
      %v2022 = vrot.slane %v2013, %v2021
      %v2023 = vlaneseq
      %v2024 = vshrl.u32 %v2023, 7
      %v2025 = vsub.s32 2, %v2024
      %v2026 = vrot.slane %v2013, %v2025
      %v2027 = vlaneseq
      %v2028 = vshrl.u32 %v2027, 7
      %v2029 = vsub.s32 3, %v2028
      %v2030 = vrot.slane %v2013, %v2029
      %v2035 = vmul.f32 %v2012, %v2018
      %v2036 = vmul.f32 %v2011, %v2022
      %v2037 = vmul.f32 %v2010, %v2026
      %v2038 = vmul.f32 %v2009, %v2030
      %v2039 = vpack.c.bf16 %v2035, %v2035
      %v2040 = vpack.c.bf16 %v2036, %v2036
      %v2041 = vpack.c.bf16 %v2037, %v2037
      %v2042 = vpack.c.bf16 %v2038, %v2038
      %2043 = vst [vmem:[#allocation2] sm:$0x3] %v2039
      %2044 = vst [vmem:[#allocation2 + $0x8] sm:$0x3] %v2040
      %2045 = vst [vmem:[#allocation2 + $0x10] sm:$0x3] %v2041
      %2046 = vst [vmem:[#allocation2 + $0x18] sm:$0x3] %v2042
      %2047 = vrot.lane.b32.xlu0 %v1990, 16
      %v2048 = vpop.permute.xlu0 %2047
      %2049 = vrot.lane.b32.xlu0 %v1994, 16
      %v2050 = vpop.permute.xlu0 %2049
      %2051 = vrot.lane.b32.xlu0 %v1991, 16
      %v2052 = vpop.permute.xlu0 %2051
      %2053 = vrot.lane.b32.xlu0 %v1995, 16
      %v2054 = vpop.permute.xlu0 %2053
      %vm2055 = vcmp.lt.s32.totalorder %v2007, 16
      %v2056 = vsel %vm2055, %v2052, %v2054
      %v2057 = vsel %vm2055, %v2050, %v2052
      %v2058 = vsel %vm2055, %v2048, %v2050
      %v2059 = vsel %vm2055, %v2054, %v2048
      %s2060 = scalar_lea.vmem %s3, 4
      %v2061 = vld [vmem:[%s2060] sm:$0xf]
      %v2063 = vlaneseq
      %v2064 = vshrl.u32 %v2063, 7
      %v2065 = vsub.s32 0, %v2064
      %v2066 = vrot.slane %v2061, %v2065
      %v2067 = vlaneseq
      %v2068 = vshrl.u32 %v2067, 7
      %v2069 = vsub.s32 1, %v2068
      %v2070 = vrot.slane %v2061, %v2069
      %v2071 = vlaneseq
      %v2072 = vshrl.u32 %v2071, 7
      %v2073 = vsub.s32 2, %v2072
      %v2074 = vrot.slane %v2061, %v2073
      %v2075 = vlaneseq
      %v2076 = vshrl.u32 %v2075, 7
      %v2077 = vsub.s32 3, %v2076
      %v2078 = vrot.slane %v2061, %v2077
      %v2083 = vmul.f32 %v2059, %v2066
      %v2084 = vmul.f32 %v2058, %v2070
      %v2085 = vmul.f32 %v2057, %v2074
      %v2086 = vmul.f32 %v2056, %v2078
      %v2087 = vpack.c.bf16 %v2083, %v2083
      %v2088 = vpack.c.bf16 %v2084, %v2084
      %v2089 = vpack.c.bf16 %v2085, %v2085
      %v2090 = vpack.c.bf16 %v2086, %v2086
      %2091 = vst [vmem:[#allocation2 + $0x20] sm:$0x3] %v2087
      %2092 = vst [vmem:[#allocation2 + $0x28] sm:$0x3] %v2088
      %2093 = vst [vmem:[#allocation2 + $0x30] sm:$0x3] %v2089
      %2094 = vst [vmem:[#allocation2 + $0x38] sm:$0x3] %v2090
      %2095 = vrot.lane.b32.xlu0 %v1990, 15
      %v2096 = vpop.permute.xlu0 %2095
      %2097 = vrot.lane.b32.xlu0 %v1994, 15
      %v2098 = vpop.permute.xlu0 %2097
      %2099 = vrot.lane.b32.xlu0 %v1991, 15
      %v2100 = vpop.permute.xlu0 %2099
      %2101 = vrot.lane.b32.xlu0 %v1995, 15
      %v2102 = vpop.permute.xlu0 %2101
      %vm2103 = vcmp.lt.s32.totalorder %v2007, 15
      %v2104 = vsel %vm2103, %v2100, %v2102
      %v2105 = vsel %vm2103, %v2098, %v2100
      %v2106 = vsel %vm2103, %v2096, %v2098
      %v2107 = vsel %vm2103, %v2102, %v2096
      %s2108 = scalar_lea.vmem %s3, 8
      %v2109 = vld [vmem:[%s2108] sm:$0xf]
      %v2111 = vlaneseq
      %v2112 = vshrl.u32 %v2111, 7
      %v2113 = vsub.s32 0, %v2112
      %v2114 = vrot.slane %v2109, %v2113
      %v2115 = vlaneseq
      %v2116 = vshrl.u32 %v2115, 7
      %v2117 = vsub.s32 1, %v2116
      %v2118 = vrot.slane %v2109, %v2117
      %v2119 = vlaneseq
      %v2120 = vshrl.u32 %v2119, 7
      %v2121 = vsub.s32 2, %v2120
      %v2122 = vrot.slane %v2109, %v2121
      %v2123 = vlaneseq
      %v2124 = vshrl.u32 %v2123, 7
      %v2125 = vsub.s32 3, %v2124
      %v2126 = vrot.slane %v2109, %v2125
      %v2131 = vmul.f32 %v2107, %v2114
      %v2132 = vmul.f32 %v2106, %v2118
      %v2133 = vmul.f32 %v2105, %v2122
      %v2134 = vmul.f32 %v2104, %v2126
      %v2135 = vpack.c.bf16 %v2131, %v2131
      %v2136 = vpack.c.bf16 %v2132, %v2132
      %v2137 = vpack.c.bf16 %v2133, %v2133
      %v2138 = vpack.c.bf16 %v2134, %v2134
      %2139 = vst [vmem:[#allocation2 + $0x40] sm:$0x3] %v2135
      %2140 = vst [vmem:[#allocation2 + $0x48] sm:$0x3] %v2136
      %2141 = vst [vmem:[#allocation2 + $0x50] sm:$0x3] %v2137
      %2142 = vst [vmem:[#allocation2 + $0x58] sm:$0x3] %v2138
      %2143 = vrot.lane.b32.xlu0 %v1990, 1
      %v2144 = vpop.permute.xlu0 %2143
      %2145 = vrot.lane.b32.xlu0 %v1994, 1
      %v2146 = vpop.permute.xlu0 %2145
      %2147 = vrot.lane.b32.xlu0 %v1991, 1
      %v2148 = vpop.permute.xlu0 %2147
      %2149 = vrot.lane.b32.xlu0 %v1995, 1
      %v2150 = vpop.permute.xlu0 %2149
      %vm2151 = vcmp.lt.s32.totalorder %v2007, 1
      %v2152 = vsel %vm2151, %v2148, %v2150
      %v2153 = vsel %vm2151, %v2146, %v2148
      %v2154 = vsel %vm2151, %v2144, %v2146
      %v2155 = vsel %vm2151, %v2150, %v2144
      %s2156 = scalar_lea.vmem %s3, 12
      %v2157 = vld [vmem:[%s2156] sm:$0xf]
      %v2159 = vlaneseq
      %v2160 = vshrl.u32 %v2159, 7
      %v2161 = vsub.s32 0, %v2160
      %v2162 = vrot.slane %v2157, %v2161
      %v2163 = vlaneseq
      %v2164 = vshrl.u32 %v2163, 7
      %v2165 = vsub.s32 1, %v2164
      %v2166 = vrot.slane %v2157, %v2165
      %v2167 = vlaneseq
      %v2168 = vshrl.u32 %v2167, 7
      %v2169 = vsub.s32 2, %v2168
      %v2170 = vrot.slane %v2157, %v2169
      %v2171 = vlaneseq
      %v2172 = vshrl.u32 %v2171, 7
      %v2173 = vsub.s32 3, %v2172
      %v2174 = vrot.slane %v2157, %v2173
      %v2179 = vmul.f32 %v2155, %v2162
      %v2180 = vmul.f32 %v2154, %v2166
      %v2181 = vmul.f32 %v2153, %v2170
      %v2182 = vmul.f32 %v2152, %v2174
      %v2183 = vpack.c.bf16 %v2179, %v2179
      %v2184 = vpack.c.bf16 %v2180, %v2180
      %v2185 = vpack.c.bf16 %v2181, %v2181
      %v2186 = vpack.c.bf16 %v2182, %v2182
      %2187 = vst [vmem:[#allocation2 + $0x60] sm:$0x3] %v2183
      %2188 = vst [vmem:[#allocation2 + $0x68] sm:$0x3] %v2184
      %2189 = vst [vmem:[#allocation2 + $0x70] sm:$0x3] %v2185
      %2190 = vst [vmem:[#allocation2 + $0x78] sm:$0x3] %v2186
      %v2191 = vpack.c.bf16 %v1990, %v1990
      %v2192 = vpack.c.bf16 %v1994, %v1994
      %v2193 = vpack.c.bf16 %v1991, %v1991
      %v2194 = vpack.c.bf16 %v1995, %v1995
      %2195 = vst [vmem:[#allocation2 + $0x80] sm:$0x3] %v2191
      %2196 = vst [vmem:[#allocation2 + $0x88] sm:$0x3] %v2192
      %2197 = vst [vmem:[#allocation2 + $0x90] sm:$0x3] %v2193
      %2198 = vst [vmem:[#allocation2 + $0x98] sm:$0x3] %v2194
      %2199 = vrot.lane.b32.xlu0 %v1990, 127
      %v2200 = vpop.permute.xlu0 %2199
      %2201 = vrot.lane.b32.xlu0 %v1994, 127
      %v2202 = vpop.permute.xlu0 %2201
      %2203 = vrot.lane.b32.xlu0 %v1991, 127
      %v2204 = vpop.permute.xlu0 %2203
      %2205 = vrot.lane.b32.xlu0 %v1995, 127
      %v2206 = vpop.permute.xlu0 %2205
      %vm2207 = vcmp.lt.s32.totalorder %v2007, 127
      %v2208 = vsel %vm2207, %v2204, %v2206
      %v2209 = vsel %vm2207, %v2202, %v2204
      %v2210 = vsel %vm2207, %v2200, %v2202
      %v2211 = vsel %vm2207, %v2206, %v2200
      %s2212 = scalar_lea.vmem %s3, 20
      %v2213 = vld [vmem:[%s2212] sm:$0xf]
      %v2215 = vlaneseq
      %v2216 = vshrl.u32 %v2215, 7
      %v2217 = vsub.s32 0, %v2216
      %v2218 = vrot.slane %v2213, %v2217
      %v2219 = vlaneseq
      %v2220 = vshrl.u32 %v2219, 7
      %v2221 = vsub.s32 1, %v2220
      %v2222 = vrot.slane %v2213, %v2221
      %v2223 = vlaneseq
      %v2224 = vshrl.u32 %v2223, 7
      %v2225 = vsub.s32 2, %v2224
      %v2226 = vrot.slane %v2213, %v2225
      %v2227 = vlaneseq
      %v2228 = vshrl.u32 %v2227, 7
      %v2229 = vsub.s32 3, %v2228
      %v2230 = vrot.slane %v2213, %v2229
      %v2235 = vmul.f32 %v2210, %v2218
      %v2236 = vmul.f32 %v2209, %v2222
      %v2237 = vmul.f32 %v2208, %v2226
      %v2238 = vmul.f32 %v2211, %v2230
      %v2239 = vpack.c.bf16 %v2235, %v2235
      %v2240 = vpack.c.bf16 %v2236, %v2236
      %v2241 = vpack.c.bf16 %v2237, %v2237
      %v2242 = vpack.c.bf16 %v2238, %v2238
      %2243 = vst [vmem:[#allocation2 + $0xa0] sm:$0x3] %v2239
      %2244 = vst [vmem:[#allocation2 + $0xa8] sm:$0x3] %v2240
      %2245 = vst [vmem:[#allocation2 + $0xb0] sm:$0x3] %v2241
      %2246 = vst [vmem:[#allocation2 + $0xb8] sm:$0x3] %v2242
      %2247 = vrot.lane.b32.xlu0 %v1990, 113
      %v2248 = vpop.permute.xlu0 %2247
      %2249 = vrot.lane.b32.xlu0 %v1994, 113
      %v2250 = vpop.permute.xlu0 %2249
      %2251 = vrot.lane.b32.xlu0 %v1991, 113
      %v2252 = vpop.permute.xlu0 %2251
      %2253 = vrot.lane.b32.xlu0 %v1995, 113
      %v2254 = vpop.permute.xlu0 %2253
      %vm2255 = vcmp.lt.s32.totalorder %v2007, 113
      %v2256 = vsel %vm2255, %v2252, %v2254
      %v2257 = vsel %vm2255, %v2250, %v2252
      %v2258 = vsel %vm2255, %v2248, %v2250
      %v2259 = vsel %vm2255, %v2254, %v2248
      %s2260 = scalar_lea.vmem %s3, 24
      %v2261 = vld [vmem:[%s2260] sm:$0xf]
      %v2263 = vlaneseq
      %v2264 = vshrl.u32 %v2263, 7
      %v2265 = vsub.s32 0, %v2264
      %v2266 = vrot.slane %v2261, %v2265
      %v2267 = vlaneseq
      %v2268 = vshrl.u32 %v2267, 7
      %v2269 = vsub.s32 1, %v2268
      %v2270 = vrot.slane %v2261, %v2269
      %v2271 = vlaneseq
      %v2272 = vshrl.u32 %v2271, 7
      %v2273 = vsub.s32 2, %v2272
      %v2274 = vrot.slane %v2261, %v2273
      %v2275 = vlaneseq
      %v2276 = vshrl.u32 %v2275, 7
      %v2277 = vsub.s32 3, %v2276
      %v2278 = vrot.slane %v2261, %v2277
      %v2283 = vmul.f32 %v2258, %v2266
      %v2284 = vmul.f32 %v2257, %v2270
      %v2285 = vmul.f32 %v2256, %v2274
      %v2286 = vmul.f32 %v2259, %v2278
      %v2287 = vpack.c.bf16 %v2283, %v2283
      %v2288 = vpack.c.bf16 %v2284, %v2284
      %v2289 = vpack.c.bf16 %v2285, %v2285
      %v2290 = vpack.c.bf16 %v2286, %v2286
      %2291 = vst [vmem:[#allocation2 + $0xc0] sm:$0x3] %v2287
      %2292 = vst [vmem:[#allocation2 + $0xc8] sm:$0x3] %v2288
      %2293 = vst [vmem:[#allocation2 + $0xd0] sm:$0x3] %v2289
      %2294 = vst [vmem:[#allocation2 + $0xd8] sm:$0x3] %v2290
      %2295 = vrot.lane.b32.xlu0 %v1990, 112
      %v2296 = vpop.permute.xlu0 %2295
      %2297 = vrot.lane.b32.xlu0 %v1994, 112
      %v2298 = vpop.permute.xlu0 %2297
      %2299 = vrot.lane.b32.xlu0 %v1991, 112
      %v2300 = vpop.permute.xlu0 %2299
      %2301 = vrot.lane.b32.xlu0 %v1995, 112
      %v2302 = vpop.permute.xlu0 %2301
      %vm2303 = vcmp.lt.s32.totalorder %v2007, 112
      %v2304 = vsel %vm2303, %v2300, %v2302
      %v2305 = vsel %vm2303, %v2298, %v2300
      %v2306 = vsel %vm2303, %v2296, %v2298
      %v2307 = vsel %vm2303, %v2302, %v2296
      %s2308 = scalar_lea.vmem %s3, 28
      %v2309 = vld [vmem:[%s2308] sm:$0xf]
      %v2311 = vlaneseq
      %v2312 = vshrl.u32 %v2311, 7
      %v2313 = vsub.s32 0, %v2312
      %v2314 = vrot.slane %v2309, %v2313
      %v2315 = vlaneseq
      %v2316 = vshrl.u32 %v2315, 7
      %v2317 = vsub.s32 1, %v2316
      %v2318 = vrot.slane %v2309, %v2317
      %v2319 = vlaneseq
      %v2320 = vshrl.u32 %v2319, 7
      %v2321 = vsub.s32 2, %v2320
      %v2322 = vrot.slane %v2309, %v2321
      %v2323 = vlaneseq
      %v2324 = vshrl.u32 %v2323, 7
      %v2325 = vsub.s32 3, %v2324
      %v2326 = vrot.slane %v2309, %v2325
      %v2331 = vmul.f32 %v2306, %v2314
      %v2332 = vmul.f32 %v2305, %v2318
      %v2333 = vmul.f32 %v2304, %v2322
      %v2334 = vmul.f32 %v2307, %v2326
      %v2335 = vpack.c.bf16 %v2331, %v2331
      %v2336 = vpack.c.bf16 %v2332, %v2332
      %v2337 = vpack.c.bf16 %v2333, %v2333
      %v2338 = vpack.c.bf16 %v2334, %v2334
      %2339 = vst [vmem:[#allocation2 + $0xe0] sm:$0x3] %v2335
      %2340 = vst [vmem:[#allocation2 + $0xe8] sm:$0x3] %v2336
      %2341 = vst [vmem:[#allocation2 + $0xf0] sm:$0x3] %v2337
      %2342 = vst [vmem:[#allocation2 + $0xf8] sm:$0x3] %v2338
      %2343 = vrot.lane.b32.xlu0 %v1990, 111
      %v2344 = vpop.permute.xlu0 %2343
      %2345 = vrot.lane.b32.xlu0 %v1994, 111
      %v2346 = vpop.permute.xlu0 %2345
      %2347 = vrot.lane.b32.xlu0 %v1991, 111
      %v2348 = vpop.permute.xlu0 %2347
      %2349 = vrot.lane.b32.xlu0 %v1995, 111
      %v2350 = vpop.permute.xlu0 %2349
      %vm2351 = vcmp.lt.s32.totalorder %v2007, 111
      %v2352 = vsel %vm2351, %v2348, %v2350
      %v2353 = vsel %vm2351, %v2346, %v2348
      %v2354 = vsel %vm2351, %v2344, %v2346
      %v2355 = vsel %vm2351, %v2350, %v2344
      %s2356 = scalar_lea.vmem %s3, 32
      %v2357 = vld [vmem:[%s2356] sm:$0xf]
      %v2359 = vlaneseq
      %v2360 = vshrl.u32 %v2359, 7
      %v2361 = vsub.s32 0, %v2360
      %v2362 = vrot.slane %v2357, %v2361
      %v2363 = vlaneseq
      %v2364 = vshrl.u32 %v2363, 7
      %v2365 = vsub.s32 1, %v2364
      %v2366 = vrot.slane %v2357, %v2365
      %v2367 = vlaneseq
      %v2368 = vshrl.u32 %v2367, 7
      %v2369 = vsub.s32 2, %v2368
      %v2370 = vrot.slane %v2357, %v2369
      %v2371 = vlaneseq
      %v2372 = vshrl.u32 %v2371, 7
      %v2373 = vsub.s32 3, %v2372
      %v2374 = vrot.slane %v2357, %v2373
      %v2379 = vmul.f32 %v2354, %v2362
      %v2380 = vmul.f32 %v2353, %v2366
      %v2381 = vmul.f32 %v2352, %v2370
      %v2382 = vmul.f32 %v2355, %v2374
      %v2383 = vpack.c.bf16 %v2379, %v2379
      %v2384 = vpack.c.bf16 %v2380, %v2380
      %v2385 = vpack.c.bf16 %v2381, %v2381
      %v2386 = vpack.c.bf16 %v2382, %v2382
      %2387 = vst [vmem:[#allocation2 + $0x100] sm:$0x3] %v2383
      %2388 = vst [vmem:[#allocation2 + $0x108] sm:$0x3] %v2384
      %2389 = vst [vmem:[#allocation2 + $0x110] sm:$0x3] %v2385
      %2390 = vst [vmem:[#allocation2 + $0x118] sm:$0x3] %v2386
      %v2391 = vld [vmem:[%s18] sm:$0xf]
      %v2392 = vld [vmem:[#allocation2] sm:$0xff]
      %v2393 = vld [vmem:[#allocation2 + $0x8] sm:$0xff]
      %v2394 = vld [vmem:[#allocation2 + $0x10] sm:$0xff]
      %v2395 = vld [vmem:[#allocation2 + $0x18] sm:$0xff]
      %v2396 = vld [vmem:[#allocation2 + $0x20] sm:$0xff]
      %v2397 = vld [vmem:[#allocation2 + $0x28] sm:$0xff]
      %v2398 = vld [vmem:[#allocation2 + $0x30] sm:$0xff]
      %v2399 = vld [vmem:[#allocation2 + $0x38] sm:$0xff]
      %v2400 = vld [vmem:[#allocation2 + $0x40] sm:$0xff]
      %v2401 = vld [vmem:[#allocation2 + $0x48] sm:$0xff]
      %v2402 = vld [vmem:[#allocation2 + $0x50] sm:$0xff]
      %v2403 = vld [vmem:[#allocation2 + $0x58] sm:$0xff]
      %v2404 = vld [vmem:[#allocation2 + $0x60] sm:$0xff]
      %v2405 = vld [vmem:[#allocation2 + $0x68] sm:$0xff]
      %v2406 = vld [vmem:[#allocation2 + $0x70] sm:$0xff]
      %v2407 = vld [vmem:[#allocation2 + $0x78] sm:$0xff]
      %v2408 = vld [vmem:[#allocation2 + $0x80] sm:$0xff]
      %v2409 = vld [vmem:[#allocation2 + $0x88] sm:$0xff]
      %v2410 = vld [vmem:[#allocation2 + $0x90] sm:$0xff]
      %v2411 = vld [vmem:[#allocation2 + $0x98] sm:$0xff]
      %v2412 = vld [vmem:[#allocation2 + $0xa0] sm:$0xff]
      %v2413 = vld [vmem:[#allocation2 + $0xa8] sm:$0xff]
      %v2414 = vld [vmem:[#allocation2 + $0xb0] sm:$0xff]
      %v2415 = vld [vmem:[#allocation2 + $0xb8] sm:$0xff]
      %v2416 = vld [vmem:[#allocation2 + $0xc0] sm:$0xff]
      %v2417 = vld [vmem:[#allocation2 + $0xc8] sm:$0xff]
      %v2418 = vld [vmem:[#allocation2 + $0xd0] sm:$0xff]
      %v2419 = vld [vmem:[#allocation2 + $0xd8] sm:$0xff]
      %v2420 = vld [vmem:[#allocation2 + $0xe0] sm:$0xff]
      %v2421 = vld [vmem:[#allocation2 + $0xe8] sm:$0xff]
      %v2422 = vld [vmem:[#allocation2 + $0xf0] sm:$0xff]
      %v2423 = vld [vmem:[#allocation2 + $0xf8] sm:$0xff]
      %v2424 = vld [vmem:[#allocation2 + $0x100] sm:$0xff]
      %v2425 = vld [vmem:[#allocation2 + $0x108] sm:$0xff]
      %v2426 = vld [vmem:[#allocation2 + $0x110] sm:$0xff]
      %v2427 = vld [vmem:[#allocation2 + $0x118] sm:$0xff]
      %2428 = vset.pattern.permute.xlu0 5
      %2429 = vperm.xlu0 %2428, %v954
      %v2430 = vpop.permute.xlu0 %2429
      %v2434 = vunpack.c.l.s4 1983009808
      %v2435 = vunpack.c.0.s8 %v2434
      %v2436 = vlaneseq
      %v2437 = vshrl.u32 %v2436, 7
      %v2438 = vsub.s32 %v2435, %v2437
      %v2439 = vrot.slane %v2391, %v2438
      %v2440 = vcombine.high %v2439, %v2439
      %vm2442 = vcmask 130048
      %v2444 = vsel %vm2442, %v2440, 0
      %2446 = vmatprep.subr.bf16.mxu0 %v2393
      %2447 = vmatpush1.bf16.msra.mxu0 %v2392
      %2448 = vmatprep.subr.bf16.mxu0 %v2397
      %2449 = vmatpush1.bf16.msra.mxu0 %v2396
      %2450 = vmatprep.subr.bf16.mxu0 %v2401
      %2451 = vmatpush1.bf16.msra.mxu0 %v2400
      %2452 = vmatprep.subr.bf16.mxu0 %v2405
      %2453 = vmatpush1.bf16.msra.mxu0 %v2404
      %2454 = vmatprep.subr.bf16.mxu0 %v2409
      %2455 = vmatpush1.bf16.msra.mxu0 %v2408
      %2456 = vmatprep.subr.bf16.mxu0 %v2413
      %2457 = vmatpush1.bf16.msra.mxu0 %v2412
      %2458 = vmatprep.subr.bf16.mxu0 %v2417
      %2459 = vmatpush1.bf16.msra.mxu0 %v2416
      %2460 = vmatprep.subr.bf16.mxu0 %v2421
      %2461 = vmatpush1.bf16.msra.mxu0 %v2420
      %2462 = vmatprep.subr.bf16.mxu0 %v2425
      %2463 = vmatpush1.bf16.msra.mxu0 %v2424
      %2464 = vmatprep.subr.bf16.mxu0 0
      %2465 = vmatpush1.bf16.msra.mxu0 0
      %2466 = vmatprep.subr.bf16.mxu0 0
      %2467 = vmatpush1.bf16.msra.mxu0 0
      %2468 = vmatprep.subr.bf16.mxu0 0
      %2469 = vmatpush1.bf16.msra.mxu0 0
      %2470 = vmatprep.subr.bf16.mxu0 0
      %2471 = vmatpush1.bf16.msra.mxu0 0
      %2472 = vmatprep.subr.bf16.mxu0 0
      %2473 = vmatpush1.bf16.msra.mxu0 0
      %2474 = vmatprep.subr.bf16.mxu0 0
      %2475 = vmatpush1.bf16.msra.mxu0 0
      %2476 = vmatprep.subr.bf16.mxu0 0
      %2477 = vmatpush1.bf16.msra.mxu0 0
      %2478 = vmatprep.mubr.bf16.mxu0 %v2444
      %2479 = vmatmul.mubr.bf16.gmra.mrb[0].mxu0 %v2439
      %v2480 = vpop.f32.mrb[0].mxu0
      %v2481 = vadd.f32 %v2430, %v2480
      %v2482 = vpop.f32.mrb[0].mxu0
      %v2483 = vadd.f32 %v2430, %v2482
      %v2484 = vpop.f32.mrb[0].mxu0
      %v2485 = vpop.f32.mrb[0].mxu0
      %2486 = vdwg.mxu0
      %2487 = vmatprep.subr.bf16.mxu0 %v2395
      %2488 = vmatpush1.bf16.msra.mxu0 %v2394
      %2489 = vmatprep.subr.bf16.mxu0 %v2399
      %2490 = vmatpush1.bf16.msra.mxu0 %v2398
      %2491 = vmatprep.subr.bf16.mxu0 %v2403
      %2492 = vmatpush1.bf16.msra.mxu0 %v2402
      %2493 = vmatprep.subr.bf16.mxu0 %v2407
      %2494 = vmatpush1.bf16.msra.mxu0 %v2406
      %2495 = vmatprep.subr.bf16.mxu0 %v2411
      %2496 = vmatpush1.bf16.msra.mxu0 %v2410
      %2497 = vmatprep.subr.bf16.mxu0 %v2415
      %2498 = vmatpush1.bf16.msra.mxu0 %v2414
      %2499 = vmatprep.subr.bf16.mxu0 %v2419
      %2500 = vmatpush1.bf16.msra.mxu0 %v2418
      %2501 = vmatprep.subr.bf16.mxu0 %v2423
      %2502 = vmatpush1.bf16.msra.mxu0 %v2422
      %2503 = vmatprep.subr.bf16.mxu0 %v2427
      %2504 = vmatpush1.bf16.msra.mxu0 %v2426
      %2505 = vmatprep.subr.bf16.mxu0 0
      %2506 = vmatpush1.bf16.msra.mxu0 0
      %2507 = vmatprep.subr.bf16.mxu0 0
      %2508 = vmatpush1.bf16.msra.mxu0 0
      %2509 = vmatprep.subr.bf16.mxu0 0
      %2510 = vmatpush1.bf16.msra.mxu0 0
      %2511 = vmatprep.subr.bf16.mxu0 0
      %2512 = vmatpush1.bf16.msra.mxu0 0
      %2513 = vmatprep.subr.bf16.mxu0 0
      %2514 = vmatpush1.bf16.msra.mxu0 0
      %2515 = vmatprep.subr.bf16.mxu0 0
      %2516 = vmatpush1.bf16.msra.mxu0 0
      %2517 = vmatprep.subr.bf16.mxu0 0
      %2518 = vmatpush1.bf16.msra.mxu0 0
      %2519 = vmatprep.mubr.bf16.mxu0 %v2444
      %2520 = vmatmul.mubr.bf16.gmra.mrb[0].mxu0 %v2439
      %v2521 = vpop.f32.mrb[0].mxu0
      %v2522 = vadd.f32 %v2430, %v2521
      %v2523 = vpop.f32.mrb[0].mxu0
      %v2524 = vadd.f32 %v2430, %v2523
      %v2525 = vpop.f32.mrb[0].mxu0
      %v2526 = vpop.f32.mrb[0].mxu0
      %2527 = vdwg.mxu0
      %v2528 = vmax.f32 %v2481, 0.0
      %v2529 = vmax.f32 %v2483, 0.0
      %v2530 = vmax.f32 %v2522, 0.0
      %v2531 = vmax.f32 %v2524, 0.0
      %2532 = vrot.lane.b32.xlu0 %v2528, 17
      %v2533 = vpop.permute.xlu0 %2532
      %2534 = vrot.lane.b32.xlu0 %v2529, 17
      %v2535 = vpop.permute.xlu0 %2534
      %2536 = vrot.lane.b32.xlu0 %v2530, 17
      %v2537 = vpop.permute.xlu0 %2536
      %2538 = vrot.lane.b32.xlu0 %v2531, 17
      %v2539 = vpop.permute.xlu0 %2538
      %v2540 = vsel %vm2008, %v2537, %v2539
      %v2541 = vsel %vm2008, %v2535, %v2537
      %v2542 = vsel %vm2008, %v2533, %v2535
      %v2543 = vsel %vm2008, %v2539, %v2533
      %v2544 = vld [vmem:[%s3] sm:$0xf]
      %v2546 = vlaneseq
      %v2547 = vshrl.u32 %v2546, 7
      %v2548 = vsub.s32 0, %v2547
      %v2549 = vrot.slane %v2544, %v2548
      %v2550 = vlaneseq
      %v2551 = vshrl.u32 %v2550, 7
      %v2552 = vsub.s32 1, %v2551
      %v2553 = vrot.slane %v2544, %v2552
      %v2554 = vlaneseq
      %v2555 = vshrl.u32 %v2554, 7
      %v2556 = vsub.s32 2, %v2555
      %v2557 = vrot.slane %v2544, %v2556
      %v2558 = vlaneseq
      %v2559 = vshrl.u32 %v2558, 7
      %v2560 = vsub.s32 3, %v2559
      %v2561 = vrot.slane %v2544, %v2560
      %v2566 = vmul.f32 %v2543, %v2549
      %v2567 = vmul.f32 %v2542, %v2553
      %v2568 = vmul.f32 %v2541, %v2557
      %v2569 = vmul.f32 %v2540, %v2561
      %v2570 = vpack.c.bf16 %v2566, %v2566
      %v2571 = vpack.c.bf16 %v2567, %v2567
      %v2572 = vpack.c.bf16 %v2568, %v2568
      %v2573 = vpack.c.bf16 %v2569, %v2569
      %2574 = vst [vmem:[#allocation2] sm:$0x3] %v2570
      %2575 = vst [vmem:[#allocation2 + $0x8] sm:$0x3] %v2571
      %2576 = vst [vmem:[#allocation2 + $0x10] sm:$0x3] %v2572
      %2577 = vst [vmem:[#allocation2 + $0x18] sm:$0x3] %v2573
      %2578 = vrot.lane.b32.xlu0 %v2528, 16
      %v2579 = vpop.permute.xlu0 %2578
      %2580 = vrot.lane.b32.xlu0 %v2529, 16
      %v2581 = vpop.permute.xlu0 %2580
      %2582 = vrot.lane.b32.xlu0 %v2530, 16
      %v2583 = vpop.permute.xlu0 %2582
      %2584 = vrot.lane.b32.xlu0 %v2531, 16
      %v2585 = vpop.permute.xlu0 %2584
      %v2586 = vsel %vm2055, %v2583, %v2585
      %v2587 = vsel %vm2055, %v2581, %v2583
      %v2588 = vsel %vm2055, %v2579, %v2581
      %v2589 = vsel %vm2055, %v2585, %v2579
      %v2590 = vld [vmem:[%s2060] sm:$0xf]
      %v2592 = vlaneseq
      %v2593 = vshrl.u32 %v2592, 7
      %v2594 = vsub.s32 0, %v2593
      %v2595 = vrot.slane %v2590, %v2594
      %v2596 = vlaneseq
      %v2597 = vshrl.u32 %v2596, 7
      %v2598 = vsub.s32 1, %v2597
      %v2599 = vrot.slane %v2590, %v2598
      %v2600 = vlaneseq
      %v2601 = vshrl.u32 %v2600, 7
      %v2602 = vsub.s32 2, %v2601
      %v2603 = vrot.slane %v2590, %v2602
      %v2604 = vlaneseq
      %v2605 = vshrl.u32 %v2604, 7
      %v2606 = vsub.s32 3, %v2605
      %v2607 = vrot.slane %v2590, %v2606
      %v2612 = vmul.f32 %v2589, %v2595
      %v2613 = vmul.f32 %v2588, %v2599
      %v2614 = vmul.f32 %v2587, %v2603
      %v2615 = vmul.f32 %v2586, %v2607
      %v2616 = vpack.c.bf16 %v2612, %v2612
      %v2617 = vpack.c.bf16 %v2613, %v2613
      %v2618 = vpack.c.bf16 %v2614, %v2614
      %v2619 = vpack.c.bf16 %v2615, %v2615
      %2620 = vst [vmem:[#allocation2 + $0x20] sm:$0x3] %v2616
      %2621 = vst [vmem:[#allocation2 + $0x28] sm:$0x3] %v2617
      %2622 = vst [vmem:[#allocation2 + $0x30] sm:$0x3] %v2618
      %2623 = vst [vmem:[#allocation2 + $0x38] sm:$0x3] %v2619
      %2624 = vrot.lane.b32.xlu0 %v2528, 15
      %v2625 = vpop.permute.xlu0 %2624
      %2626 = vrot.lane.b32.xlu0 %v2529, 15
      %v2627 = vpop.permute.xlu0 %2626
      %2628 = vrot.lane.b32.xlu0 %v2530, 15
      %v2629 = vpop.permute.xlu0 %2628
      %2630 = vrot.lane.b32.xlu0 %v2531, 15
      %v2631 = vpop.permute.xlu0 %2630
      %v2632 = vsel %vm2103, %v2629, %v2631
      %v2633 = vsel %vm2103, %v2627, %v2629
      %v2634 = vsel %vm2103, %v2625, %v2627
      %v2635 = vsel %vm2103, %v2631, %v2625
      %v2636 = vld [vmem:[%s2108] sm:$0xf]
      %v2638 = vlaneseq
      %v2639 = vshrl.u32 %v2638, 7
      %v2640 = vsub.s32 0, %v2639
      %v2641 = vrot.slane %v2636, %v2640
      %v2642 = vlaneseq
      %v2643 = vshrl.u32 %v2642, 7
      %v2644 = vsub.s32 1, %v2643
      %v2645 = vrot.slane %v2636, %v2644
      %v2646 = vlaneseq
      %v2647 = vshrl.u32 %v2646, 7
      %v2648 = vsub.s32 2, %v2647
      %v2649 = vrot.slane %v2636, %v2648
      %v2650 = vlaneseq
      %v2651 = vshrl.u32 %v2650, 7
      %v2652 = vsub.s32 3, %v2651
      %v2653 = vrot.slane %v2636, %v2652
      %v2658 = vmul.f32 %v2635, %v2641
      %v2659 = vmul.f32 %v2634, %v2645
      %v2660 = vmul.f32 %v2633, %v2649
      %v2661 = vmul.f32 %v2632, %v2653
      %v2662 = vpack.c.bf16 %v2658, %v2658
      %v2663 = vpack.c.bf16 %v2659, %v2659
      %v2664 = vpack.c.bf16 %v2660, %v2660
      %v2665 = vpack.c.bf16 %v2661, %v2661
      %2666 = vst [vmem:[#allocation2 + $0x40] sm:$0x3] %v2662
      %2667 = vst [vmem:[#allocation2 + $0x48] sm:$0x3] %v2663
      %2668 = vst [vmem:[#allocation2 + $0x50] sm:$0x3] %v2664
      %2669 = vst [vmem:[#allocation2 + $0x58] sm:$0x3] %v2665
      %2670 = vrot.lane.b32.xlu0 %v2528, 1
      %v2671 = vpop.permute.xlu0 %2670
      %2672 = vrot.lane.b32.xlu0 %v2529, 1
      %v2673 = vpop.permute.xlu0 %2672
      %2674 = vrot.lane.b32.xlu0 %v2530, 1
      %v2675 = vpop.permute.xlu0 %2674
      %2676 = vrot.lane.b32.xlu0 %v2531, 1
      %v2677 = vpop.permute.xlu0 %2676
      %v2678 = vsel %vm2151, %v2675, %v2677
      %v2679 = vsel %vm2151, %v2673, %v2675
      %v2680 = vsel %vm2151, %v2671, %v2673
      %v2681 = vsel %vm2151, %v2677, %v2671
      %v2682 = vld [vmem:[%s2156] sm:$0xf]
      %v2684 = vlaneseq
      %v2685 = vshrl.u32 %v2684, 7
      %v2686 = vsub.s32 0, %v2685
      %v2687 = vrot.slane %v2682, %v2686
      %v2688 = vlaneseq
      %v2689 = vshrl.u32 %v2688, 7
      %v2690 = vsub.s32 1, %v2689
      %v2691 = vrot.slane %v2682, %v2690
      %v2692 = vlaneseq
      %v2693 = vshrl.u32 %v2692, 7
      %v2694 = vsub.s32 2, %v2693
      %v2695 = vrot.slane %v2682, %v2694
      %v2696 = vlaneseq
      %v2697 = vshrl.u32 %v2696, 7
      %v2698 = vsub.s32 3, %v2697
      %v2699 = vrot.slane %v2682, %v2698
      %v2704 = vmul.f32 %v2681, %v2687
      %v2705 = vmul.f32 %v2680, %v2691
      %v2706 = vmul.f32 %v2679, %v2695
      %v2707 = vmul.f32 %v2678, %v2699
      %v2708 = vpack.c.bf16 %v2704, %v2704
      %v2709 = vpack.c.bf16 %v2705, %v2705
      %v2710 = vpack.c.bf16 %v2706, %v2706
      %v2711 = vpack.c.bf16 %v2707, %v2707
      %2712 = vst [vmem:[#allocation2 + $0x60] sm:$0x3] %v2708
      %2713 = vst [vmem:[#allocation2 + $0x68] sm:$0x3] %v2709
      %2714 = vst [vmem:[#allocation2 + $0x70] sm:$0x3] %v2710
      %2715 = vst [vmem:[#allocation2 + $0x78] sm:$0x3] %v2711
      %v2716 = vpack.c.bf16 %v2528, %v2528
      %v2717 = vpack.c.bf16 %v2529, %v2529
      %v2718 = vpack.c.bf16 %v2530, %v2530
      %v2719 = vpack.c.bf16 %v2531, %v2531
      %2720 = vst [vmem:[#allocation2 + $0x80] sm:$0x3] %v2716
      %2721 = vst [vmem:[#allocation2 + $0x88] sm:$0x3] %v2717
      %2722 = vst [vmem:[#allocation2 + $0x90] sm:$0x3] %v2718
      %2723 = vst [vmem:[#allocation2 + $0x98] sm:$0x3] %v2719
      %2724 = vrot.lane.b32.xlu0 %v2528, 127
      %v2725 = vpop.permute.xlu0 %2724
      %2726 = vrot.lane.b32.xlu0 %v2529, 127
      %v2727 = vpop.permute.xlu0 %2726
      %2728 = vrot.lane.b32.xlu0 %v2530, 127
      %v2729 = vpop.permute.xlu0 %2728
      %2730 = vrot.lane.b32.xlu0 %v2531, 127
      %v2731 = vpop.permute.xlu0 %2730
      %v2732 = vsel %vm2207, %v2729, %v2731
      %v2733 = vsel %vm2207, %v2727, %v2729
      %v2734 = vsel %vm2207, %v2725, %v2727
      %v2735 = vsel %vm2207, %v2731, %v2725
      %v2736 = vld [vmem:[%s2212] sm:$0xf]
      %v2738 = vlaneseq
      %v2739 = vshrl.u32 %v2738, 7
      %v2740 = vsub.s32 0, %v2739
      %v2741 = vrot.slane %v2736, %v2740
      %v2742 = vlaneseq
      %v2743 = vshrl.u32 %v2742, 7
      %v2744 = vsub.s32 1, %v2743
      %v2745 = vrot.slane %v2736, %v2744
      %v2746 = vlaneseq
      %v2747 = vshrl.u32 %v2746, 7
      %v2748 = vsub.s32 2, %v2747
      %v2749 = vrot.slane %v2736, %v2748
      %v2750 = vlaneseq
      %v2751 = vshrl.u32 %v2750, 7
      %v2752 = vsub.s32 3, %v2751
      %v2753 = vrot.slane %v2736, %v2752
      %v2758 = vmul.f32 %v2734, %v2741
      %v2759 = vmul.f32 %v2733, %v2745
      %v2760 = vmul.f32 %v2732, %v2749
      %v2761 = vmul.f32 %v2735, %v2753
      %v2762 = vpack.c.bf16 %v2758, %v2758
      %v2763 = vpack.c.bf16 %v2759, %v2759
      %v2764 = vpack.c.bf16 %v2760, %v2760
      %v2765 = vpack.c.bf16 %v2761, %v2761
      %2766 = vst [vmem:[#allocation2 + $0xa0] sm:$0x3] %v2762
      %2767 = vst [vmem:[#allocation2 + $0xa8] sm:$0x3] %v2763
      %2768 = vst [vmem:[#allocation2 + $0xb0] sm:$0x3] %v2764
      %2769 = vst [vmem:[#allocation2 + $0xb8] sm:$0x3] %v2765
      %2770 = vrot.lane.b32.xlu0 %v2528, 113
      %v2771 = vpop.permute.xlu0 %2770
      %2772 = vrot.lane.b32.xlu0 %v2529, 113
      %v2773 = vpop.permute.xlu0 %2772
      %2774 = vrot.lane.b32.xlu0 %v2530, 113
      %v2775 = vpop.permute.xlu0 %2774
      %2776 = vrot.lane.b32.xlu0 %v2531, 113
      %v2777 = vpop.permute.xlu0 %2776
      %v2778 = vsel %vm2255, %v2775, %v2777
      %v2779 = vsel %vm2255, %v2773, %v2775
      %v2780 = vsel %vm2255, %v2771, %v2773
      %v2781 = vsel %vm2255, %v2777, %v2771
      %v2782 = vld [vmem:[%s2260] sm:$0xf]
      %v2784 = vlaneseq
      %v2785 = vshrl.u32 %v2784, 7
      %v2786 = vsub.s32 0, %v2785
      %v2787 = vrot.slane %v2782, %v2786
      %v2788 = vlaneseq
      %v2789 = vshrl.u32 %v2788, 7
      %v2790 = vsub.s32 1, %v2789
      %v2791 = vrot.slane %v2782, %v2790
      %v2792 = vlaneseq
      %v2793 = vshrl.u32 %v2792, 7
      %v2794 = vsub.s32 2, %v2793
      %v2795 = vrot.slane %v2782, %v2794
      %v2796 = vlaneseq
      %v2797 = vshrl.u32 %v2796, 7
      %v2798 = vsub.s32 3, %v2797
      %v2799 = vrot.slane %v2782, %v2798
      %v2804 = vmul.f32 %v2780, %v2787
      %v2805 = vmul.f32 %v2779, %v2791
      %v2806 = vmul.f32 %v2778, %v2795
      %v2807 = vmul.f32 %v2781, %v2799
      %v2808 = vpack.c.bf16 %v2804, %v2804
      %v2809 = vpack.c.bf16 %v2805, %v2805
      %v2810 = vpack.c.bf16 %v2806, %v2806
      %v2811 = vpack.c.bf16 %v2807, %v2807
      %2812 = vst [vmem:[#allocation2 + $0xc0] sm:$0x3] %v2808
      %2813 = vst [vmem:[#allocation2 + $0xc8] sm:$0x3] %v2809
      %2814 = vst [vmem:[#allocation2 + $0xd0] sm:$0x3] %v2810
      %2815 = vst [vmem:[#allocation2 + $0xd8] sm:$0x3] %v2811
      %2816 = vrot.lane.b32.xlu0 %v2528, 112
      %v2817 = vpop.permute.xlu0 %2816
      %2818 = vrot.lane.b32.xlu0 %v2529, 112
      %v2819 = vpop.permute.xlu0 %2818
      %2820 = vrot.lane.b32.xlu0 %v2530, 112
      %v2821 = vpop.permute.xlu0 %2820
      %2822 = vrot.lane.b32.xlu0 %v2531, 112
      %v2823 = vpop.permute.xlu0 %2822
      %v2824 = vsel %vm2303, %v2821, %v2823
      %v2825 = vsel %vm2303, %v2819, %v2821
      %v2826 = vsel %vm2303, %v2817, %v2819
      %v2827 = vsel %vm2303, %v2823, %v2817
      %v2828 = vld [vmem:[%s2308] sm:$0xf]
      %v2830 = vlaneseq
      %v2831 = vshrl.u32 %v2830, 7
      %v2832 = vsub.s32 0, %v2831
      %v2833 = vrot.slane %v2828, %v2832
      %v2834 = vlaneseq
      %v2835 = vshrl.u32 %v2834, 7
      %v2836 = vsub.s32 1, %v2835
      %v2837 = vrot.slane %v2828, %v2836
      %v2838 = vlaneseq
      %v2839 = vshrl.u32 %v2838, 7
      %v2840 = vsub.s32 2, %v2839
      %v2841 = vrot.slane %v2828, %v2840
      %v2842 = vlaneseq
      %v2843 = vshrl.u32 %v2842, 7
      %v2844 = vsub.s32 3, %v2843
      %v2845 = vrot.slane %v2828, %v2844
      %v2850 = vmul.f32 %v2826, %v2833
      %v2851 = vmul.f32 %v2825, %v2837
      %v2852 = vmul.f32 %v2824, %v2841
      %v2853 = vmul.f32 %v2827, %v2845
      %v2854 = vpack.c.bf16 %v2850, %v2850
      %v2855 = vpack.c.bf16 %v2851, %v2851
      %v2856 = vpack.c.bf16 %v2852, %v2852
      %v2857 = vpack.c.bf16 %v2853, %v2853
      %2858 = vst [vmem:[#allocation2 + $0xe0] sm:$0x3] %v2854
      %2859 = vst [vmem:[#allocation2 + $0xe8] sm:$0x3] %v2855
      %2860 = vst [vmem:[#allocation2 + $0xf0] sm:$0x3] %v2856
      %2861 = vst [vmem:[#allocation2 + $0xf8] sm:$0x3] %v2857
      %2862 = vrot.lane.b32.xlu0 %v2528, 111
      %v2863 = vpop.permute.xlu0 %2862
      %2864 = vrot.lane.b32.xlu0 %v2529, 111
      %v2865 = vpop.permute.xlu0 %2864
      %2866 = vrot.lane.b32.xlu0 %v2530, 111
      %v2867 = vpop.permute.xlu0 %2866
      %2868 = vrot.lane.b32.xlu0 %v2531, 111
      %v2869 = vpop.permute.xlu0 %2868
      %v2870 = vsel %vm2351, %v2867, %v2869
      %v2871 = vsel %vm2351, %v2865, %v2867
      %v2872 = vsel %vm2351, %v2863, %v2865
      %v2873 = vsel %vm2351, %v2869, %v2863
      %v2874 = vld [vmem:[%s2356] sm:$0xf]
      %v2876 = vlaneseq
      %v2877 = vshrl.u32 %v2876, 7
      %v2878 = vsub.s32 0, %v2877
      %v2879 = vrot.slane %v2874, %v2878
      %v2880 = vlaneseq
      %v2881 = vshrl.u32 %v2880, 7
      %v2882 = vsub.s32 1, %v2881
      %v2883 = vrot.slane %v2874, %v2882
      %v2884 = vlaneseq
      %v2885 = vshrl.u32 %v2884, 7
      %v2886 = vsub.s32 2, %v2885
      %v2887 = vrot.slane %v2874, %v2886
      %v2888 = vlaneseq
      %v2889 = vshrl.u32 %v2888, 7
      %v2890 = vsub.s32 3, %v2889
      %v2891 = vrot.slane %v2874, %v2890
      %v2896 = vmul.f32 %v2872, %v2879
      %v2897 = vmul.f32 %v2871, %v2883
      %v2898 = vmul.f32 %v2870, %v2887
      %v2899 = vmul.f32 %v2873, %v2891
      %v2900 = vpack.c.bf16 %v2896, %v2896
      %v2901 = vpack.c.bf16 %v2897, %v2897
      %v2902 = vpack.c.bf16 %v2898, %v2898
      %v2903 = vpack.c.bf16 %v2899, %v2899
      %2904 = vst [vmem:[#allocation2 + $0x100] sm:$0x3] %v2900
      %2905 = vst [vmem:[#allocation2 + $0x108] sm:$0x3] %v2901
      %2906 = vst [vmem:[#allocation2 + $0x110] sm:$0x3] %v2902
      %2907 = vst [vmem:[#allocation2 + $0x118] sm:$0x3] %v2903
      %v2908 = vld [vmem:[%s19] sm:$0xf]
      %v2909 = vld [vmem:[#allocation2] sm:$0xff]
      %v2910 = vld [vmem:[#allocation2 + $0x8] sm:$0xff]
      %v2911 = vld [vmem:[#allocation2 + $0x10] sm:$0xff]
      %v2912 = vld [vmem:[#allocation2 + $0x18] sm:$0xff]
      %v2913 = vld [vmem:[#allocation2 + $0x20] sm:$0xff]
      %v2914 = vld [vmem:[#allocation2 + $0x28] sm:$0xff]
      %v2915 = vld [vmem:[#allocation2 + $0x30] sm:$0xff]
      %v2916 = vld [vmem:[#allocation2 + $0x38] sm:$0xff]
      %v2917 = vld [vmem:[#allocation2 + $0x40] sm:$0xff]
      %v2918 = vld [vmem:[#allocation2 + $0x48] sm:$0xff]
      %v2919 = vld [vmem:[#allocation2 + $0x50] sm:$0xff]
      %v2920 = vld [vmem:[#allocation2 + $0x58] sm:$0xff]
      %v2921 = vld [vmem:[#allocation2 + $0x60] sm:$0xff]
      %v2922 = vld [vmem:[#allocation2 + $0x68] sm:$0xff]
      %v2923 = vld [vmem:[#allocation2 + $0x70] sm:$0xff]
      %v2924 = vld [vmem:[#allocation2 + $0x78] sm:$0xff]
      %v2925 = vld [vmem:[#allocation2 + $0x80] sm:$0xff]
      %v2926 = vld [vmem:[#allocation2 + $0x88] sm:$0xff]
      %v2927 = vld [vmem:[#allocation2 + $0x90] sm:$0xff]
      %v2928 = vld [vmem:[#allocation2 + $0x98] sm:$0xff]
      %v2929 = vld [vmem:[#allocation2 + $0xa0] sm:$0xff]
      %v2930 = vld [vmem:[#allocation2 + $0xa8] sm:$0xff]
      %v2931 = vld [vmem:[#allocation2 + $0xb0] sm:$0xff]
      %v2932 = vld [vmem:[#allocation2 + $0xb8] sm:$0xff]
      %v2933 = vld [vmem:[#allocation2 + $0xc0] sm:$0xff]
      %v2934 = vld [vmem:[#allocation2 + $0xc8] sm:$0xff]
      %v2935 = vld [vmem:[#allocation2 + $0xd0] sm:$0xff]
      %v2936 = vld [vmem:[#allocation2 + $0xd8] sm:$0xff]
      %v2937 = vld [vmem:[#allocation2 + $0xe0] sm:$0xff]
      %v2938 = vld [vmem:[#allocation2 + $0xe8] sm:$0xff]
      %v2939 = vld [vmem:[#allocation2 + $0xf0] sm:$0xff]
      %v2940 = vld [vmem:[#allocation2 + $0xf8] sm:$0xff]
      %v2941 = vld [vmem:[#allocation2 + $0x100] sm:$0xff]
      %v2942 = vld [vmem:[#allocation2 + $0x108] sm:$0xff]
      %v2943 = vld [vmem:[#allocation2 + $0x110] sm:$0xff]
      %v2944 = vld [vmem:[#allocation2 + $0x118] sm:$0xff]
      %2945 = vset.pattern.permute.xlu0 6
      %2946 = vperm.xlu0 %2945, %v954
      %v2947 = vpop.permute.xlu0 %2946
      %v2951 = vunpack.c.l.s4 1983009808
      %v2952 = vunpack.c.0.s8 %v2951
      %v2953 = vlaneseq
      %v2954 = vshrl.u32 %v2953, 7
      %v2955 = vsub.s32 %v2952, %v2954
      %v2956 = vrot.slane %v2908, %v2955
      %v2957 = vcombine.high %v2956, %v2956
      %v2960 = vsel %vm2442, %v2957, 0
      %2962 = vmatprep.subr.bf16.mxu0 %v2910
      %2963 = vmatpush1.bf16.msra.mxu0 %v2909
      %2964 = vmatprep.subr.bf16.mxu0 %v2914
      %2965 = vmatpush1.bf16.msra.mxu0 %v2913
      %2966 = vmatprep.subr.bf16.mxu0 %v2918
      %2967 = vmatpush1.bf16.msra.mxu0 %v2917
      %2968 = vmatprep.subr.bf16.mxu0 %v2922
      %2969 = vmatpush1.bf16.msra.mxu0 %v2921
      %2970 = vmatprep.subr.bf16.mxu0 %v2926
      %2971 = vmatpush1.bf16.msra.mxu0 %v2925
      %2972 = vmatprep.subr.bf16.mxu0 %v2930
      %2973 = vmatpush1.bf16.msra.mxu0 %v2929
      %2974 = vmatprep.subr.bf16.mxu0 %v2934
      %2975 = vmatpush1.bf16.msra.mxu0 %v2933
      %2976 = vmatprep.subr.bf16.mxu0 %v2938
      %2977 = vmatpush1.bf16.msra.mxu0 %v2937
      %2978 = vmatprep.subr.bf16.mxu0 %v2942
      %2979 = vmatpush1.bf16.msra.mxu0 %v2941
      %2980 = vmatprep.subr.bf16.mxu0 0
      %2981 = vmatpush1.bf16.msra.mxu0 0
      %2982 = vmatprep.subr.bf16.mxu0 0
      %2983 = vmatpush1.bf16.msra.mxu0 0
      %2984 = vmatprep.subr.bf16.mxu0 0
      %2985 = vmatpush1.bf16.msra.mxu0 0
      %2986 = vmatprep.subr.bf16.mxu0 0
      %2987 = vmatpush1.bf16.msra.mxu0 0
      %2988 = vmatprep.subr.bf16.mxu0 0
      %2989 = vmatpush1.bf16.msra.mxu0 0
      %2990 = vmatprep.subr.bf16.mxu0 0
      %2991 = vmatpush1.bf16.msra.mxu0 0
      %2992 = vmatprep.subr.bf16.mxu0 0
      %2993 = vmatpush1.bf16.msra.mxu0 0
      %2994 = vmatprep.mubr.bf16.mxu0 %v2960
      %2995 = vmatmul.mubr.bf16.gmra.mrb[0].mxu0 %v2956
      %v2996 = vpop.f32.mrb[0].mxu0
      %v2997 = vadd.f32 %v2947, %v2996
      %v2998 = vpop.f32.mrb[0].mxu0
      %v2999 = vadd.f32 %v2947, %v2998
      %v3000 = vpop.f32.mrb[0].mxu0
      %v3001 = vpop.f32.mrb[0].mxu0
      %3002 = vdwg.mxu0
      %3003 = vmatprep.subr.bf16.mxu0 %v2912
      %3004 = vmatpush1.bf16.msra.mxu0 %v2911
      %3005 = vmatprep.subr.bf16.mxu0 %v2916
      %3006 = vmatpush1.bf16.msra.mxu0 %v2915
      %3007 = vmatprep.subr.bf16.mxu0 %v2920
      %3008 = vmatpush1.bf16.msra.mxu0 %v2919
      %3009 = vmatprep.subr.bf16.mxu0 %v2924
      %3010 = vmatpush1.bf16.msra.mxu0 %v2923
      %3011 = vmatprep.subr.bf16.mxu0 %v2928
      %3012 = vmatpush1.bf16.msra.mxu0 %v2927
      %3013 = vmatprep.subr.bf16.mxu0 %v2932
      %3014 = vmatpush1.bf16.msra.mxu0 %v2931
      %3015 = vmatprep.subr.bf16.mxu0 %v2936
      %3016 = vmatpush1.bf16.msra.mxu0 %v2935
      %3017 = vmatprep.subr.bf16.mxu0 %v2940
      %3018 = vmatpush1.bf16.msra.mxu0 %v2939
      %3019 = vmatprep.subr.bf16.mxu0 %v2944
      %3020 = vmatpush1.bf16.msra.mxu0 %v2943
      %3021 = vmatprep.subr.bf16.mxu0 0
      %3022 = vmatpush1.bf16.msra.mxu0 0
      %3023 = vmatprep.subr.bf16.mxu0 0
      %3024 = vmatpush1.bf16.msra.mxu0 0
      %3025 = vmatprep.subr.bf16.mxu0 0
      %3026 = vmatpush1.bf16.msra.mxu0 0
      %3027 = vmatprep.subr.bf16.mxu0 0
      %3028 = vmatpush1.bf16.msra.mxu0 0
      %3029 = vmatprep.subr.bf16.mxu0 0
      %3030 = vmatpush1.bf16.msra.mxu0 0
      %3031 = vmatprep.subr.bf16.mxu0 0
      %3032 = vmatpush1.bf16.msra.mxu0 0
      %3033 = vmatprep.subr.bf16.mxu0 0
      %3034 = vmatpush1.bf16.msra.mxu0 0
      %3035 = vmatprep.mubr.bf16.mxu0 %v2960
      %3036 = vmatmul.mubr.bf16.gmra.mrb[0].mxu0 %v2956
      %v3037 = vpop.f32.mrb[0].mxu0
      %v3038 = vadd.f32 %v2947, %v3037
      %v3039 = vpop.f32.mrb[0].mxu0
      %v3040 = vadd.f32 %v2947, %v3039
      %v3041 = vpop.f32.mrb[0].mxu0
      %v3042 = vpop.f32.mrb[0].mxu0
      %3043 = vdwg.mxu0
      %v3044 = vmax.f32 %v2997, 0.0
      %v3045 = vmax.f32 %v2999, 0.0
      %v3046 = vmax.f32 %v3038, 0.0
      %v3047 = vmax.f32 %v3040, 0.0
      %v3052 = vcombine.low %v3044, %v3045
      %v3053 = vcombine.low %v3046, %v3047
      %3056 = vst [vmem:[%s698] sm:$0xff] %v3052
      %3057 = vst [vmem:[%s698 + $0x8] sm:$0xff] %v3053
      %vm3058 = vcmask 11264
      %3059 = vst.msk [vmem:[%s703] sm:$0xf] %vm3058, %v1540
      %3060 = vst.msk [vmem:[%s703 + $0x4] sm:$0xf] %vm3058, %v1554
      %3061 = vst.msk [vmem:[%s703 + $0x8] sm:$0xf] %vm3058, %v1562
      %3062 = vst.msk [vmem:[%s703 + $0xc] sm:$0xf] %vm3058, %v1567
      %p3063 = scmp.lt.s32.totalorder %s33, 1
      %s3064 = scalar_select %p3063, %s33, 1
      %s3065 = smul.addr %s3064, 4
      %s3066 = smul.addr %s3065, 4
      %s3067 = scalar_lea.vmem %s20, %s3066
      %p3068 = scmp.lt.s32.totalorder %s33, 1
      %s3069 = scalar_select %p3068, %s33, 1
      %s3070 = smul.addr %s3069, 4
      %s3071 = smul.addr %s3070, 4
      %s3072 = scalar_lea.vmem %s21, %s3071
      // Predicated region
      $region101: #{bottleneck_plugged_forward.1} parent=99 // pred_check
        %p3073 = pneg %p486
      $region102: #{bottleneck_plugged_forward.1} parent=99 // pred_check_branch
        %3075 = sbr.rel (%p3073) target = $region104
      $region103: #{bottleneck_plugged_forward.1} parent=99 // pred_region
        _
      $region104: #{bottleneck_plugged_forward.1} parent=99 // pred_fallthru
        _
      // Predicated region
      $region105: #{bottleneck_plugged_forward.1} parent=99 // pred_check
        %p3076 = pneg %p512
      $region106: #{bottleneck_plugged_forward.1} parent=99 // pred_check_branch
        %3078 = sbr.rel (%p3076) target = $region108
      $region107: #{bottleneck_plugged_forward.1} parent=99 // pred_region
        _
      $region108: #{bottleneck_plugged_forward.1} parent=99 // pred_fallthru
        _
    $region100: #{bottleneck_plugged_forward.1} parent=5 // pred_fallthru
      _
    %p3079 = scmp.le.s32.totalorder 2, %s28
    // Predicated region
    $region109: #{bottleneck_plugged_forward.1} parent=5 // pred_check
      %p3080 = pneg %p3079
    $region110: #{bottleneck_plugged_forward.1} parent=5 // pred_check_branch
      %3082 = sbr.rel (%p3080) target = $region112
    $region111: #{bottleneck_plugged_forward.1} parent=5 // pred_region
      %s3083 = ssub.s32 %s28, 2
      // Predicated region
      $region113: #{bottleneck_plugged_forward.1} parent=111 // pred_check
        %p3084 = pneg %p492
      $region114: #{bottleneck_plugged_forward.1} parent=111 // pred_check_branch
        %3086 = sbr.rel (%p3084) target = $region116
      $region115: #{bottleneck_plugged_forward.1} parent=111 // pred_region
        %p3087 = scmp.lt.s32.totalorder %s34, 1
        %s3088 = scalar_select %p3087, %s34, 1
        %s3089 = smul.addr %s3088, 4
        %s3090 = smul.addr %s3089, 4
        %s3091 = scalar_lea.vmem %s20, %s3090
      $region116: #{bottleneck_plugged_forward.1} parent=111 // pred_fallthru
        _
      // Predicated region
      $region117: #{bottleneck_plugged_forward.1} parent=111 // pred_check
        %p3092 = pneg %p518
      $region118: #{bottleneck_plugged_forward.1} parent=111 // pred_check_branch
        %3094 = sbr.rel (%p3092) target = $region120
      $region119: #{bottleneck_plugged_forward.1} parent=111 // pred_region
        %p3095 = scmp.lt.s32.totalorder %s34, 1
        %s3096 = scalar_select %p3095, %s34, 1
        %s3097 = smul.addr %s3096, 4
        %s3098 = smul.addr %s3097, 4
        %s3099 = scalar_lea.vmem %s21, %s3098
      $region120: #{bottleneck_plugged_forward.1} parent=111 // pred_fallthru
        _
    $region112: #{bottleneck_plugged_forward.1} parent=5 // pred_fallthru
      _
  $region6: #{bottleneck_plugged_forward.1} parent=0 // loop_footer
    %s32 = sadd.s32 1, %s28
  $region7: #{bottleneck_plugged_forward.1} parent=0 // loop_footer_branch
    %27 = sbr.rel target = $region3
  $region8: #{bottleneck_plugged_forward.1} parent=0 // loop_exit
    _

</llo_original>
